<compile_context>
chip_gen: v7x
topology: tpu7x:2x2x1
jax: 0.10.0
libtpu: 0.0.40
codegen_flags: <defaults>
</compile_context>

<pallas_src>
import numpy as np
import jax
import jax.numpy as jnp
from jax.experimental import pallas as pl
from jax.experimental.pallas import tpu as pltpu

# ----------------------------- synthetic task config -----------------------------
BS = 2                      # batch size
N_AGENTS = 3
N_ENEMIES = 4
N_ALLIES = N_AGENTS - 1
OBS_OWN = 8                 # decomposer.aligned_own_obs_dim
OBS_NF_EN = 6               # decomposer.aligned_obs_nf_en (before +1 for last action)
OBS_NF_AL = 5               # decomposer.aligned_obs_nf_al
ID_LEN = 4                  # args.id_length
MAX_AGENT = 8               # args.max_agent
N_NO_ATTACK = 6             # decomposer.n_actions_no_attack
N_ACTIONS = N_NO_ATTACK + N_ENEMIES
EMB = 32                    # args.entity_embed_dim
HEADS = 2                   # args.head
DEPTH = 2                   # args.depth
FF_MULT = 4
SKILL_DIM = 4               # args.skill_dim

OBS_EN_DIM = OBS_NF_EN + 1                              # obs_last_action=True, env='sc2'
WRAPPED_OWN = OBS_OWN + ID_LEN + N_NO_ATTACK + 1        # own + id + compact action states
OBS_DIM = OBS_OWN + N_ENEMIES * OBS_NF_EN + N_ALLIES * OBS_NF_AL
B = BS * N_AGENTS
N_TOKENS = 1 + N_ENEMIES + N_ALLIES + 1
TB = N_TOKENS * B                                       # flattened token rows (48)
SCALE = 1.0 / (EMB ** 0.25)

# ----- fused-input lane layout (activation slab; rows are entity-major: batch = row % B)
LANE_OWN = 0
LANE_EN = LANE_OWN + WRAPPED_OWN          # 19
LANE_AL = LANE_EN + OBS_EN_DIM            # 26
LANE_HID = LANE_AL + OBS_NF_AL            # 31
LANE_SEL = LANE_HID + EMB                 # 63  (4 one-hot bias-selector lanes)
LANE_SKILL = LANE_SEL + 4                 # 67  (skill rides on the own-token rows)
ACT_LANES = ((LANE_SKILL + SKILL_DIM + 7) // 8) * 8     # 72
IN_K = ACT_LANES                          # fused input weight contraction dim

OUT_W = EMB + N_NO_ATTACK + 1             # widened toprobs: [tp | tp@qk_top | tp@mean(qk_top)]
SK_W = N_NO_ATTACK + 1                    # skill head: [qk_bot | mean(qk_bot)]
OUT_ROWS, OUT_LANES = 8, 64               # packed lane-dense kernel output
SLAB_LANES = 128                          # bf16 parameter slab lane width


def _align16(n):
    return ((n + 15) // 16) * 16


# ----------------------------- dense bf16 parameter-slab layout -----------------------------
def _build_param_layout():
    assert DEPTH == 2 and HEADS == 2 and FF_MULT * EMB == SLAB_LANES
    L = {}
    r = 0
    # region A: 128-lane-wide weights stacked
    for d in range(DEPTH):
        L[f'blk{d}_Wproj'] = (r, 0, EMB, 2 * HEADS * EMB); r += EMB
    for d in range(DEPTH):
        L[f'blk{d}_f1W'] = (r, 0, EMB, FF_MULT * EMB); r += EMB
    # region B: all one-row biases share one block (one row each)
    bias = []
    for d in range(DEPTH):
        bias += [(f'blk{d}_bu', EMB), (f'blk{d}_g1', EMB), (f'blk{d}_b1', EMB),
                 (f'blk{d}_f1b', FF_MULT * EMB), (f'blk{d}_f2b', EMB),
                 (f'blk{d}_g2', EMB), (f'blk{d}_b2', EMB)]
    bias += [('b_out', OUT_W), ('b_sk', SK_W)]
    for i, (name, w) in enumerate(bias):
        L[name] = (r + i, 0, 1, w)
    r += _align16(len(bias))
    # region C: 32-lane weights packed 4-across the 128 lanes
    c0 = r
    for d in range(DEPTH):
        L[f'blk{d}_f2W'] = (c0, d * EMB, FF_MULT * EMB, EMB)
    L['in_W'] = (c0, DEPTH * EMB, IN_K, EMB)
    for d in range(DEPTH):
        L[f'blk{d}_Wu'] = (c0 + d * HEADS * EMB, (DEPTH + 1) * EMB, HEADS * EMB, EMB)
    r = c0 + FF_MULT * EMB
    # region D: output-head weights
    L['W_out'] = (r, 0, EMB, OUT_W)
    L['W_sk'] = (r, 2 * EMB, SKILL_DIM, SK_W)
    r += EMB
    return L, _align16(r)


PARAM_LAYOUT, PARAM_ROWS = _build_param_layout()


# ----------------------------- shared math -----------------------------
def _layer_norm(x, g, b):
    mu = jnp.mean(x, axis=-1, keepdims=True)
    var = jnp.mean(jnp.square(x - mu), axis=-1, keepdims=True)
    return (x - mu) * jax.lax.rsqrt(var + 1e-5) * g + b


def _softmax_last(x):
    m = jnp.max(x, axis=-1, keepdims=True)
    e = jnp.exp(x - m)
    return e / jnp.sum(e, axis=-1, keepdims=True)


# ----------------------------- pure-JAX reference (unpacked f32 params) -----------------------------
def decoder_math(own, enemy, ally, hid, skill, params):
    """Reference math of Decoder.forward (post input decomposition)."""
    it = iter(params)
    nxt = lambda: next(it)
    own_W, own_b = nxt(), nxt()
    en_W, en_b = nxt(), nxt()
    al_W, al_b = nxt(), nxt()
    te_W, te_b = nxt(), nxt()
    blocks = []
    for _ in range(DEPTH):
        blocks.append({k: nxt() for k in
                       ('Wq', 'Wk', 'Wv', 'Wu', 'bu', 'g1', 'b1',
                        'f1W', 'f1b', 'f2W', 'f2b', 'g2', 'b2')})
    tp_W, tp_b = nxt(), nxt()
    sk_W, sk_b = nxt(), nxt()
    qk_W, qk_b = nxt(), nxt()

    f32 = jnp.float32
    own_h = (jnp.dot(own, own_W, preferred_element_type=f32) + own_b)[:, None, :]
    en_h = jnp.einsum('bnf,fe->bne', enemy, en_W, preferred_element_type=f32) + en_b
    al_h = jnp.einsum('bnf,fe->bne', ally, al_W, preferred_element_type=f32) + al_b
    x = jnp.concatenate([own_h, en_h, al_h, hid], axis=1)

    x = jnp.einsum('bte,ef->btf', x, te_W, preferred_element_type=f32) + te_b
    for blk in blocks:
        heads_out = []
        for hh in range(HEADS):
            Wq = blk['Wq'][:, hh * EMB:(hh + 1) * EMB]
            Wk = blk['Wk'][:, hh * EMB:(hh + 1) * EMB]
            Wv = blk['Wv'][:, hh * EMB:(hh + 1) * EMB]
            q = jnp.einsum('bte,ef->btf', x, Wq, preferred_element_type=f32) * SCALE
            k = jnp.einsum('bte,ef->btf', x, Wk, preferred_element_type=f32) * SCALE
            v = jnp.einsum('bte,ef->btf', x, Wv, preferred_element_type=f32)
            dot = jnp.einsum('bqe,bke->bqk', q, k, preferred_element_type=f32)
            att = _softmax_last(dot)
            heads_out.append(jnp.einsum('bqk,bke->bqe', att, v, preferred_element_type=f32))
        attended = jnp.concatenate(heads_out, axis=-1)
        attended = jnp.einsum('btf,fe->bte', attended, blk['Wu'],
                              preferred_element_type=f32) + blk['bu']
        x = _layer_norm(attended + x, blk['g1'], blk['b1'])
        ff = jnp.einsum('bte,ef->btf', x, blk['f1W'], preferred_element_type=f32) + blk['f1b']
        ff = jnp.maximum(ff, 0.0)
        ff = jnp.einsum('btf,fe->bte', ff, blk['f2W'], preferred_element_type=f32) + blk['f2b']
        x = _layer_norm(ff + x, blk['g2'], blk['b2'])
    outputs = jnp.einsum('bte,ef->btf', x, tp_W, preferred_element_type=f32) + tp_b

    h = outputs[:, -1:, :]
    skill_emb = jnp.dot(skill, sk_W, preferred_element_type=f32) + sk_b
    base_in = jnp.concatenate([outputs[:, 0, :], skill_emb], axis=-1)
    q_base = jnp.dot(base_in, qk_W, preferred_element_type=f32) + qk_b

    en_out = outputs[:, 1:1 + N_ENEMIES, :]
    skill_b = jnp.broadcast_to(skill_emb[:, None, :], (en_out.shape[0], N_ENEMIES, EMB))
    att_in = jnp.concatenate([en_out, skill_b], axis=-1)
    q_att = jnp.einsum('bnf,fa->bna', att_in, qk_W, preferred_element_type=f32) + qk_b
    q_attack = jnp.mean(q_att, axis=-1)
    q = jnp.concatenate([q_base, q_attack], axis=-1)
    return q, h


# ----------------------------- Pallas kernel -----------------------------
def decoder_kernel(acts_ref, params_ref, out_ref):
    f32, bf16 = jnp.float32, jnp.bfloat16

    def P(name):
        r0, c0, nr, nc = PARAM_LAYOUT[name]
        return params_ref[r0:r0 + nr, c0:c0 + nc]

    def Pf(name):
        return P(name).astype(f32)

    def mm(a, w):                       # bf16 MXU matmul, f32 accumulation
        return jnp.dot(a.astype(bf16), w, preferred_element_type=f32)

    acts = acts_ref[...]                                       # (TB, IN_K) bf16

    # fused entity-value + token-embedding projection: ONE matmul
    x = jnp.dot(acts, P('in_W'), preferred_element_type=f32)   # (TB, EMB) f32

    # block-diagonal additive attention mask, generated in-kernel (batch = row mod B)
    def _mod_b(v):
        t, ts = B, []
        while t < TB:
            ts.append(t)
            t *= 2
        for t in reversed(ts):
            v = jnp.where(v >= t, v - t, v)
        return v
    ri = _mod_b(jax.lax.broadcasted_iota(jnp.int32, (TB, TB), 0))
    ci = _mod_b(jax.lax.broadcasted_iota(jnp.int32, (TB, TB), 1))
    mask = jnp.where(ri == ci, 0.0, -1e30).astype(f32)          # (TB, TB)

    for d in range(DEPTH):
        xb = x.astype(bf16)
        # fused q/k/v stage: lanes = [M0 | Wv0 | M1 | Wv1],  M_h = scale^2 * Wq_h @ Wk_h^T
        proj = jnp.dot(xb, P(f'blk{d}_Wproj'), preferred_element_type=f32)   # (TB, 4*EMB)
        head_outs = []
        for hh in range(HEADS):
            xm = proj[:, (2 * hh) * EMB:(2 * hh + 1) * EMB]
            v = proj[:, (2 * hh + 1) * EMB:(2 * hh + 2) * EMB]
            s = jax.lax.dot_general(xm.astype(bf16), xb, (((1,), (1,)), ((), ())),
                                    preferred_element_type=f32) + mask       # (TB, TB)
            m = jnp.max(s, axis=-1, keepdims=True)
            e = jnp.exp(s - m)
            att = e * pl.reciprocal(jnp.sum(e, axis=-1, keepdims=True), approx=True)
            head_outs.append(jnp.dot(att.astype(bf16), v.astype(bf16),
                                     preferred_element_type=f32))            # (TB, EMB)
        att_cat = jnp.concatenate(head_outs, axis=-1)                        # (TB, 2*EMB)
        attended = mm(att_cat, P(f'blk{d}_Wu')) + Pf(f'blk{d}_bu')
        x = _layer_norm(attended + x, Pf(f'blk{d}_g1'), Pf(f'blk{d}_b1'))
        ff = jnp.maximum(mm(x, P(f'blk{d}_f1W')) + Pf(f'blk{d}_f1b'), 0.0)
        ff = mm(ff, P(f'blk{d}_f2W')) + Pf(f'blk{d}_f2b')
        x = _layer_norm(ff + x, Pf(f'blk{d}_g2'), Pf(f'blk{d}_b2'))

    # widened toprobs: lanes [0:EMB]=transformer outputs, [EMB:EMB+6]=q_base (pre-skill),
    # [EMB+6]=mean attack-q (pre-skill); all head tops in one matmul
    outs = mm(x, P('W_out')) + Pf('b_out')                      # (TB, OUT_W)

    skill = acts[0:B, LANE_SKILL:LANE_SKILL + SKILL_DIM]        # (B, SKILL_DIM) bf16
    sk = jnp.dot(skill, P('W_sk'), preferred_element_type=jnp.float32) + Pf('b_sk')  # (B, SK_W)

    h_out = outs[TB - B:TB, 0:EMB]                              # history-token rows
    q_base = outs[0:B, EMB:EMB + N_NO_ATTACK] + sk[:, 0:N_NO_ATTACK]
    col = outs[:, EMB + N_NO_ATTACK:EMB + N_NO_ATTACK + 1]      # (TB, 1) mean attack-q
    q_att = jnp.concatenate(
        [col[B + e * B:B + (e + 1) * B, :] for e in range(N_ENEMIES)], axis=-1) \
        + sk[:, N_NO_ATTACK:N_NO_ATTACK + 1]                    # (B, N_ENEMIES)

    # one lane-dense packed output: h in lanes 0:EMB, q in lanes EMB:EMB+N_ACTIONS
    out_ref[...] = jnp.zeros((OUT_ROWS, OUT_LANES), f32)
    out_ref[0:B, 0:EMB] = h_out
    out_ref[0:B, EMB:EMB + N_ACTIONS] = jnp.concatenate([q_base, q_att], axis=-1)


# ----------------------------- packing (host-side) -----------------------------
def pack_params(params):
    """Fold + repack the unpacked parameter list into one dense bf16 128-lane slab."""
    p = [np.asarray(x, np.float32) for x in params]
    it = iter(p)
    nxt = lambda: next(it)
    own_W, own_b = nxt(), nxt()
    en_W, en_b = nxt(), nxt()
    al_W, al_b = nxt(), nxt()
    te_W, te_b = nxt(), nxt()
    blocks = []
    for _ in range(DEPTH):
        blocks.append(dict(Wq=nxt(), Wk=nxt(), Wv=nxt(), Wu=nxt(), bu=nxt(),
                           g1=nxt(), b1=nxt(), f1W=nxt(), f1b=nxt(),
                           f2W=nxt(), f2b=nxt(), g2=nxt(), b2=nxt()))
    tp_W, tp_b = nxt(), nxt()
    sk_W, sk_b = nxt(), nxt()
    qk_W, qk_b = nxt(), nxt()

    d = {}
    # fused input projection: entity value layers + token embedding + biases (via selector lanes)
    in_W = np.zeros((IN_K, EMB), np.float32)
    in_W[LANE_OWN:LANE_OWN + WRAPPED_OWN] = own_W @ te_W
    in_W[LANE_EN:LANE_EN + OBS_EN_DIM] = en_W @ te_W
    in_W[LANE_AL:LANE_AL + OBS_NF_AL] = al_W @ te_W
    in_W[LANE_HID:LANE_HID + EMB] = te_W
    in_W[LANE_SEL + 0:LANE_SEL + 1] = own_b @ te_W + te_b
    in_W[LANE_SEL + 1:LANE_SEL + 2] = en_b @ te_W + te_b
    in_W[LANE_SEL + 2:LANE_SEL + 3] = al_b @ te_W + te_b
    in_W[LANE_SEL + 3:LANE_SEL + 4] = te_b
    # skill lanes (LANE_SKILL..) stay zero rows -> skill never leaks into the tokens
    d['in_W'] = in_W

    for dep, blk in enumerate(blocks):
        cols = []
        for hh in range(HEADS):
            Wq_h = blk['Wq'][:, hh * EMB:(hh + 1) * EMB]
            Wk_h = blk['Wk'][:, hh * EMB:(hh + 1) * EMB]
            Wv_h = blk['Wv'][:, hh * EMB:(hh + 1) * EMB]
            cols += [(SCALE * SCALE) * (Wq_h @ Wk_h.T), Wv_h]   # scores = (x@M)@x^T
        d[f'blk{dep}_Wproj'] = np.concatenate(cols, axis=1)     # (EMB, 4*EMB)
        d[f'blk{dep}_Wu'] = blk['Wu']
        d[f'blk{dep}_bu'] = blk['bu']
        d[f'blk{dep}_g1'], d[f'blk{dep}_b1'] = blk['g1'], blk['b1']
        d[f'blk{dep}_f1W'], d[f'blk{dep}_f1b'] = blk['f1W'], blk['f1b']
        d[f'blk{dep}_f2W'], d[f'blk{dep}_f2b'] = blk['f2W'], blk['f2b']
        d[f'blk{dep}_g2'], d[f'blk{dep}_b2'] = blk['g2'], blk['b2']

    # output heads: widened toprobs (toprobs + q_skill top half + folded attack-q mean)
    qk_top, qk_bot = qk_W[:EMB], qk_W[EMB:]
    w_top_avg = qk_top.mean(axis=1, keepdims=True)              # (EMB, 1)
    w_bot_avg = qk_bot.mean(axis=1, keepdims=True)              # (EMB, 1)
    b_avg = qk_b.mean(axis=1, keepdims=True)                    # (1, 1)
    d['W_out'] = np.concatenate([tp_W, tp_W @ qk_top, tp_W @ w_top_avg], axis=1)
    d['b_out'] = np.concatenate([tp_b, tp_b @ qk_top + qk_b, tp_b @ w_top_avg + b_avg], axis=1)
    QB = np.concatenate([qk_bot, w_bot_avg], axis=1)             # (EMB, SK_W)
    d['W_sk'] = sk_W @ QB                                        # (SKILL_DIM, SK_W)
    d['b_sk'] = sk_b @ QB                                        # (1, SK_W)

    slab = np.zeros((PARAM_ROWS, SLAB_LANES), np.float32)
    for name, (r0, c0, nr, nc) in PARAM_LAYOUT.items():
        slab[r0:r0 + nr, c0:c0 + nc] = np.asarray(d[name], np.float32).reshape(nr, nc)
    return jnp.asarray(slab, dtype=jnp.bfloat16)


def pack_acts(own, enemy, ally, hid, skill):
    """Pack the 5 activations into one bf16 slab with lane-disjoint features (1 DMA)."""
    slab = jnp.zeros((TB, ACT_LANES), jnp.float32)
    # own token rows 0:B  (batch = row)
    slab = slab.at[0:B, LANE_OWN:LANE_OWN + WRAPPED_OWN].set(own)
    slab = slab.at[0:B, LANE_SEL + 0].set(1.0)
    slab = slab.at[0:B, LANE_SKILL:LANE_SKILL + SKILL_DIM].set(skill)
    # enemy token rows B:B+4B, enemy-major (row = B + e*B + b)
    en = jnp.transpose(enemy, (1, 0, 2)).reshape(N_ENEMIES * B, OBS_EN_DIM)
    slab = slab.at[B:B + N_ENEMIES * B, LANE_EN:LANE_EN + OBS_EN_DIM].set(en)
    slab = slab.at[B:B + N_ENEMIES * B, LANE_SEL + 1].set(1.0)
    # ally token rows, ally-major
    al = jnp.transpose(ally, (1, 0, 2)).reshape(N_ALLIES * B, OBS_NF_AL)
    r0 = B + N_ENEMIES * B
    slab = slab.at[r0:r0 + N_ALLIES * B, LANE_AL:LANE_AL + OBS_NF_AL].set(al)
    slab = slab.at[r0:r0 + N_ALLIES * B, LANE_SEL + 2].set(1.0)
    # history (hidden-state) token rows
    hid2 = hid.reshape(B, EMB)
    slab = slab.at[TB - B:TB, LANE_HID:LANE_HID + EMB].set(hid2)
    slab = slab.at[TB - B:TB, LANE_SEL + 3].set(1.0)
    return slab.astype(jnp.bfloat16)


# ----------------------------- wrapper -----------------------------
@jax.jit
def run_decoder(own, enemy, ally, hid, skill, params_slab):
    acts_slab = pack_acts(own, enemy, ally, hid, skill)
    vmem = pl.BlockSpec(memory_space=pltpu.MemorySpace.VMEM)
    out = pl.pallas_call(
        decoder_kernel,
        out_shape=jax.ShapeDtypeStruct((OUT_ROWS, OUT_LANES), jnp.float32),
        in_specs=[vmem, vmem],
        out_specs=vmem,
        compiler_params=pltpu.CompilerParams(vmem_limit_bytes=2 * 1024 * 1024),
    )(acts_slab, params_slab)
    q = out[0:B, EMB:EMB + N_ACTIONS]
    h = out[0:B, 0:EMB].reshape(B, 1, EMB)
    return q, h


# ----------------------------- parameter init (deterministic, synthetic) -----------------------------
def init_params(key):
    keys = iter(jax.random.split(key, 128))

    def w(shape):
        return jax.random.normal(next(keys), shape, jnp.float32) / np.sqrt(shape[0])

    def b(dim):
        return jax.random.normal(next(keys), (1, dim), jnp.float32) * 0.01

    params = []
    params += [w((WRAPPED_OWN, EMB)), b(EMB)]        # own_value
    params += [w((OBS_EN_DIM, EMB)), b(EMB)]         # enemy_value
    params += [w((OBS_NF_AL, EMB)), b(EMB)]          # ally_value
    params += [w((EMB, EMB)), b(EMB)]                # transformer.token_embedding
    for _ in range(DEPTH):
        params += [w((EMB, HEADS * EMB)),            # toqueries/tokeys/tovalues (no bias)
                   w((EMB, HEADS * EMB)),
                   w((EMB, HEADS * EMB)),
                   w((HEADS * EMB, EMB)), b(EMB)]    # unifyheads
        params += [jnp.ones((1, EMB), jnp.float32), jnp.zeros((1, EMB), jnp.float32)]   # LN1
        params += [w((EMB, FF_MULT * EMB)), b(FF_MULT * EMB),
                   w((FF_MULT * EMB, EMB)), b(EMB)]  # feed-forward
        params += [jnp.ones((1, EMB), jnp.float32), jnp.zeros((1, EMB), jnp.float32)]   # LN2
    params += [w((EMB, EMB)), b(EMB)]                # transformer.toprobs
    params += [w((SKILL_DIM, EMB)), b(EMB)]          # skill_enc
    params += [w((2 * EMB, N_NO_ATTACK)), b(N_NO_ATTACK)]  # q_skill
    return params


# ----------------------------- host-side glue (task decomposer etc.) -----------------------------
def binary_embed(x, bit_num, max_num):
    assert x <= max_num
    return np.array([(x >> (bit_num - 1 - j)) & 1 for j in range(bit_num)], dtype=np.float32)


def preprocess(inputs, hidden_state):
    """Mirrors the decomposition glue of Decoder.forward (plain JAX / numpy)."""
    obs = inputs[:, :OBS_DIM]
    last_action = inputs[:, OBS_DIM:OBS_DIM + N_ACTIONS]
    # trailing agent-id slice of `inputs` is discarded (recomputed below), as in the reference

    own_obs = obs[:, :OBS_OWN]
    enemy_feats = obs[:, OBS_OWN:OBS_OWN + N_ENEMIES * OBS_NF_EN].reshape(B, N_ENEMIES, OBS_NF_EN)
    ally_feats = obs[:, OBS_OWN + N_ENEMIES * OBS_NF_EN:].reshape(B, N_ALLIES, OBS_NF_AL)

    ids = np.stack([binary_embed(i + 1, ID_LEN, MAX_AGENT) for i in range(N_AGENTS)], axis=0)
    ids = jnp.asarray(np.tile(ids, (BS, 1)), dtype=jnp.float32)

    attack_info = last_action[:, N_NO_ATTACK:]                                  # (B, N_ENEMIES)
    compact = jnp.concatenate([last_action[:, :N_NO_ATTACK],
                               jnp.sum(attack_info, axis=-1, keepdims=True)], axis=-1)

    own_w = jnp.concatenate([own_obs, ids, compact], axis=-1)                   # (B, WRAPPED_OWN)
    enemy = jnp.concatenate([enemy_feats, attack_info[:, :, None]], axis=-1)    # (B, N_EN, OBS_EN_DIM)
    hid = hidden_state.reshape(-1, 1, EMB)
    return own_w, enemy, ally_feats, hid


# ----------------------------- main -----------------------------
if __name__ == "__main__":
    key = jax.random.PRNGKey(0)
    k_in, k_act, k_hid, k_skill, k_par = jax.random.split(key, 5)

    inputs = jax.random.normal(k_in, (B, OBS_DIM + N_ACTIONS + N_AGENTS), jnp.float32)
    act_idx = jax.random.randint(k_act, (B,), 0, N_ACTIONS)
    last_act = jax.nn.one_hot(act_idx, N_ACTIONS, dtype=jnp.float32)
    inputs = inputs.at[:, OBS_DIM:OBS_DIM + N_ACTIONS].set(last_act)
    hidden_state = jax.random.normal(k_hid, (B, EMB), jnp.float32) * 0.1
    skill = jax.random.normal(k_skill, (B, SKILL_DIM), jnp.float32)
    params = init_params(k_par)
    params_slab = pack_params(params)

    own_w, enemy, ally, hid = preprocess(inputs, hidden_state)

    q, h = run_decoder(own_w, enemy, ally, hid, skill, params_slab)
    q, h = jax.block_until_ready((q, h))

    # pure-JAX f32 reference (original unpacked math) for a numerical sanity check
    q_gold, h_gold = decoder_math(own_w, enemy, ally, hid, skill, params)

    assert q.shape == (B, N_ACTIONS)
    assert h.shape == (B, 1, EMB)
    assert np.all(np.isfinite(np.asarray(q))) and np.all(np.isfinite(np.asarray(h)))
    # tolerance covers the bf16 parameter/activation slab, folded weights (Wq@Wk^T, te_W,
    # attack-mean) and the approx-reciprocal softmax; accumulation stays f32 in the kernel
    np.testing.assert_allclose(np.asarray(q), np.asarray(q_gold), rtol=3e-2, atol=3e-2)
    np.testing.assert_allclose(np.asarray(h), np.asarray(h_gold), rtol=3e-2, atol=3e-2)
    print("KERNEL_OK")
</pallas_src>

<mosaic_0001>
module attributes {stable_mosaic.version = 11 : i64} {
  func.func @decoder_kernel(%arg0: memref<48x72xbf16, #tpu.memory_space<vmem>>, %arg1: memref<304x128xbf16, #tpu.memory_space<vmem>>, %arg2: memref<8x64xf32, #tpu.memory_space<vmem>>) attributes {dimension_semantics = [], scalar_prefetch = 0 : i64, scratch_operands = 0 : i64, tpu.core_type = #tpu.core_type<tc>} {
    %c0 = arith.constant 0 : index
    %c0_0 = arith.constant 0 : index
    %0 = vector.load %arg0[%c0, %c0_0] : memref<48x72xbf16, #tpu.memory_space<vmem>>, vector<48x72xbf16>
    %c144 = arith.constant 144 : index
    %c64 = arith.constant 64 : index
    %1 = vector.load %arg1[%c144, %c64] : memref<304x128xbf16, #tpu.memory_space<vmem>>, vector<72x32xbf16>
    %cst = arith.constant dense<0.000000e+00> : vector<48x32xf32>
    %2 = tpu.matmul %0, %1, %cst {dimension_numbers = #tpu.dot_dimension_numbers<[1], [0], [0], [1], [0, 0, 1, 1], [], []>} : vector<48x72xbf16>, vector<72x32xbf16>, vector<48x32xf32> -> vector<48x32xf32>
    %3 = tpu.iota {dimensions = array<i32: 0>} : vector<48x48xi32>
    %c24_i32 = arith.constant 24 : i32
    %4 = vector.broadcast %c24_i32 : i32 to vector<48x48xi32>
    %5 = arith.cmpi sge, %3, %4 : vector<48x48xi32>
    %c24_i32_1 = arith.constant 24 : i32
    %6 = vector.broadcast %c24_i32_1 : i32 to vector<48x48xi32>
    %7 = arith.subi %3, %6 : vector<48x48xi32>
    %8 = arith.select %5, %7, %3 : vector<48x48xi1>, vector<48x48xi32>
    %c12_i32 = arith.constant 12 : i32
    %9 = vector.broadcast %c12_i32 : i32 to vector<48x48xi32>
    %10 = arith.cmpi sge, %8, %9 : vector<48x48xi32>
    %c12_i32_2 = arith.constant 12 : i32
    %11 = vector.broadcast %c12_i32_2 : i32 to vector<48x48xi32>
    %12 = arith.subi %8, %11 : vector<48x48xi32>
    %13 = arith.select %10, %12, %8 : vector<48x48xi1>, vector<48x48xi32>
    %c6_i32 = arith.constant 6 : i32
    %14 = vector.broadcast %c6_i32 : i32 to vector<48x48xi32>
    %15 = arith.cmpi sge, %13, %14 : vector<48x48xi32>
    %c6_i32_3 = arith.constant 6 : i32
    %16 = vector.broadcast %c6_i32_3 : i32 to vector<48x48xi32>
    %17 = arith.subi %13, %16 : vector<48x48xi32>
    %18 = arith.select %15, %17, %13 : vector<48x48xi1>, vector<48x48xi32>
    %19 = tpu.iota {dimensions = array<i32: 1>} : vector<48x48xi32>
    %c24_i32_4 = arith.constant 24 : i32
    %20 = vector.broadcast %c24_i32_4 : i32 to vector<48x48xi32>
    %21 = arith.cmpi sge, %19, %20 : vector<48x48xi32>
    %c24_i32_5 = arith.constant 24 : i32
    %22 = vector.broadcast %c24_i32_5 : i32 to vector<48x48xi32>
    %23 = arith.subi %19, %22 : vector<48x48xi32>
    %24 = arith.select %21, %23, %19 : vector<48x48xi1>, vector<48x48xi32>
    %c12_i32_6 = arith.constant 12 : i32
    %25 = vector.broadcast %c12_i32_6 : i32 to vector<48x48xi32>
    %26 = arith.cmpi sge, %24, %25 : vector<48x48xi32>
    %c12_i32_7 = arith.constant 12 : i32
    %27 = vector.broadcast %c12_i32_7 : i32 to vector<48x48xi32>
    %28 = arith.subi %24, %27 : vector<48x48xi32>
    %29 = arith.select %26, %28, %24 : vector<48x48xi1>, vector<48x48xi32>
    %c6_i32_8 = arith.constant 6 : i32
    %30 = vector.broadcast %c6_i32_8 : i32 to vector<48x48xi32>
    %31 = arith.cmpi sge, %29, %30 : vector<48x48xi32>
    %c6_i32_9 = arith.constant 6 : i32
    %32 = vector.broadcast %c6_i32_9 : i32 to vector<48x48xi32>
    %33 = arith.subi %29, %32 : vector<48x48xi32>
    %34 = arith.select %31, %33, %29 : vector<48x48xi1>, vector<48x48xi32>
    %35 = arith.cmpi eq, %18, %34 : vector<48x48xi32>
    %cst_10 = arith.constant 0.000000e+00 : f32
    %cst_11 = arith.constant -1.000000e+30 : f32
    %36 = vector.broadcast %cst_10 : f32 to vector<48x48xf32>
    %37 = vector.broadcast %cst_11 : f32 to vector<48x48xf32>
    %38 = arith.select %35, %36, %37 : vector<48x48xi1>, vector<48x48xf32>
    %39 = arith.truncf %2 : vector<48x32xf32> to vector<48x32xbf16>
    %c0_12 = arith.constant 0 : index
    %c0_13 = arith.constant 0 : index
    %40 = vector.load %arg1[%c0_12, %c0_13] : memref<304x128xbf16, #tpu.memory_space<vmem>>, vector<32x128xbf16>
    %cst_14 = arith.constant dense<0.000000e+00> : vector<48x128xf32>
    %41 = tpu.matmul %39, %40, %cst_14 {dimension_numbers = #tpu.dot_dimension_numbers<[1], [0], [0], [1], [0, 0, 1, 1], [], []>} : vector<48x32xbf16>, vector<32x128xbf16>, vector<48x128xf32> -> vector<48x128xf32>
    %42 = vector.extract_strided_slice %41 {offsets = [0, 0], sizes = [48, 32], strides = [1, 1]} : vector<48x128xf32> to vector<48x32xf32>
    %43 = vector.extract_strided_slice %41 {offsets = [0, 32], sizes = [48, 32], strides = [1, 1]} : vector<48x128xf32> to vector<48x32xf32>
    %44 = arith.truncf %42 : vector<48x32xf32> to vector<48x32xbf16>
    %cst_15 = arith.constant dense<0.000000e+00> : vector<48x48xf32>
    %45 = tpu.matmul %44, %39, %cst_15 {dimension_numbers = #tpu.dot_dimension_numbers<[1], [1], [0], [0], [0, 0, 1, 0], [], []>} : vector<48x32xbf16>, vector<48x32xbf16>, vector<48x48xf32> -> vector<48x48xf32>
    %46 = arith.addf %45, %38 : vector<48x48xf32>
    %cst_16 = arith.constant dense<0xFF800000> : vector<48xf32>
    %47 = vector.multi_reduction <maximumf>, %46, %cst_16 [1] : vector<48x48xf32> to vector<48xf32>
    %48 = vector.shape_cast %47 : vector<48xf32> to vector<48x1xf32>
    %49 = vector.broadcast %48 : vector<48x1xf32> to vector<48x48xf32>
    %50 = arith.subf %46, %49 : vector<48x48xf32>
    %51 = math.exp %50 : vector<48x48xf32>
    %cst_17 = arith.constant dense<0.000000e+00> : vector<48xf32>
    %52 = vector.multi_reduction <add>, %51, %cst_17 [1] : vector<48x48xf32> to vector<48xf32>
    %53 = vector.shape_cast %52 : vector<48xf32> to vector<48x1xf32>
    %54 = tpu.reciprocal %53 {approx = true} : vector<48x1xf32> -> vector<48x1xf32>
    %55 = vector.broadcast %54 : vector<48x1xf32> to vector<48x48xf32>
    %56 = arith.mulf %51, %55 : vector<48x48xf32>
    %57 = arith.truncf %56 : vector<48x48xf32> to vector<48x48xbf16>
    %58 = arith.truncf %43 : vector<48x32xf32> to vector<48x32xbf16>
    %cst_18 = arith.constant dense<0.000000e+00> : vector<48x32xf32>
    %59 = tpu.matmul %57, %58, %cst_18 {dimension_numbers = #tpu.dot_dimension_numbers<[1], [0], [0], [1], [0, 0, 1, 1], [], []>} : vector<48x48xbf16>, vector<48x32xbf16>, vector<48x32xf32> -> vector<48x32xf32>
    %60 = vector.extract_strided_slice %41 {offsets = [0, 64], sizes = [48, 32], strides = [1, 1]} : vector<48x128xf32> to vector<48x32xf32>
    %61 = vector.extract_strided_slice %41 {offsets = [0, 96], sizes = [48, 32], strides = [1, 1]} : vector<48x128xf32> to vector<48x32xf32>
    %62 = arith.truncf %60 : vector<48x32xf32> to vector<48x32xbf16>
    %cst_19 = arith.constant dense<0.000000e+00> : vector<48x48xf32>
    %63 = tpu.matmul %62, %39, %cst_19 {dimension_numbers = #tpu.dot_dimension_numbers<[1], [1], [0], [0], [0, 0, 1, 0], [], []>} : vector<48x32xbf16>, vector<48x32xbf16>, vector<48x48xf32> -> vector<48x48xf32>
    %64 = arith.addf %63, %38 : vector<48x48xf32>
    %cst_20 = arith.constant dense<0xFF800000> : vector<48xf32>
    %65 = vector.multi_reduction <maximumf>, %64, %cst_20 [1] : vector<48x48xf32> to vector<48xf32>
    %66 = vector.shape_cast %65 : vector<48xf32> to vector<48x1xf32>
    %67 = vector.broadcast %66 : vector<48x1xf32> to vector<48x48xf32>
    %68 = arith.subf %64, %67 : vector<48x48xf32>
    %69 = math.exp %68 : vector<48x48xf32>
    %cst_21 = arith.constant dense<0.000000e+00> : vector<48xf32>
    %70 = vector.multi_reduction <add>, %69, %cst_21 [1] : vector<48x48xf32> to vector<48xf32>
    %71 = vector.shape_cast %70 : vector<48xf32> to vector<48x1xf32>
    %72 = tpu.reciprocal %71 {approx = true} : vector<48x1xf32> -> vector<48x1xf32>
    %73 = vector.broadcast %72 : vector<48x1xf32> to vector<48x48xf32>
    %74 = arith.mulf %69, %73 : vector<48x48xf32>
    %75 = arith.truncf %74 : vector<48x48xf32> to vector<48x48xbf16>
    %76 = arith.truncf %61 : vector<48x32xf32> to vector<48x32xbf16>
    %cst_22 = arith.constant dense<0.000000e+00> : vector<48x32xf32>
    %77 = tpu.matmul %75, %76, %cst_22 {dimension_numbers = #tpu.dot_dimension_numbers<[1], [0], [0], [1], [0, 0, 1, 1], [], []>} : vector<48x48xbf16>, vector<48x32xbf16>, vector<48x32xf32> -> vector<48x32xf32>
    %78 = tpu.concatenate %59, %77 in 1 : vector<48x32xf32>, vector<48x32xf32> -> vector<48x64xf32>
    %c144_23 = arith.constant 144 : index
    %c96 = arith.constant 96 : index
    %79 = vector.load %arg1[%c144_23, %c96] : memref<304x128xbf16, #tpu.memory_space<vmem>>, vector<64x32xbf16>
    %80 = arith.truncf %78 : vector<48x64xf32> to vector<48x64xbf16>
    %cst_24 = arith.constant dense<0.000000e+00> : vector<48x32xf32>
    %81 = tpu.matmul %80, %79, %cst_24 {dimension_numbers = #tpu.dot_dimension_numbers<[1], [0], [0], [1], [0, 0, 1, 1], [], []>} : vector<48x64xbf16>, vector<64x32xbf16>, vector<48x32xf32> -> vector<48x32xf32>
    %c128 = arith.constant 128 : index
    %c0_25 = arith.constant 0 : index
    %82 = vector.load %arg1[%c128, %c0_25] : memref<304x128xbf16, #tpu.memory_space<vmem>>, vector<1x32xbf16>
    %83 = arith.extf %82 : vector<1x32xbf16> to vector<1x32xf32>
    %84 = vector.broadcast %83 : vector<1x32xf32> to vector<48x32xf32>
    %85 = arith.addf %81, %84 : vector<48x32xf32>
    %86 = arith.addf %85, %2 : vector<48x32xf32>
    %c129 = arith.constant 129 : index
    %c0_26 = arith.constant 0 : index
    %87 = vector.load %arg1[%c129, %c0_26] : memref<304x128xbf16, #tpu.memory_space<vmem>>, vector<1x32xbf16>
    %88 = arith.extf %87 : vector<1x32xbf16> to vector<1x32xf32>
    %c130 = arith.constant 130 : index
    %c0_27 = arith.constant 0 : index
    %89 = vector.load %arg1[%c130, %c0_27] : memref<304x128xbf16, #tpu.memory_space<vmem>>, vector<1x32xbf16>
    %90 = arith.extf %89 : vector<1x32xbf16> to vector<1x32xf32>
    %cst_28 = arith.constant dense<0.000000e+00> : vector<48xf32>
    %91 = vector.multi_reduction <add>, %86, %cst_28 [1] : vector<48x32xf32> to vector<48xf32>
    %92 = vector.shape_cast %91 : vector<48xf32> to vector<48x1xf32>
    %cst_29 = arith.constant 3.200000e+01 : f32
    %93 = vector.broadcast %cst_29 : f32 to vector<48x1xf32>
    %94 = arith.divf %92, %93 : vector<48x1xf32>
    %95 = vector.broadcast %94 : vector<48x1xf32> to vector<48x32xf32>
    %96 = arith.subf %86, %95 : vector<48x32xf32>
    %97 = arith.mulf %96, %96 : vector<48x32xf32>
    %cst_30 = arith.constant dense<0.000000e+00> : vector<48xf32>
    %98 = vector.multi_reduction <add>, %97, %cst_30 [1] : vector<48x32xf32> to vector<48xf32>
    %99 = vector.shape_cast %98 : vector<48xf32> to vector<48x1xf32>
    %cst_31 = arith.constant 3.200000e+01 : f32
    %100 = vector.broadcast %cst_31 : f32 to vector<48x1xf32>
    %101 = arith.divf %99, %100 : vector<48x1xf32>
    %102 = vector.broadcast %94 : vector<48x1xf32> to vector<48x32xf32>
    %103 = arith.subf %86, %102 : vector<48x32xf32>
    %cst_32 = arith.constant 9.99999974E-6 : f32
    %104 = vector.broadcast %cst_32 : f32 to vector<48x1xf32>
    %105 = arith.addf %101, %104 : vector<48x1xf32>
    %106 = math.rsqrt %105 : vector<48x1xf32>
    %107 = vector.broadcast %106 : vector<48x1xf32> to vector<48x32xf32>
    %108 = arith.mulf %103, %107 : vector<48x32xf32>
    %109 = vector.broadcast %88 : vector<1x32xf32> to vector<48x32xf32>
    %110 = arith.mulf %108, %109 : vector<48x32xf32>
    %111 = vector.broadcast %90 : vector<1x32xf32> to vector<48x32xf32>
    %112 = arith.addf %110, %111 : vector<48x32xf32>
    %c64_33 = arith.constant 64 : index
    %c0_34 = arith.constant 0 : index
    %113 = vector.load %arg1[%c64_33, %c0_34] : memref<304x128xbf16, #tpu.memory_space<vmem>>, vector<32x128xbf16>
    %114 = arith.truncf %112 : vector<48x32xf32> to vector<48x32xbf16>
    %cst_35 = arith.constant dense<0.000000e+00> : vector<48x128xf32>
    %115 = tpu.matmul %114, %113, %cst_35 {dimension_numbers = #tpu.dot_dimension_numbers<[1], [0], [0], [1], [0, 0, 1, 1], [], []>} : vector<48x32xbf16>, vector<32x128xbf16>, vector<48x128xf32> -> vector<48x128xf32>
    %c131 = arith.constant 131 : index
    %c0_36 = arith.constant 0 : index
    %116 = vector.load %arg1[%c131, %c0_36] : memref<304x128xbf16, #tpu.memory_space<vmem>>, vector<1x128xbf16>
    %117 = arith.extf %116 : vector<1x128xbf16> to vector<1x128xf32>
    %118 = vector.broadcast %117 : vector<1x128xf32> to vector<48x128xf32>
    %119 = arith.addf %115, %118 : vector<48x128xf32>
    %cst_37 = arith.constant 0.000000e+00 : f32
    %120 = vector.broadcast %cst_37 : f32 to vector<48x128xf32>
    %121 = arith.maximumf %119, %120 : vector<48x128xf32>
    %c144_38 = arith.constant 144 : index
    %c0_39 = arith.constant 0 : index
    %122 = vector.load %arg1[%c144_38, %c0_39] : memref<304x128xbf16, #tpu.memory_space<vmem>>, vector<128x32xbf16>
    %123 = arith.truncf %121 : vector<48x128xf32> to vector<48x128xbf16>
    %cst_40 = arith.constant dense<0.000000e+00> : vector<48x32xf32>
    %124 = tpu.matmul %123, %122, %cst_40 {dimension_numbers = #tpu.dot_dimension_numbers<[1], [0], [0], [1], [0, 0, 1, 1], [], []>} : vector<48x128xbf16>, vector<128x32xbf16>, vector<48x32xf32> -> vector<48x32xf32>
    %c132 = arith.constant 132 : index
    %c0_41 = arith.constant 0 : index
    %125 = vector.load %arg1[%c132, %c0_41] : memref<304x128xbf16, #tpu.memory_space<vmem>>, vector<1x32xbf16>
    %126 = arith.extf %125 : vector<1x32xbf16> to vector<1x32xf32>
    %127 = vector.broadcast %126 : vector<1x32xf32> to vector<48x32xf32>
    %128 = arith.addf %124, %127 : vector<48x32xf32>
    %129 = arith.addf %128, %112 : vector<48x32xf32>
    %c133 = arith.constant 133 : index
    %c0_42 = arith.constant 0 : index
    %130 = vector.load %arg1[%c133, %c0_42] : memref<304x128xbf16, #tpu.memory_space<vmem>>, vector<1x32xbf16>
    %131 = arith.extf %130 : vector<1x32xbf16> to vector<1x32xf32>
    %c134 = arith.constant 134 : index
    %c0_43 = arith.constant 0 : index
    %132 = vector.load %arg1[%c134, %c0_43] : memref<304x128xbf16, #tpu.memory_space<vmem>>, vector<1x32xbf16>
    %133 = arith.extf %132 : vector<1x32xbf16> to vector<1x32xf32>
    %cst_44 = arith.constant dense<0.000000e+00> : vector<48xf32>
    %134 = vector.multi_reduction <add>, %129, %cst_44 [1] : vector<48x32xf32> to vector<48xf32>
    %135 = vector.shape_cast %134 : vector<48xf32> to vector<48x1xf32>
    %cst_45 = arith.constant 3.200000e+01 : f32
    %136 = vector.broadcast %cst_45 : f32 to vector<48x1xf32>
    %137 = arith.divf %135, %136 : vector<48x1xf32>
    %138 = vector.broadcast %137 : vector<48x1xf32> to vector<48x32xf32>
    %139 = arith.subf %129, %138 : vector<48x32xf32>
    %140 = arith.mulf %139, %139 : vector<48x32xf32>
    %cst_46 = arith.constant dense<0.000000e+00> : vector<48xf32>
    %141 = vector.multi_reduction <add>, %140, %cst_46 [1] : vector<48x32xf32> to vector<48xf32>
    %142 = vector.shape_cast %141 : vector<48xf32> to vector<48x1xf32>
    %cst_47 = arith.constant 3.200000e+01 : f32
    %143 = vector.broadcast %cst_47 : f32 to vector<48x1xf32>
    %144 = arith.divf %142, %143 : vector<48x1xf32>
    %145 = vector.broadcast %137 : vector<48x1xf32> to vector<48x32xf32>
    %146 = arith.subf %129, %145 : vector<48x32xf32>
    %cst_48 = arith.constant 9.99999974E-6 : f32
    %147 = vector.broadcast %cst_48 : f32 to vector<48x1xf32>
    %148 = arith.addf %144, %147 : vector<48x1xf32>
    %149 = math.rsqrt %148 : vector<48x1xf32>
    %150 = vector.broadcast %149 : vector<48x1xf32> to vector<48x32xf32>
    %151 = arith.mulf %146, %150 : vector<48x32xf32>
    %152 = vector.broadcast %131 : vector<1x32xf32> to vector<48x32xf32>
    %153 = arith.mulf %151, %152 : vector<48x32xf32>
    %154 = vector.broadcast %133 : vector<1x32xf32> to vector<48x32xf32>
    %155 = arith.addf %153, %154 : vector<48x32xf32>
    %156 = arith.truncf %155 : vector<48x32xf32> to vector<48x32xbf16>
    %c32 = arith.constant 32 : index
    %c0_49 = arith.constant 0 : index
    %157 = vector.load %arg1[%c32, %c0_49] : memref<304x128xbf16, #tpu.memory_space<vmem>>, vector<32x128xbf16>
    %cst_50 = arith.constant dense<0.000000e+00> : vector<48x128xf32>
    %158 = tpu.matmul %156, %157, %cst_50 {dimension_numbers = #tpu.dot_dimension_numbers<[1], [0], [0], [1], [0, 0, 1, 1], [], []>} : vector<48x32xbf16>, vector<32x128xbf16>, vector<48x128xf32> -> vector<48x128xf32>
    %159 = vector.extract_strided_slice %158 {offsets = [0, 0], sizes = [48, 32], strides = [1, 1]} : vector<48x128xf32> to vector<48x32xf32>
    %160 = vector.extract_strided_slice %158 {offsets = [0, 32], sizes = [48, 32], strides = [1, 1]} : vector<48x128xf32> to vector<48x32xf32>
    %161 = arith.truncf %159 : vector<48x32xf32> to vector<48x32xbf16>
    %cst_51 = arith.constant dense<0.000000e+00> : vector<48x48xf32>
    %162 = tpu.matmul %161, %156, %cst_51 {dimension_numbers = #tpu.dot_dimension_numbers<[1], [1], [0], [0], [0, 0, 1, 0], [], []>} : vector<48x32xbf16>, vector<48x32xbf16>, vector<48x48xf32> -> vector<48x48xf32>
    %163 = arith.addf %162, %38 : vector<48x48xf32>
    %cst_52 = arith.constant dense<0xFF800000> : vector<48xf32>
    %164 = vector.multi_reduction <maximumf>, %163, %cst_52 [1] : vector<48x48xf32> to vector<48xf32>
    %165 = vector.shape_cast %164 : vector<48xf32> to vector<48x1xf32>
    %166 = vector.broadcast %165 : vector<48x1xf32> to vector<48x48xf32>
    %167 = arith.subf %163, %166 : vector<48x48xf32>
    %168 = math.exp %167 : vector<48x48xf32>
    %cst_53 = arith.constant dense<0.000000e+00> : vector<48xf32>
    %169 = vector.multi_reduction <add>, %168, %cst_53 [1] : vector<48x48xf32> to vector<48xf32>
    %170 = vector.shape_cast %169 : vector<48xf32> to vector<48x1xf32>
    %171 = tpu.reciprocal %170 {approx = true} : vector<48x1xf32> -> vector<48x1xf32>
    %172 = vector.broadcast %171 : vector<48x1xf32> to vector<48x48xf32>
    %173 = arith.mulf %168, %172 : vector<48x48xf32>
    %174 = arith.truncf %173 : vector<48x48xf32> to vector<48x48xbf16>
    %175 = arith.truncf %160 : vector<48x32xf32> to vector<48x32xbf16>
    %cst_54 = arith.constant dense<0.000000e+00> : vector<48x32xf32>
    %176 = tpu.matmul %174, %175, %cst_54 {dimension_numbers = #tpu.dot_dimension_numbers<[1], [0], [0], [1], [0, 0, 1, 1], [], []>} : vector<48x48xbf16>, vector<48x32xbf16>, vector<48x32xf32> -> vector<48x32xf32>
    %177 = vector.extract_strided_slice %158 {offsets = [0, 64], sizes = [48, 32], strides = [1, 1]} : vector<48x128xf32> to vector<48x32xf32>
    %178 = vector.extract_strided_slice %158 {offsets = [0, 96], sizes = [48, 32], strides = [1, 1]} : vector<48x128xf32> to vector<48x32xf32>
    %179 = arith.truncf %177 : vector<48x32xf32> to vector<48x32xbf16>
    %cst_55 = arith.constant dense<0.000000e+00> : vector<48x48xf32>
    %180 = tpu.matmul %179, %156, %cst_55 {dimension_numbers = #tpu.dot_dimension_numbers<[1], [1], [0], [0], [0, 0, 1, 0], [], []>} : vector<48x32xbf16>, vector<48x32xbf16>, vector<48x48xf32> -> vector<48x48xf32>
    %181 = arith.addf %180, %38 : vector<48x48xf32>
    %cst_56 = arith.constant dense<0xFF800000> : vector<48xf32>
    %182 = vector.multi_reduction <maximumf>, %181, %cst_56 [1] : vector<48x48xf32> to vector<48xf32>
    %183 = vector.shape_cast %182 : vector<48xf32> to vector<48x1xf32>
    %184 = vector.broadcast %183 : vector<48x1xf32> to vector<48x48xf32>
    %185 = arith.subf %181, %184 : vector<48x48xf32>
    %186 = math.exp %185 : vector<48x48xf32>
    %cst_57 = arith.constant dense<0.000000e+00> : vector<48xf32>
    %187 = vector.multi_reduction <add>, %186, %cst_57 [1] : vector<48x48xf32> to vector<48xf32>
    %188 = vector.shape_cast %187 : vector<48xf32> to vector<48x1xf32>
    %189 = tpu.reciprocal %188 {approx = true} : vector<48x1xf32> -> vector<48x1xf32>
    %190 = vector.broadcast %189 : vector<48x1xf32> to vector<48x48xf32>
    %191 = arith.mulf %186, %190 : vector<48x48xf32>
    %192 = arith.truncf %191 : vector<48x48xf32> to vector<48x48xbf16>
    %193 = arith.truncf %178 : vector<48x32xf32> to vector<48x32xbf16>
    %cst_58 = arith.constant dense<0.000000e+00> : vector<48x32xf32>
    %194 = tpu.matmul %192, %193, %cst_58 {dimension_numbers = #tpu.dot_dimension_numbers<[1], [0], [0], [1], [0, 0, 1, 1], [], []>} : vector<48x48xbf16>, vector<48x32xbf16>, vector<48x32xf32> -> vector<48x32xf32>
    %195 = tpu.concatenate %176, %194 in 1 : vector<48x32xf32>, vector<48x32xf32> -> vector<48x64xf32>
    %c208 = arith.constant 208 : index
    %c96_59 = arith.constant 96 : index
    %196 = vector.load %arg1[%c208, %c96_59] : memref<304x128xbf16, #tpu.memory_space<vmem>>, vector<64x32xbf16>
    %197 = arith.truncf %195 : vector<48x64xf32> to vector<48x64xbf16>
    %cst_60 = arith.constant dense<0.000000e+00> : vector<48x32xf32>
    %198 = tpu.matmul %197, %196, %cst_60 {dimension_numbers = #tpu.dot_dimension_numbers<[1], [0], [0], [1], [0, 0, 1, 1], [], []>} : vector<48x64xbf16>, vector<64x32xbf16>, vector<48x32xf32> -> vector<48x32xf32>
    %c135 = arith.constant 135 : index
    %c0_61 = arith.constant 0 : index
    %199 = vector.load %arg1[%c135, %c0_61] : memref<304x128xbf16, #tpu.memory_space<vmem>>, vector<1x32xbf16>
    %200 = arith.extf %199 : vector<1x32xbf16> to vector<1x32xf32>
    %201 = vector.broadcast %200 : vector<1x32xf32> to vector<48x32xf32>
    %202 = arith.addf %198, %201 : vector<48x32xf32>
    %203 = arith.addf %202, %155 : vector<48x32xf32>
    %c136 = arith.constant 136 : index
    %c0_62 = arith.constant 0 : index
    %204 = vector.load %arg1[%c136, %c0_62] : memref<304x128xbf16, #tpu.memory_space<vmem>>, vector<1x32xbf16>
    %205 = arith.extf %204 : vector<1x32xbf16> to vector<1x32xf32>
    %c137 = arith.constant 137 : index
    %c0_63 = arith.constant 0 : index
    %206 = vector.load %arg1[%c137, %c0_63] : memref<304x128xbf16, #tpu.memory_space<vmem>>, vector<1x32xbf16>
    %207 = arith.extf %206 : vector<1x32xbf16> to vector<1x32xf32>
    %cst_64 = arith.constant dense<0.000000e+00> : vector<48xf32>
    %208 = vector.multi_reduction <add>, %203, %cst_64 [1] : vector<48x32xf32> to vector<48xf32>
    %209 = vector.shape_cast %208 : vector<48xf32> to vector<48x1xf32>
    %cst_65 = arith.constant 3.200000e+01 : f32
    %210 = vector.broadcast %cst_65 : f32 to vector<48x1xf32>
    %211 = arith.divf %209, %210 : vector<48x1xf32>
    %212 = vector.broadcast %211 : vector<48x1xf32> to vector<48x32xf32>
    %213 = arith.subf %203, %212 : vector<48x32xf32>
    %214 = arith.mulf %213, %213 : vector<48x32xf32>
    %cst_66 = arith.constant dense<0.000000e+00> : vector<48xf32>
    %215 = vector.multi_reduction <add>, %214, %cst_66 [1] : vector<48x32xf32> to vector<48xf32>
    %216 = vector.shape_cast %215 : vector<48xf32> to vector<48x1xf32>
    %cst_67 = arith.constant 3.200000e+01 : f32
    %217 = vector.broadcast %cst_67 : f32 to vector<48x1xf32>
    %218 = arith.divf %216, %217 : vector<48x1xf32>
    %219 = vector.broadcast %211 : vector<48x1xf32> to vector<48x32xf32>
    %220 = arith.subf %203, %219 : vector<48x32xf32>
    %cst_68 = arith.constant 9.99999974E-6 : f32
    %221 = vector.broadcast %cst_68 : f32 to vector<48x1xf32>
    %222 = arith.addf %218, %221 : vector<48x1xf32>
    %223 = math.rsqrt %222 : vector<48x1xf32>
    %224 = vector.broadcast %223 : vector<48x1xf32> to vector<48x32xf32>
    %225 = arith.mulf %220, %224 : vector<48x32xf32>
    %226 = vector.broadcast %205 : vector<1x32xf32> to vector<48x32xf32>
    %227 = arith.mulf %225, %226 : vector<48x32xf32>
    %228 = vector.broadcast %207 : vector<1x32xf32> to vector<48x32xf32>
    %229 = arith.addf %227, %228 : vector<48x32xf32>
    %c96_69 = arith.constant 96 : index
    %c0_70 = arith.constant 0 : index
    %230 = vector.load %arg1[%c96_69, %c0_70] : memref<304x128xbf16, #tpu.memory_space<vmem>>, vector<32x128xbf16>
    %231 = arith.truncf %229 : vector<48x32xf32> to vector<48x32xbf16>
    %cst_71 = arith.constant dense<0.000000e+00> : vector<48x128xf32>
    %232 = tpu.matmul %231, %230, %cst_71 {dimension_numbers = #tpu.dot_dimension_numbers<[1], [0], [0], [1], [0, 0, 1, 1], [], []>} : vector<48x32xbf16>, vector<32x128xbf16>, vector<48x128xf32> -> vector<48x128xf32>
    %c138 = arith.constant 138 : index
    %c0_72 = arith.constant 0 : index
    %233 = vector.load %arg1[%c138, %c0_72] : memref<304x128xbf16, #tpu.memory_space<vmem>>, vector<1x128xbf16>
    %234 = arith.extf %233 : vector<1x128xbf16> to vector<1x128xf32>
    %235 = vector.broadcast %234 : vector<1x128xf32> to vector<48x128xf32>
    %236 = arith.addf %232, %235 : vector<48x128xf32>
    %cst_73 = arith.constant 0.000000e+00 : f32
    %237 = vector.broadcast %cst_73 : f32 to vector<48x128xf32>
    %238 = arith.maximumf %236, %237 : vector<48x128xf32>
    %c144_74 = arith.constant 144 : index
    %c32_75 = arith.constant 32 : index
    %239 = vector.load %arg1[%c144_74, %c32_75] : memref<304x128xbf16, #tpu.memory_space<vmem>>, vector<128x32xbf16>
    %240 = arith.truncf %238 : vector<48x128xf32> to vector<48x128xbf16>
    %cst_76 = arith.constant dense<0.000000e+00> : vector<48x32xf32>
    %241 = tpu.matmul %240, %239, %cst_76 {dimension_numbers = #tpu.dot_dimension_numbers<[1], [0], [0], [1], [0, 0, 1, 1], [], []>} : vector<48x128xbf16>, vector<128x32xbf16>, vector<48x32xf32> -> vector<48x32xf32>
    %c139 = arith.constant 139 : index
    %c0_77 = arith.constant 0 : index
    %242 = vector.load %arg1[%c139, %c0_77] : memref<304x128xbf16, #tpu.memory_space<vmem>>, vector<1x32xbf16>
    %243 = arith.extf %242 : vector<1x32xbf16> to vector<1x32xf32>
    %244 = vector.broadcast %243 : vector<1x32xf32> to vector<48x32xf32>
    %245 = arith.addf %241, %244 : vector<48x32xf32>
    %246 = arith.addf %245, %229 : vector<48x32xf32>
    %c140 = arith.constant 140 : index
    %c0_78 = arith.constant 0 : index
    %247 = vector.load %arg1[%c140, %c0_78] : memref<304x128xbf16, #tpu.memory_space<vmem>>, vector<1x32xbf16>
    %248 = arith.extf %247 : vector<1x32xbf16> to vector<1x32xf32>
    %c141 = arith.constant 141 : index
    %c0_79 = arith.constant 0 : index
    %249 = vector.load %arg1[%c141, %c0_79] : memref<304x128xbf16, #tpu.memory_space<vmem>>, vector<1x32xbf16>
    %250 = arith.extf %249 : vector<1x32xbf16> to vector<1x32xf32>
    %cst_80 = arith.constant dense<0.000000e+00> : vector<48xf32>
    %251 = vector.multi_reduction <add>, %246, %cst_80 [1] : vector<48x32xf32> to vector<48xf32>
    %252 = vector.shape_cast %251 : vector<48xf32> to vector<48x1xf32>
    %cst_81 = arith.constant 3.200000e+01 : f32
    %253 = vector.broadcast %cst_81 : f32 to vector<48x1xf32>
    %254 = arith.divf %252, %253 : vector<48x1xf32>
    %255 = vector.broadcast %254 : vector<48x1xf32> to vector<48x32xf32>
    %256 = arith.subf %246, %255 : vector<48x32xf32>
    %257 = arith.mulf %256, %256 : vector<48x32xf32>
    %cst_82 = arith.constant dense<0.000000e+00> : vector<48xf32>
    %258 = vector.multi_reduction <add>, %257, %cst_82 [1] : vector<48x32xf32> to vector<48xf32>
    %259 = vector.shape_cast %258 : vector<48xf32> to vector<48x1xf32>
    %cst_83 = arith.constant 3.200000e+01 : f32
    %260 = vector.broadcast %cst_83 : f32 to vector<48x1xf32>
    %261 = arith.divf %259, %260 : vector<48x1xf32>
    %262 = vector.broadcast %254 : vector<48x1xf32> to vector<48x32xf32>
    %263 = arith.subf %246, %262 : vector<48x32xf32>
    %cst_84 = arith.constant 9.99999974E-6 : f32
    %264 = vector.broadcast %cst_84 : f32 to vector<48x1xf32>
    %265 = arith.addf %261, %264 : vector<48x1xf32>
    %266 = math.rsqrt %265 : vector<48x1xf32>
    %267 = vector.broadcast %266 : vector<48x1xf32> to vector<48x32xf32>
    %268 = arith.mulf %263, %267 : vector<48x32xf32>
    %269 = vector.broadcast %248 : vector<1x32xf32> to vector<48x32xf32>
    %270 = arith.mulf %268, %269 : vector<48x32xf32>
    %271 = vector.broadcast %250 : vector<1x32xf32> to vector<48x32xf32>
    %272 = arith.addf %270, %271 : vector<48x32xf32>
    %c272 = arith.constant 272 : index
    %c0_85 = arith.constant 0 : index
    %273 = vector.load %arg1[%c272, %c0_85] : memref<304x128xbf16, #tpu.memory_space<vmem>>, vector<32x39xbf16>
    %274 = arith.truncf %272 : vector<48x32xf32> to vector<48x32xbf16>
    %cst_86 = arith.constant dense<0.000000e+00> : vector<48x39xf32>
    %275 = tpu.matmul %274, %273, %cst_86 {dimension_numbers = #tpu.dot_dimension_numbers<[1], [0], [0], [1], [0, 0, 1, 1], [], []>} : vector<48x32xbf16>, vector<32x39xbf16>, vector<48x39xf32> -> vector<48x39xf32>
    %c142 = arith.constant 142 : index
    %c0_87 = arith.constant 0 : index
    %276 = vector.load %arg1[%c142, %c0_87] : memref<304x128xbf16, #tpu.memory_space<vmem>>, vector<1x39xbf16>
    %277 = arith.extf %276 : vector<1x39xbf16> to vector<1x39xf32>
    %278 = vector.broadcast %277 : vector<1x39xf32> to vector<48x39xf32>
    %279 = arith.addf %275, %278 : vector<48x39xf32>
    %280 = vector.extract_strided_slice %0 {offsets = [0, 67], sizes = [6, 4], strides = [1, 1]} : vector<48x72xbf16> to vector<6x4xbf16>
    %c272_88 = arith.constant 272 : index
    %c64_89 = arith.constant 64 : index
    %281 = vector.load %arg1[%c272_88, %c64_89] : memref<304x128xbf16, #tpu.memory_space<vmem>>, vector<4x7xbf16>
    %cst_90 = arith.constant dense<0.000000e+00> : vector<6x7xf32>
    %282 = tpu.matmul %280, %281, %cst_90 {dimension_numbers = #tpu.dot_dimension_numbers<[1], [0], [0], [1], [0, 0, 1, 1], [], []>} : vector<6x4xbf16>, vector<4x7xbf16>, vector<6x7xf32> -> vector<6x7xf32>
    %c143 = arith.constant 143 : index
    %c0_91 = arith.constant 0 : index
    %283 = vector.load %arg1[%c143, %c0_91] : memref<304x128xbf16, #tpu.memory_space<vmem>>, vector<1x7xbf16>
    %284 = arith.extf %283 : vector<1x7xbf16> to vector<1x7xf32>
    %285 = vector.broadcast %284 : vector<1x7xf32> to vector<6x7xf32>
    %286 = arith.addf %282, %285 : vector<6x7xf32>
    %287 = vector.extract_strided_slice %279 {offsets = [42, 0], sizes = [6, 32], strides = [1, 1]} : vector<48x39xf32> to vector<6x32xf32>
    %288 = vector.extract_strided_slice %279 {offsets = [0, 32], sizes = [6, 6], strides = [1, 1]} : vector<48x39xf32> to vector<6x6xf32>
    %289 = vector.extract_strided_slice %286 {offsets = [0, 0], sizes = [6, 6], strides = [1, 1]} : vector<6x7xf32> to vector<6x6xf32>
    %290 = arith.addf %288, %289 : vector<6x6xf32>
    %291 = vector.extract_strided_slice %279 {offsets = [0, 38], sizes = [48, 1], strides = [1, 1]} : vector<48x39xf32> to vector<48x1xf32>
    %292 = vector.extract_strided_slice %291 {offsets = [6, 0], sizes = [6, 1], strides = [1, 1]} : vector<48x1xf32> to vector<6x1xf32>
    %293 = vector.extract_strided_slice %291 {offsets = [12, 0], sizes = [6, 1], strides = [1, 1]} : vector<48x1xf32> to vector<6x1xf32>
    %294 = vector.extract_strided_slice %291 {offsets = [18, 0], sizes = [6, 1], strides = [1, 1]} : vector<48x1xf32> to vector<6x1xf32>
    %295 = vector.extract_strided_slice %291 {offsets = [24, 0], sizes = [6, 1], strides = [1, 1]} : vector<48x1xf32> to vector<6x1xf32>
    %296 = tpu.concatenate %292, %293, %294, %295 in 1 : vector<6x1xf32>, vector<6x1xf32>, vector<6x1xf32>, vector<6x1xf32> -> vector<6x4xf32>
    %297 = vector.extract_strided_slice %286 {offsets = [0, 6], sizes = [6, 1], strides = [1, 1]} : vector<6x7xf32> to vector<6x1xf32>
    %298 = vector.broadcast %297 : vector<6x1xf32> to vector<6x4xf32>
    %299 = arith.addf %296, %298 : vector<6x4xf32>
    %cst_92 = arith.constant 0.000000e+00 : f32
    %300 = vector.broadcast %cst_92 : f32 to vector<8x64xf32>
    %c0_93 = arith.constant 0 : index
    %c0_94 = arith.constant 0 : index
    %301 = vector.load %arg2[%c0_93, %c0_94] : memref<8x64xf32, #tpu.memory_space<vmem>>, vector<8x64xf32>
    tpu.vector_store %arg2[%c0_93, %c0_94], %300 {strides = array<i32>} : memref<8x64xf32, #tpu.memory_space<vmem>>, vector<8x64xf32>,
    %c0_95 = arith.constant 0 : index
    %c0_96 = arith.constant 0 : index
    %302 = vector.load %arg2[%c0_95, %c0_96] : memref<8x64xf32, #tpu.memory_space<vmem>>, vector<6x32xf32>
    tpu.vector_store %arg2[%c0_95, %c0_96], %287 {strides = array<i32>} : memref<8x64xf32, #tpu.memory_space<vmem>>, vector<6x32xf32>,
    %303 = tpu.concatenate %290, %299 in 1 : vector<6x6xf32>, vector<6x4xf32> -> vector<6x10xf32>
    %c0_97 = arith.constant 0 : index
    %c32_98 = arith.constant 32 : index
    %304 = vector.load %arg2[%c0_97, %c32_98] : memref<8x64xf32, #tpu.memory_space<vmem>>, vector<6x10xf32>
    tpu.vector_store %arg2[%c0_97, %c32_98], %303 {strides = array<i32>} : memref<8x64xf32, #tpu.memory_space<vmem>>, vector<6x10xf32>,
    return
  }
}

</mosaic_0001>

<llo_original>
// kernel: run_decoder.1
$region0: #{run_decoder.1}
  #allocation0 [shape = 'u32[]', space=smem, size = 0x4, offset = 0x4, fixed_abs, tag = 'smem constant byte address 0x4 - core index']
  #allocation1 [shape = 'u32[144,128]{1,0:T(1,128)}', space=vmem, size = 0x12000, scoped, tag = 'internal scratch']
  %s0 = inlined_call_operand.vmem [shape: bf16[48,72], index: 0, kind: input, shape index: {}]
  %s1 = inlined_call_operand.vmem [shape: bf16[304,128], index: 1, kind: input, shape index: {}]
  %s2 = inlined_call_operand.vmem [shape: f32[8,64], index: 2, kind: output, shape index: {}]
  %s3 = sld [smem:[#allocation0]]
  $region18: #{run_decoder.1} parent=0
    _
  %s5 = ssub.s32 1, %s3
  %s6 = scalar_select 0, %s5, %s3
  // Predicated region
  $region2: #{run_decoder.1} parent=0 // pred_check
    _
  $region3: #{run_decoder.1} parent=0 // pred_check_branch
    %8 = sbr.rel (0) target = $region5
  $region4: #{run_decoder.1} parent=0 // pred_region
    _
  $region5: #{run_decoder.1} parent=0 // pred_fallthru
    _
  // Predicated region
  $region6: #{run_decoder.1} parent=0 // pred_check
    _
  $region7: #{run_decoder.1} parent=0 // pred_check_branch
    %10 = sbr.rel (0) target = $region9
  $region8: #{run_decoder.1} parent=0 // pred_region
    _
  $region9: #{run_decoder.1} parent=0 // pred_fallthru
    _
  %v12 = vld [vmem:[%s0] sm:$0xf]
  %v13 = vld [vmem:[%s0 + $0x4] sm:$0xf]
  %v14 = vld [vmem:[%s0 + $0x8] sm:$0xf]
  %v15 = vld [vmem:[%s0 + $0xc] sm:$0xf]
  %v16 = vld [vmem:[%s0 + $0x10] sm:$0xf]
  %v17 = vld [vmem:[%s0 + $0x14] sm:$0xf]
  %v18 = vld [vmem:[%s1 + $0x48] sm:$0xf]
  %v19 = vld [vmem:[%s1 + $0x4c] sm:$0xf]
  %v20 = vld [vmem:[%s1 + $0x50] sm:$0xf]
  %v21 = vld [vmem:[%s1 + $0x54] sm:$0xf]
  %v22 = vld [vmem:[%s1 + $0x58] sm:$0xf]
  %v23 = vld [vmem:[%s1 + $0x5c] sm:$0xf]
  %v24 = vld [vmem:[%s1 + $0x60] sm:$0xf]
  %v25 = vld [vmem:[%s1 + $0x64] sm:$0xf]
  %v26 = vld [vmem:[%s1 + $0x68] sm:$0xf]
  %v33 = vunpack.c.l.b16 %v12
  %v34 = vunpack.c.l.b16 %v13
  %v35 = vunpack.c.l.b16 %v14
  %v36 = vunpack.c.l.b16 %v15
  %v37 = vunpack.c.l.b16 %v16
  %v38 = vunpack.c.l.b16 %v17
  %v39 = vpack.c.b16 %v34, %v33
  %v40 = vpack.c.b16 %v36, %v35
  %v41 = vpack.c.b16 %v38, %v37
  %v51 = vunpack.c.l.b16 %v18
  %v52 = vunpack.c.l.b16 %v19
  %v53 = vunpack.c.l.b16 %v20
  %v54 = vunpack.c.l.b16 %v21
  %v55 = vunpack.c.l.b16 %v22
  %v56 = vunpack.c.l.b16 %v23
  %v57 = vunpack.c.l.b16 %v24
  %v58 = vunpack.c.l.b16 %v25
  %v59 = vunpack.c.l.b16 %v26
  %v60 = vpack.c.b16 %v52, %v51
  %v61 = vpack.c.b16 %v54, %v53
  %v62 = vpack.c.b16 %v56, %v55
  %v63 = vpack.c.b16 %v58, %v57
  %v64 = vpack.c.b16 %v59, %v59
  %65 = vrot.lane.b32.xlu0 %v60, 64
  %v66 = vpop.permute.xlu0 %65
  %67 = vrot.lane.b32.xlu0 %v61, 64
  %v68 = vpop.permute.xlu0 %67
  %69 = vrot.lane.b32.xlu0 %v62, 64
  %v70 = vpop.permute.xlu0 %69
  %71 = vrot.lane.b32.xlu0 %v63, 64
  %v72 = vpop.permute.xlu0 %71
  %73 = vrot.lane.b32.xlu0 %v64, 64
  %v74 = vpop.permute.xlu0 %73
  %vm79 = vcmask 588800
  %v81 = vsel %vm79, %v39, 0
  %v84 = vsel %vm79, %v40, 0
  %v87 = vsel %vm79, %v41, 0
  %vm89 = vcmask 1043456
  %v91 = vsel %vm89, %v74, 0
  %93 = vmatprep.subr.bf16.mxu0 0
  %94 = vmatpush1.bf16.msra.mxu0 %v66
  %95 = vmatprep.subr.bf16.mxu0 0
  %96 = vmatpush1.bf16.msra.mxu0 %v68
  %97 = vmatprep.subr.bf16.mxu0 0
  %98 = vmatpush1.bf16.msra.mxu0 %v70
  %99 = vmatprep.subr.bf16.mxu0 0
  %100 = vmatpush1.bf16.msra.mxu0 %v72
  %101 = vmatprep.subr.bf16.mxu0 0
  %102 = vmatpush1.bf16.msra.mxu0 %v91
  %103 = vmatprep.subr.bf16.mxu0 0
  %104 = vmatpush1.bf16.msra.mxu0 0
  %105 = vmatprep.subr.bf16.mxu0 0
  %106 = vmatpush1.bf16.msra.mxu0 0
  %107 = vmatprep.subr.bf16.mxu0 0
  %108 = vmatpush1.bf16.msra.mxu0 0
  %109 = vmatprep.subr.bf16.mxu0 0
  %110 = vmatpush1.bf16.msra.mxu0 0
  %111 = vmatprep.subr.bf16.mxu0 0
  %112 = vmatpush1.bf16.msra.mxu0 0
  %113 = vmatprep.subr.bf16.mxu0 0
  %114 = vmatpush1.bf16.msra.mxu0 0
  %115 = vmatprep.subr.bf16.mxu0 0
  %116 = vmatpush1.bf16.msra.mxu0 0
  %117 = vmatprep.subr.bf16.mxu0 0
  %118 = vmatpush1.bf16.msra.mxu0 0
  %119 = vmatprep.subr.bf16.mxu0 0
  %120 = vmatpush1.bf16.msra.mxu0 0
  %121 = vmatprep.subr.bf16.mxu0 0
  %122 = vmatpush1.bf16.msra.mxu0 0
  %123 = vmatprep.subr.bf16.mxu0 0
  %124 = vmatpush1.bf16.msra.mxu0 0
  %125 = vmatprep.mubr.bf16.mxu0 0
  %126 = vmatmul.mubr.bf16.gmra.mrb[0].mxu0 %v81
  %v127 = vpop.f32.mrb[0].mxu0
  %v128 = vadd.f32 0.0, %v127
  %v129 = vpop.f32.mrb[0].mxu0
  %v130 = vpop.f32.mrb[0].mxu0
  %v131 = vadd.f32 0.0, %v130
  %v132 = vpop.f32.mrb[0].mxu0
  %133 = vmatprep.mubr.bf16.mxu0 0
  %134 = vmatmul.mubr.bf16.gmra.mrb[0].mxu0 %v84
  %v135 = vpop.f32.mrb[0].mxu0
  %v136 = vadd.f32 0.0, %v135
  %v137 = vpop.f32.mrb[0].mxu0
  %v138 = vpop.f32.mrb[0].mxu0
  %v139 = vadd.f32 0.0, %v138
  %v140 = vpop.f32.mrb[0].mxu0
  %141 = vmatprep.mubr.bf16.mxu0 0
  %142 = vmatmul.mubr.bf16.gmra.mrb[0].mxu0 %v87
  %v143 = vpop.f32.mrb[0].mxu0
  %v144 = vadd.f32 0.0, %v143
  %v145 = vpop.f32.mrb[0].mxu0
  %v146 = vpop.f32.mrb[0].mxu0
  %v147 = vadd.f32 0.0, %v146
  %v148 = vpop.f32.mrb[0].mxu0
  %149 = vdwg.mxu0
  %v150 = vlaneseq
  %v151 = vshrl.u32 %v150, 7
  %v152 = vadd.s32 %v151, 8
  %v153 = vadd.s32 %v151, 16
  %v154 = vadd.s32 %v151, 24
  %v155 = vadd.s32 %v151, 32
  %v156 = vadd.s32 %v151, 40
  %vm157 = vcmp.ge.s32.totalorder %v151, 24
  %vm158 = vcmp.ge.s32.totalorder %v152, 24
  %vm159 = vcmp.ge.s32.totalorder %v153, 24
  %vm160 = vcmp.ge.s32.totalorder %v154, 24
  %vm161 = vcmp.ge.s32.totalorder %v155, 24
  %vm162 = vcmp.ge.s32.totalorder %v156, 24
  %v163 = vsub.s32 %v151, 24
  %v164 = vsub.s32 %v152, 24
  %v165 = vsub.s32 %v153, 24
  %v166 = vsub.s32 %v155, 24
  %v167 = vsub.s32 %v156, 24
  %v168 = vsel %vm157, %v163, %v151
  %v169 = vsel %vm158, %v164, %v152
  %v170 = vsel %vm159, %v165, %v153
  %v171 = vsel %vm160, %v151, %v154
  %v172 = vsel %vm161, %v166, %v155
  %v173 = vsel %vm162, %v167, %v156
  %vm174 = vcmp.ge.s32.totalorder %v168, 12
  %vm175 = vcmp.ge.s32.totalorder %v169, 12
  %vm176 = vcmp.ge.s32.totalorder %v170, 12
  %vm177 = vcmp.ge.s32.totalorder %v171, 12
  %vm178 = vcmp.ge.s32.totalorder %v172, 12
  %vm179 = vcmp.ge.s32.totalorder %v173, 12
  %v180 = vsub.s32 %v168, 12
  %v181 = vsub.s32 %v169, 12
  %v182 = vsub.s32 %v170, 12
  %v183 = vsub.s32 %v171, 12
  %v184 = vsub.s32 %v172, 12
  %v185 = vsub.s32 %v173, 12
  %v186 = vsel %vm174, %v180, %v168
  %v187 = vsel %vm175, %v181, %v169
  %v188 = vsel %vm176, %v182, %v170
  %v189 = vsel %vm177, %v183, %v171
  %v190 = vsel %vm178, %v184, %v172
  %v191 = vsel %vm179, %v185, %v173
  %vm192 = vcmp.ge.s32.totalorder %v186, 6
  %vm193 = vcmp.ge.s32.totalorder %v187, 6
  %vm194 = vcmp.ge.s32.totalorder %v188, 6
  %vm195 = vcmp.ge.s32.totalorder %v189, 6
  %vm196 = vcmp.ge.s32.totalorder %v190, 6
  %vm197 = vcmp.ge.s32.totalorder %v191, 6
  %v198 = vsub.s32 %v186, 6
  %v199 = vsub.s32 %v187, 6
  %v200 = vsub.s32 %v188, 6
  %v201 = vsub.s32 %v189, 6
  %v202 = vsub.s32 %v190, 6
  %v203 = vsub.s32 %v191, 6
  %v204 = vsel %vm192, %v198, %v186
  %v205 = vsel %vm193, %v199, %v187
  %v206 = vsel %vm194, %v200, %v188
  %v207 = vsel %vm195, %v201, %v189
  %v208 = vsel %vm196, %v202, %v190
  %v209 = vsel %vm197, %v203, %v191
  %v210 = vlaneseq
  %v211 = vand.u32 %v210, 127
  %vm212 = vcmp.ge.s32.totalorder %v211, 24
  %v213 = vsub.s32 %v211, 24
  %v214 = vsel %vm212, %v213, %v211
  %vm215 = vcmp.ge.s32.totalorder %v214, 12
  %v216 = vsub.s32 %v214, 12
  %v217 = vsel %vm215, %v216, %v214
  %vm218 = vcmp.ge.s32.totalorder %v217, 6
  %v219 = vsub.s32 %v217, 6
  %v220 = vsel %vm218, %v219, %v217
  %vm221 = vcmp.eq.s32.totalorder %v204, %v220
  %vm222 = vcmp.eq.s32.totalorder %v205, %v220
  %vm223 = vcmp.eq.s32.totalorder %v206, %v220
  %vm224 = vcmp.eq.s32.totalorder %v207, %v220
  %vm225 = vcmp.eq.s32.totalorder %v208, %v220
  %vm226 = vcmp.eq.s32.totalorder %v209, %v220
  %v227 = vsel %vm221, 0.0, -1e+30
  %v228 = vsel %vm222, 0.0, -1e+30
  %v229 = vsel %vm223, 0.0, -1e+30
  %v230 = vsel %vm224, 0.0, -1e+30
  %v231 = vsel %vm225, 0.0, -1e+30
  %v232 = vsel %vm226, 0.0, -1e+30
  %v233 = vpack.c.bf16 %v131, %v128
  %v234 = vpack.c.bf16 %v139, %v136
  %v235 = vpack.c.bf16 %v147, %v144
  %v236 = vld [vmem:[%s1] sm:$0xf]
  %v237 = vld [vmem:[%s1 + $0x4] sm:$0xf]
  %v238 = vld [vmem:[%s1 + $0x8] sm:$0xf]
  %v239 = vld [vmem:[%s1 + $0xc] sm:$0xf]
  %v244 = vunpack.c.l.b16 %v236
  %v245 = vunpack.c.l.b16 %v237
  %v246 = vunpack.c.l.b16 %v238
  %v247 = vunpack.c.l.b16 %v239
  %v248 = vpack.c.b16 %v245, %v244
  %v249 = vpack.c.b16 %v247, %v246
  %vm252 = vcmask 261120
  %v254 = vsel %vm252, %v233, 0
  %v257 = vsel %vm252, %v234, 0
  %v260 = vsel %vm252, %v235, 0
  %262 = vmatprep.subr.bf16.mxu0 0
  %263 = vmatpush1.bf16.msra.mxu0 %v248
  %264 = vmatprep.subr.bf16.mxu0 0
  %265 = vmatpush1.bf16.msra.mxu0 %v249
  %266 = vmatprep.subr.bf16.mxu0 0
  %267 = vmatpush1.bf16.msra.mxu0 0
  %268 = vmatprep.subr.bf16.mxu0 0
  %269 = vmatpush1.bf16.msra.mxu0 0
  %270 = vmatprep.subr.bf16.mxu0 0
  %271 = vmatpush1.bf16.msra.mxu0 0
  %272 = vmatprep.subr.bf16.mxu0 0
  %273 = vmatpush1.bf16.msra.mxu0 0
  %274 = vmatprep.subr.bf16.mxu0 0
  %275 = vmatpush1.bf16.msra.mxu0 0
  %276 = vmatprep.subr.bf16.mxu0 0
  %277 = vmatpush1.bf16.msra.mxu0 0
  %278 = vmatprep.subr.bf16.mxu0 0
  %279 = vmatpush1.bf16.msra.mxu0 0
  %280 = vmatprep.subr.bf16.mxu0 0
  %281 = vmatpush1.bf16.msra.mxu0 0
  %282 = vmatprep.subr.bf16.mxu0 0
  %283 = vmatpush1.bf16.msra.mxu0 0
  %284 = vmatprep.subr.bf16.mxu0 0
  %285 = vmatpush1.bf16.msra.mxu0 0
  %286 = vmatprep.subr.bf16.mxu0 0
  %287 = vmatpush1.bf16.msra.mxu0 0
  %288 = vmatprep.subr.bf16.mxu0 0
  %289 = vmatpush1.bf16.msra.mxu0 0
  %290 = vmatprep.subr.bf16.mxu0 0
  %291 = vmatpush1.bf16.msra.mxu0 0
  %292 = vmatprep.subr.bf16.mxu0 0
  %293 = vmatpush1.bf16.msra.mxu0 0
  %294 = vmatprep.mubr.bf16.mxu0 0
  %295 = vmatmul.mubr.bf16.gmra.mrb[0].mxu0 %v254
  %v296 = vpop.f32.mrb[0].mxu0
  %v297 = vadd.f32 0.0, %v296
  %v298 = vpop.f32.mrb[0].mxu0
  %v299 = vpop.f32.mrb[0].mxu0
  %v300 = vadd.f32 0.0, %v299
  %v301 = vpop.f32.mrb[0].mxu0
  %302 = vmatprep.mubr.bf16.mxu0 0
  %303 = vmatmul.mubr.bf16.gmra.mrb[0].mxu0 %v257
  %v304 = vpop.f32.mrb[0].mxu0
  %v305 = vadd.f32 0.0, %v304
  %v306 = vpop.f32.mrb[0].mxu0
  %v307 = vpop.f32.mrb[0].mxu0
  %v308 = vadd.f32 0.0, %v307
  %v309 = vpop.f32.mrb[0].mxu0
  %310 = vmatprep.mubr.bf16.mxu0 0
  %311 = vmatmul.mubr.bf16.gmra.mrb[0].mxu0 %v260
  %v312 = vpop.f32.mrb[0].mxu0
  %v313 = vadd.f32 0.0, %v312
  %v314 = vpop.f32.mrb[0].mxu0
  %v315 = vpop.f32.mrb[0].mxu0
  %v316 = vadd.f32 0.0, %v315
  %v317 = vpop.f32.mrb[0].mxu0
  %318 = vdwg.mxu0
  %v319 = vpack.c.bf16 %v300, %v297
  %v320 = vpack.c.bf16 %v308, %v305
  %v321 = vpack.c.bf16 %v316, %v313
  %v323 = vsel %vm252, %v319, 0
  %v326 = vsel %vm252, %v320, 0
  %v329 = vsel %vm252, %v321, 0
  %331 = vmatprep.subr.bf16.mxu0 0
  %332 = vmatpush1.bf16.xpose.msra.mxu0 %v254
  %333 = vmatprep.subr.bf16.mxu0 0
  %334 = vmatpush1.bf16.xpose.msra.mxu0 %v257
  %335 = vmatprep.subr.bf16.mxu0 0
  %336 = vmatpush1.bf16.xpose.msra.mxu0 %v260
  %337 = vmatprep.subr.bf16.mxu0 0
  %338 = vmatpush1.bf16.xpose.msra.mxu0 0
  %339 = vmatprep.subr.bf16.mxu0 0
  %340 = vmatpush1.bf16.xpose.msra.mxu0 0
  %341 = vmatprep.subr.bf16.mxu0 0
  %342 = vmatpush1.bf16.xpose.msra.mxu0 0
  %343 = vmatprep.subr.bf16.mxu0 0
  %344 = vmatpush1.bf16.xpose.msra.mxu0 0
  %345 = vmatprep.subr.bf16.mxu0 0
  %346 = vmatpush1.bf16.xpose.msra.mxu0 0
  %347 = vmatprep.subr.bf16.mxu0 0
  %348 = vmatpush1.bf16.xpose.msra.mxu0 0
  %349 = vmatprep.subr.bf16.mxu0 0
  %350 = vmatpush1.bf16.xpose.msra.mxu0 0
  %351 = vmatprep.subr.bf16.mxu0 0
  %352 = vmatpush1.bf16.xpose.msra.mxu0 0
  %353 = vmatprep.subr.bf16.mxu0 0
  %354 = vmatpush1.bf16.xpose.msra.mxu0 0
  %355 = vmatprep.subr.bf16.mxu0 0
  %356 = vmatpush1.bf16.xpose.msra.mxu0 0
  %357 = vmatprep.subr.bf16.mxu0 0
  %358 = vmatpush1.bf16.xpose.msra.mxu0 0
  %359 = vmatprep.subr.bf16.mxu0 0
  %360 = vmatpush1.bf16.xpose.msra.mxu0 0
  %361 = vmatprep.subr.bf16.mxu0 0
  %362 = vmatpush1.bf16.xpose.msra.mxu0 0
  %363 = vmatprep.mubr.bf16.mxu0 0
  %364 = vmatmul.mubr.bf16.gmra.mrb[0].mxu0 %v323
  %v365 = vpop.f32.mrb[0].mxu0
  %v366 = vadd.f32 %v227, %v365
  %v367 = vpop.f32.mrb[0].mxu0
  %v368 = vpop.f32.mrb[0].mxu0
  %v369 = vadd.f32 %v228, %v368
  %v370 = vpop.f32.mrb[0].mxu0
  %371 = vmatprep.mubr.bf16.mxu0 0
  %372 = vmatmul.mubr.bf16.gmra.mrb[0].mxu0 %v326
  %v373 = vpop.f32.mrb[0].mxu0
  %v374 = vadd.f32 %v229, %v373
  %v375 = vpop.f32.mrb[0].mxu0
  %v376 = vpop.f32.mrb[0].mxu0
  %v377 = vadd.f32 %v230, %v376
  %v378 = vpop.f32.mrb[0].mxu0
  %379 = vmatprep.mubr.bf16.mxu0 0
  %380 = vmatmul.mubr.bf16.gmra.mrb[0].mxu0 %v329
  %v381 = vpop.f32.mrb[0].mxu0
  %v382 = vadd.f32 %v231, %v381
  %v383 = vpop.f32.mrb[0].mxu0
  %v384 = vpop.f32.mrb[0].mxu0
  %v385 = vadd.f32 %v232, %v384
  %v386 = vpop.f32.mrb[0].mxu0
  %387 = vdwg.mxu0
  %vm388 = vcmask 392192
  %v389 = vsel %vm388, %v366, -inf
  %390 = vmax.xlane.f32.xlu0 %v389
  %v391 = vpop.xlane.xlu0 %390
  %v392 = vsel %vm388, %v369, -inf
  %393 = vmax.xlane.f32.xlu0 %v392
  %v394 = vpop.xlane.xlu0 %393
  %v395 = vsel %vm388, %v374, -inf
  %396 = vmax.xlane.f32.xlu0 %v395
  %v397 = vpop.xlane.xlu0 %396
  %v398 = vsel %vm388, %v377, -inf
  %399 = vmax.xlane.f32.xlu0 %v398
  %v400 = vpop.xlane.xlu0 %399
  %v401 = vsel %vm388, %v382, -inf
  %402 = vmax.xlane.f32.xlu0 %v401
  %v403 = vpop.xlane.xlu0 %402
  %v404 = vsel %vm388, %v385, -inf
  %405 = vmax.xlane.f32.xlu0 %v404
  %v406 = vpop.xlane.xlu0 %405
  %v407 = vsub.f32 %v366, %v391
  %v408 = vsub.f32 %v369, %v394
  %v409 = vsub.f32 %v374, %v397
  %v410 = vsub.f32 %v377, %v400
  %v411 = vsub.f32 %v382, %v403
  %v412 = vsub.f32 %v385, %v406
  %v413 = vmul.f32 %v407, 1.442695
  %v414 = vpow.pop %v413
  %v415 = vmul.f32 %v408, 1.442695
  %v416 = vpow.pop %v415
  %v417 = vmul.f32 %v409, 1.442695
  %v418 = vpow.pop %v417
  %v419 = vmul.f32 %v410, 1.442695
  %v420 = vpow.pop %v419
  %v421 = vmul.f32 %v411, 1.442695
  %v422 = vpow.pop %v421
  %v423 = vmul.f32 %v412, 1.442695
  %v424 = vpow.pop %v423
  %v425 = vsel %vm388, %v414, 0.0
  %426 = vadd.xlane.f32.xlu0 %v425
  %v427 = vpop.xlane.xlu0 %426
  %v428 = vsel %vm388, %v416, 0.0
  %429 = vadd.xlane.f32.xlu0 %v428
  %v430 = vpop.xlane.xlu0 %429
  %v431 = vsel %vm388, %v418, 0.0
  %432 = vadd.xlane.f32.xlu0 %v431
  %v433 = vpop.xlane.xlu0 %432
  %v434 = vsel %vm388, %v420, 0.0
  %435 = vadd.xlane.f32.xlu0 %v434
  %v436 = vpop.xlane.xlu0 %435
  %v437 = vsel %vm388, %v422, 0.0
  %438 = vadd.xlane.f32.xlu0 %v437
  %v439 = vpop.xlane.xlu0 %438
  %v440 = vsel %vm388, %v424, 0.0
  %441 = vadd.xlane.f32.xlu0 %v440
  %v442 = vpop.xlane.xlu0 %441
  %v443 = vrcp.pop %v427
  %v444 = vrcp.pop %v430
  %v445 = vrcp.pop %v433
  %v446 = vrcp.pop %v436
  %v447 = vrcp.pop %v439
  %v448 = vrcp.pop %v442
  %v449 = vmul.f32 %v414, %v443
  %v450 = vmul.f32 %v416, %v444
  %v451 = vmul.f32 %v418, %v445
  %v452 = vmul.f32 %v420, %v446
  %v453 = vmul.f32 %v422, %v447
  %v454 = vmul.f32 %v424, %v448
  %v455 = vpack.c.bf16 %v450, %v449
  %v456 = vpack.c.bf16 %v452, %v451
  %v457 = vpack.c.bf16 %v454, %v453
  %461 = vrot.lane.b32.xlu0 %v319, 96
  %v462 = vpop.permute.xlu0 %461
  %463 = vrot.lane.b32.xlu0 %v320, 96
  %v464 = vpop.permute.xlu0 %463
  %465 = vrot.lane.b32.xlu0 %v321, 96
  %v466 = vpop.permute.xlu0 %465
  %v471 = vsel %vm388, %v455, 0
  %v474 = vsel %vm388, %v456, 0
  %v477 = vsel %vm388, %v457, 0
  %479 = vmatprep.subr.bf16.mxu0 0
  %480 = vmatpush1.bf16.msra.mxu0 %v462
  %481 = vmatprep.subr.bf16.mxu0 0
  %482 = vmatpush1.bf16.msra.mxu0 %v464
  %483 = vmatprep.subr.bf16.mxu0 0
  %484 = vmatpush1.bf16.msra.mxu0 %v466
  %485 = vmatprep.subr.bf16.mxu0 0
  %486 = vmatpush1.bf16.msra.mxu0 0
  %487 = vmatprep.subr.bf16.mxu0 0
  %488 = vmatpush1.bf16.msra.mxu0 0
  %489 = vmatprep.subr.bf16.mxu0 0
  %490 = vmatpush1.bf16.msra.mxu0 0
  %491 = vmatprep.subr.bf16.mxu0 0
  %492 = vmatpush1.bf16.msra.mxu0 0
  %493 = vmatprep.subr.bf16.mxu0 0
  %494 = vmatpush1.bf16.msra.mxu0 0
  %495 = vmatprep.subr.bf16.mxu0 0
  %496 = vmatpush1.bf16.msra.mxu0 0
  %497 = vmatprep.subr.bf16.mxu0 0
  %498 = vmatpush1.bf16.msra.mxu0 0
  %499 = vmatprep.subr.bf16.mxu0 0
  %500 = vmatpush1.bf16.msra.mxu0 0
  %501 = vmatprep.subr.bf16.mxu0 0
  %502 = vmatpush1.bf16.msra.mxu0 0
  %503 = vmatprep.subr.bf16.mxu0 0
  %504 = vmatpush1.bf16.msra.mxu0 0
  %505 = vmatprep.subr.bf16.mxu0 0
  %506 = vmatpush1.bf16.msra.mxu0 0
  %507 = vmatprep.subr.bf16.mxu0 0
  %508 = vmatpush1.bf16.msra.mxu0 0
  %509 = vmatprep.subr.bf16.mxu0 0
  %510 = vmatpush1.bf16.msra.mxu0 0
  %511 = vmatprep.mubr.bf16.mxu0 0
  %512 = vmatmul.mubr.bf16.gmra.mrb[0].mxu0 %v471
  %v513 = vpop.f32.mrb[0].mxu0
  %v514 = vadd.f32 0.0, %v513
  %v515 = vpop.f32.mrb[0].mxu0
  %v516 = vpop.f32.mrb[0].mxu0
  %v517 = vadd.f32 0.0, %v516
  %v518 = vpop.f32.mrb[0].mxu0
  %519 = vmatprep.mubr.bf16.mxu0 0
  %520 = vmatmul.mubr.bf16.gmra.mrb[0].mxu0 %v474
  %v521 = vpop.f32.mrb[0].mxu0
  %v522 = vadd.f32 0.0, %v521
  %v523 = vpop.f32.mrb[0].mxu0
  %v524 = vpop.f32.mrb[0].mxu0
  %v525 = vadd.f32 0.0, %v524
  %v526 = vpop.f32.mrb[0].mxu0
  %527 = vmatprep.mubr.bf16.mxu0 0
  %528 = vmatmul.mubr.bf16.gmra.mrb[0].mxu0 %v477
  %v529 = vpop.f32.mrb[0].mxu0
  %v530 = vadd.f32 0.0, %v529
  %v531 = vpop.f32.mrb[0].mxu0
  %v532 = vpop.f32.mrb[0].mxu0
  %v533 = vadd.f32 0.0, %v532
  %v534 = vpop.f32.mrb[0].mxu0
  %535 = vdwg.mxu0
  %536 = vrot.lane.b32.xlu0 %v319, 64
  %v537 = vpop.permute.xlu0 %536
  %538 = vrot.lane.b32.xlu0 %v320, 64
  %v539 = vpop.permute.xlu0 %538
  %540 = vrot.lane.b32.xlu0 %v321, 64
  %v541 = vpop.permute.xlu0 %540
  %v543 = vsel %vm252, %v537, 0
  %v546 = vsel %vm252, %v539, 0
  %v549 = vsel %vm252, %v541, 0
  %551 = vmatprep.subr.bf16.mxu0 0
  %552 = vmatpush1.bf16.xpose.msra.mxu0 %v254
  %553 = vmatprep.subr.bf16.mxu0 0
  %554 = vmatpush1.bf16.xpose.msra.mxu0 %v257
  %555 = vmatprep.subr.bf16.mxu0 0
  %556 = vmatpush1.bf16.xpose.msra.mxu0 %v260
  %557 = vmatprep.subr.bf16.mxu0 0
  %558 = vmatpush1.bf16.xpose.msra.mxu0 0
  %559 = vmatprep.subr.bf16.mxu0 0
  %560 = vmatpush1.bf16.xpose.msra.mxu0 0
  %561 = vmatprep.subr.bf16.mxu0 0
  %562 = vmatpush1.bf16.xpose.msra.mxu0 0
  %563 = vmatprep.subr.bf16.mxu0 0
  %564 = vmatpush1.bf16.xpose.msra.mxu0 0
  %565 = vmatprep.subr.bf16.mxu0 0
  %566 = vmatpush1.bf16.xpose.msra.mxu0 0
  %567 = vmatprep.subr.bf16.mxu0 0
  %568 = vmatpush1.bf16.xpose.msra.mxu0 0
  %569 = vmatprep.subr.bf16.mxu0 0
  %570 = vmatpush1.bf16.xpose.msra.mxu0 0
  %571 = vmatprep.subr.bf16.mxu0 0
  %572 = vmatpush1.bf16.xpose.msra.mxu0 0
  %573 = vmatprep.subr.bf16.mxu0 0
  %574 = vmatpush1.bf16.xpose.msra.mxu0 0
  %575 = vmatprep.subr.bf16.mxu0 0
  %576 = vmatpush1.bf16.xpose.msra.mxu0 0
  %577 = vmatprep.subr.bf16.mxu0 0
  %578 = vmatpush1.bf16.xpose.msra.mxu0 0
  %579 = vmatprep.subr.bf16.mxu0 0
  %580 = vmatpush1.bf16.xpose.msra.mxu0 0
  %581 = vmatprep.subr.bf16.mxu0 0
  %582 = vmatpush1.bf16.xpose.msra.mxu0 0
  %583 = vmatprep.mubr.bf16.mxu0 0
  %584 = vmatmul.mubr.bf16.gmra.mrb[0].mxu0 %v543
  %v585 = vpop.f32.mrb[0].mxu0
  %v586 = vadd.f32 %v227, %v585
  %v587 = vpop.f32.mrb[0].mxu0
  %v588 = vpop.f32.mrb[0].mxu0
  %v589 = vadd.f32 %v228, %v588
  %v590 = vpop.f32.mrb[0].mxu0
  %591 = vmatprep.mubr.bf16.mxu0 0
  %592 = vmatmul.mubr.bf16.gmra.mrb[0].mxu0 %v546
  %v593 = vpop.f32.mrb[0].mxu0
  %v594 = vadd.f32 %v229, %v593
  %v595 = vpop.f32.mrb[0].mxu0
  %v596 = vpop.f32.mrb[0].mxu0
  %v597 = vadd.f32 %v230, %v596
  %v598 = vpop.f32.mrb[0].mxu0
  %599 = vmatprep.mubr.bf16.mxu0 0
  %600 = vmatmul.mubr.bf16.gmra.mrb[0].mxu0 %v549
  %v601 = vpop.f32.mrb[0].mxu0
  %v602 = vadd.f32 %v231, %v601
  %v603 = vpop.f32.mrb[0].mxu0
  %v604 = vpop.f32.mrb[0].mxu0
  %v605 = vadd.f32 %v232, %v604
  %v606 = vpop.f32.mrb[0].mxu0
  %607 = vdwg.mxu0
  %v608 = vsel %vm388, %v586, -inf
  %609 = vmax.xlane.f32.xlu0 %v608
  %v610 = vpop.xlane.xlu0 %609
  %v611 = vsel %vm388, %v589, -inf
  %612 = vmax.xlane.f32.xlu0 %v611
  %v613 = vpop.xlane.xlu0 %612
  %v614 = vsel %vm388, %v594, -inf
  %615 = vmax.xlane.f32.xlu0 %v614
  %v616 = vpop.xlane.xlu0 %615
  %v617 = vsel %vm388, %v597, -inf
  %618 = vmax.xlane.f32.xlu0 %v617
  %v619 = vpop.xlane.xlu0 %618
  %v620 = vsel %vm388, %v602, -inf
  %621 = vmax.xlane.f32.xlu0 %v620
  %v622 = vpop.xlane.xlu0 %621
  %v623 = vsel %vm388, %v605, -inf
  %624 = vmax.xlane.f32.xlu0 %v623
  %v625 = vpop.xlane.xlu0 %624
  %v626 = vsub.f32 %v586, %v610
  %v627 = vsub.f32 %v589, %v613
  %v628 = vsub.f32 %v594, %v616
  %v629 = vsub.f32 %v597, %v619
  %v630 = vsub.f32 %v602, %v622
  %v631 = vsub.f32 %v605, %v625
  %v632 = vmul.f32 %v626, 1.442695
  %v633 = vpow.pop %v632
  %v634 = vmul.f32 %v627, 1.442695
  %v635 = vpow.pop %v634
  %v636 = vmul.f32 %v628, 1.442695
  %v637 = vpow.pop %v636
  %v638 = vmul.f32 %v629, 1.442695
  %v639 = vpow.pop %v638
  %v640 = vmul.f32 %v630, 1.442695
  %v641 = vpow.pop %v640
  %v642 = vmul.f32 %v631, 1.442695
  %v643 = vpow.pop %v642
  %v644 = vsel %vm388, %v633, 0.0
  %645 = vadd.xlane.f32.xlu0 %v644
  %v646 = vpop.xlane.xlu0 %645
  %v647 = vsel %vm388, %v635, 0.0
  %648 = vadd.xlane.f32.xlu0 %v647
  %v649 = vpop.xlane.xlu0 %648
  %v650 = vsel %vm388, %v637, 0.0
  %651 = vadd.xlane.f32.xlu0 %v650
  %v652 = vpop.xlane.xlu0 %651
  %v653 = vsel %vm388, %v639, 0.0
  %654 = vadd.xlane.f32.xlu0 %v653
  %v655 = vpop.xlane.xlu0 %654
  %v656 = vsel %vm388, %v641, 0.0
  %657 = vadd.xlane.f32.xlu0 %v656
  %v658 = vpop.xlane.xlu0 %657
  %v659 = vsel %vm388, %v643, 0.0
  %660 = vadd.xlane.f32.xlu0 %v659
  %v661 = vpop.xlane.xlu0 %660
  %v662 = vrcp.pop %v646
  %v663 = vrcp.pop %v649
  %v664 = vrcp.pop %v652
  %v665 = vrcp.pop %v655
  %v666 = vrcp.pop %v658
  %v667 = vrcp.pop %v661
  %v668 = vmul.f32 %v633, %v662
  %v669 = vmul.f32 %v635, %v663
  %v670 = vmul.f32 %v637, %v664
  %v671 = vmul.f32 %v639, %v665
  %v672 = vmul.f32 %v641, %v666
  %v673 = vmul.f32 %v643, %v667
  %v674 = vpack.c.bf16 %v669, %v668
  %v675 = vpack.c.bf16 %v671, %v670
  %v676 = vpack.c.bf16 %v673, %v672
  %677 = vrot.lane.b32.xlu0 %v319, 32
  %v678 = vpop.permute.xlu0 %677
  %679 = vrot.lane.b32.xlu0 %v320, 32
  %v680 = vpop.permute.xlu0 %679
  %681 = vrot.lane.b32.xlu0 %v321, 32
  %v682 = vpop.permute.xlu0 %681
  %v687 = vsel %vm388, %v674, 0
  %v690 = vsel %vm388, %v675, 0
  %v693 = vsel %vm388, %v676, 0
  %695 = vmatprep.subr.bf16.mxu0 0
  %696 = vmatpush1.bf16.msra.mxu0 %v678
  %697 = vmatprep.subr.bf16.mxu0 0
  %698 = vmatpush1.bf16.msra.mxu0 %v680
  %699 = vmatprep.subr.bf16.mxu0 0
  %700 = vmatpush1.bf16.msra.mxu0 %v682
  %701 = vmatprep.subr.bf16.mxu0 0
  %702 = vmatpush1.bf16.msra.mxu0 0
  %703 = vmatprep.subr.bf16.mxu0 0
  %704 = vmatpush1.bf16.msra.mxu0 0
  %705 = vmatprep.subr.bf16.mxu0 0
  %706 = vmatpush1.bf16.msra.mxu0 0
  %707 = vmatprep.subr.bf16.mxu0 0
  %708 = vmatpush1.bf16.msra.mxu0 0
  %709 = vmatprep.subr.bf16.mxu0 0
  %710 = vmatpush1.bf16.msra.mxu0 0
  %711 = vmatprep.subr.bf16.mxu0 0
  %712 = vmatpush1.bf16.msra.mxu0 0
  %713 = vmatprep.subr.bf16.mxu0 0
  %714 = vmatpush1.bf16.msra.mxu0 0
  %715 = vmatprep.subr.bf16.mxu0 0
  %716 = vmatpush1.bf16.msra.mxu0 0
  %717 = vmatprep.subr.bf16.mxu0 0
  %718 = vmatpush1.bf16.msra.mxu0 0
  %719 = vmatprep.subr.bf16.mxu0 0
  %720 = vmatpush1.bf16.msra.mxu0 0
  %721 = vmatprep.subr.bf16.mxu0 0
  %722 = vmatpush1.bf16.msra.mxu0 0
  %723 = vmatprep.subr.bf16.mxu0 0
  %724 = vmatpush1.bf16.msra.mxu0 0
  %725 = vmatprep.subr.bf16.mxu0 0
  %726 = vmatpush1.bf16.msra.mxu0 0
  %727 = vmatprep.mubr.bf16.mxu0 0
  %728 = vmatmul.mubr.bf16.gmra.mrb[0].mxu0 %v687
  %v729 = vpop.f32.mrb[0].mxu0
  %v730 = vadd.f32 0.0, %v729
  %v731 = vpop.f32.mrb[0].mxu0
  %v732 = vpop.f32.mrb[0].mxu0
  %v733 = vadd.f32 0.0, %v732
  %v734 = vpop.f32.mrb[0].mxu0
  %735 = vmatprep.mubr.bf16.mxu0 0
  %736 = vmatmul.mubr.bf16.gmra.mrb[0].mxu0 %v690
  %v737 = vpop.f32.mrb[0].mxu0
  %v738 = vadd.f32 0.0, %v737
  %v739 = vpop.f32.mrb[0].mxu0
  %v740 = vpop.f32.mrb[0].mxu0
  %v741 = vadd.f32 0.0, %v740
  %v742 = vpop.f32.mrb[0].mxu0
  %743 = vmatprep.mubr.bf16.mxu0 0
  %744 = vmatmul.mubr.bf16.gmra.mrb[0].mxu0 %v693
  %v745 = vpop.f32.mrb[0].mxu0
  %v746 = vadd.f32 0.0, %v745
  %v747 = vpop.f32.mrb[0].mxu0
  %v748 = vpop.f32.mrb[0].mxu0
  %v749 = vadd.f32 0.0, %v748
  %v750 = vpop.f32.mrb[0].mxu0
  %751 = vdwg.mxu0
  %758 = vrot.lane.b32.xlu0 %v730, 32
  %v759 = vpop.permute.xlu0 %758
  %760 = vrot.lane.b32.xlu0 %v733, 32
  %v761 = vpop.permute.xlu0 %760
  %762 = vrot.lane.b32.xlu0 %v738, 32
  %v763 = vpop.permute.xlu0 %762
  %764 = vrot.lane.b32.xlu0 %v741, 32
  %v765 = vpop.permute.xlu0 %764
  %766 = vrot.lane.b32.xlu0 %v746, 32
  %v767 = vpop.permute.xlu0 %766
  %768 = vrot.lane.b32.xlu0 %v749, 32
  %v769 = vpop.permute.xlu0 %768
  %v776 = vsel %vm252, %v514, %v759
  %v777 = vsel %vm252, %v517, %v761
  %v778 = vsel %vm252, %v522, %v763
  %v779 = vsel %vm252, %v525, %v765
  %v780 = vsel %vm252, %v530, %v767
  %v781 = vsel %vm252, %v533, %v769
  %v782 = vld [vmem:[%s1 + $0x48] sm:$0xf]
  %v783 = vld [vmem:[%s1 + $0x4c] sm:$0xf]
  %v784 = vld [vmem:[%s1 + $0x50] sm:$0xf]
  %v785 = vld [vmem:[%s1 + $0x54] sm:$0xf]
  %v786 = vld [vmem:[%s1 + $0x58] sm:$0xf]
  %v787 = vld [vmem:[%s1 + $0x5c] sm:$0xf]
  %v788 = vld [vmem:[%s1 + $0x60] sm:$0xf]
  %v789 = vld [vmem:[%s1 + $0x64] sm:$0xf]
  %v790 = vpack.c.bf16 %v777, %v776
  %v791 = vpack.c.bf16 %v779, %v778
  %v792 = vpack.c.bf16 %v781, %v780
  %v793 = vld [vmem:[%s1 + $0x40] sm:$0x1]
  %v794 = vunpack.c.l.bf16 %v793
  %v795 = vlaneseq
  %v796 = vshrl.u32 %v795, 7
  %v797 = vsub.s32 0, %v796
  %v798 = vrot.slane %v794, %v797
  %v807 = vunpack.c.l.b16 %v782
  %v808 = vunpack.c.l.b16 %v783
  %v809 = vunpack.c.l.b16 %v784
  %v810 = vunpack.c.l.b16 %v785
  %v811 = vunpack.c.l.b16 %v786
  %v812 = vunpack.c.l.b16 %v787
  %v813 = vunpack.c.l.b16 %v788
  %v814 = vunpack.c.l.b16 %v789
  %v815 = vpack.c.b16 %v808, %v807
  %v816 = vpack.c.b16 %v810, %v809
  %v817 = vpack.c.b16 %v812, %v811
  %v818 = vpack.c.b16 %v814, %v813
  %819 = vrot.lane.b32.xlu0 %v815, 32
  %v820 = vpop.permute.xlu0 %819
  %821 = vrot.lane.b32.xlu0 %v816, 32
  %v822 = vpop.permute.xlu0 %821
  %823 = vrot.lane.b32.xlu0 %v817, 32
  %v824 = vpop.permute.xlu0 %823
  %825 = vrot.lane.b32.xlu0 %v818, 32
  %v826 = vpop.permute.xlu0 %825
  %vm831 = vcmask 523264
  %v833 = vsel %vm831, %v790, 0
  %v836 = vsel %vm831, %v791, 0
  %v839 = vsel %vm831, %v792, 0
  %841 = vmatprep.subr.bf16.mxu0 0
  %842 = vmatpush1.bf16.msra.mxu0 %v820
  %843 = vmatprep.subr.bf16.mxu0 0
  %844 = vmatpush1.bf16.msra.mxu0 %v822
  %845 = vmatprep.subr.bf16.mxu0 0
  %846 = vmatpush1.bf16.msra.mxu0 %v824
  %847 = vmatprep.subr.bf16.mxu0 0
  %848 = vmatpush1.bf16.msra.mxu0 %v826
  %849 = vmatprep.subr.bf16.mxu0 0
  %850 = vmatpush1.bf16.msra.mxu0 0
  %851 = vmatprep.subr.bf16.mxu0 0
  %852 = vmatpush1.bf16.msra.mxu0 0
  %853 = vmatprep.subr.bf16.mxu0 0
  %854 = vmatpush1.bf16.msra.mxu0 0
  %855 = vmatprep.subr.bf16.mxu0 0
  %856 = vmatpush1.bf16.msra.mxu0 0
  %857 = vmatprep.subr.bf16.mxu0 0
  %858 = vmatpush1.bf16.msra.mxu0 0
  %859 = vmatprep.subr.bf16.mxu0 0
  %860 = vmatpush1.bf16.msra.mxu0 0
  %861 = vmatprep.subr.bf16.mxu0 0
  %862 = vmatpush1.bf16.msra.mxu0 0
  %863 = vmatprep.subr.bf16.mxu0 0
  %864 = vmatpush1.bf16.msra.mxu0 0
  %865 = vmatprep.subr.bf16.mxu0 0
  %866 = vmatpush1.bf16.msra.mxu0 0
  %867 = vmatprep.subr.bf16.mxu0 0
  %868 = vmatpush1.bf16.msra.mxu0 0
  %869 = vmatprep.subr.bf16.mxu0 0
  %870 = vmatpush1.bf16.msra.mxu0 0
  %871 = vmatprep.subr.bf16.mxu0 0
  %872 = vmatpush1.bf16.msra.mxu0 0
  %873 = vmatprep.mubr.bf16.mxu0 0
  %874 = vmatmul.mubr.bf16.gmra.mrb[0].mxu0 %v833
  %v875 = vpop.f32.mrb[0].mxu0
  %v876 = vadd.f32 %v798, %v875
  %v877 = vpop.f32.mrb[0].mxu0
  %v878 = vpop.f32.mrb[0].mxu0
  %v879 = vadd.f32 %v798, %v878
  %v880 = vpop.f32.mrb[0].mxu0
  %881 = vmatprep.mubr.bf16.mxu0 0
  %882 = vmatmul.mubr.bf16.gmra.mrb[0].mxu0 %v836
  %v883 = vpop.f32.mrb[0].mxu0
  %v884 = vadd.f32 %v798, %v883
  %v885 = vpop.f32.mrb[0].mxu0
  %v886 = vpop.f32.mrb[0].mxu0
  %v887 = vadd.f32 %v798, %v886
  %v888 = vpop.f32.mrb[0].mxu0
  %889 = vmatprep.mubr.bf16.mxu0 0
  %890 = vmatmul.mubr.bf16.gmra.mrb[0].mxu0 %v839
  %v891 = vpop.f32.mrb[0].mxu0
  %v892 = vadd.f32 %v798, %v891
  %v893 = vpop.f32.mrb[0].mxu0
  %v894 = vpop.f32.mrb[0].mxu0
  %v895 = vadd.f32 %v798, %v894
  %v896 = vpop.f32.mrb[0].mxu0
  %897 = vdwg.mxu0
  %v898 = vadd.f32 %v876, %v128
  %v899 = vadd.f32 %v879, %v131
  %v900 = vadd.f32 %v884, %v136
  %v901 = vadd.f32 %v887, %v139
  %v902 = vadd.f32 %v892, %v144
  %v903 = vadd.f32 %v895, %v147
  %v904 = vld [vmem:[%s1 + $0x40] sm:$0x2]
  %v905 = vunpack.c.l.bf16 %v904
  %v906 = vsel %vm252, %v898, 0.0
  %907 = vadd.xlane.f32.xlu0 %v906
  %v908 = vpop.xlane.xlu0 %907
  %v909 = vsel %vm252, %v899, 0.0
  %910 = vadd.xlane.f32.xlu0 %v909
  %v911 = vpop.xlane.xlu0 %910
  %v912 = vsel %vm252, %v900, 0.0
  %913 = vadd.xlane.f32.xlu0 %v912
  %v914 = vpop.xlane.xlu0 %913
  %v915 = vsel %vm252, %v901, 0.0
  %916 = vadd.xlane.f32.xlu0 %v915
  %v917 = vpop.xlane.xlu0 %916
  %v918 = vsel %vm252, %v902, 0.0
  %919 = vadd.xlane.f32.xlu0 %v918
  %v920 = vpop.xlane.xlu0 %919
  %v921 = vsel %vm252, %v903, 0.0
  %922 = vadd.xlane.f32.xlu0 %v921
  %v923 = vpop.xlane.xlu0 %922
  %v924 = vrcp.pop 32.0
  %v925 = vmul.f32 %v908, %v924
  %v926 = vmul.f32 %v911, %v924
  %v927 = vmul.f32 %v914, %v924
  %v928 = vmul.f32 %v917, %v924
  %v929 = vmul.f32 %v920, %v924
  %v930 = vmul.f32 %v923, %v924
  %v931 = vsub.f32 %v898, %v925
  %v932 = vsub.f32 %v899, %v926
  %v933 = vsub.f32 %v900, %v927
  %v934 = vsub.f32 %v901, %v928
  %v935 = vsub.f32 %v902, %v929
  %v936 = vsub.f32 %v903, %v930
  %v937 = vmul.f32 %v931, %v931
  %v938 = vmul.f32 %v932, %v932
  %v939 = vmul.f32 %v933, %v933
  %v940 = vmul.f32 %v934, %v934
  %v941 = vmul.f32 %v935, %v935
  %v942 = vmul.f32 %v936, %v936
  %v943 = vsel %vm252, %v937, 0.0
  %944 = vadd.xlane.f32.xlu0 %v943
  %v945 = vpop.xlane.xlu0 %944
  %v946 = vsel %vm252, %v938, 0.0
  %947 = vadd.xlane.f32.xlu0 %v946
  %v948 = vpop.xlane.xlu0 %947
  %v949 = vsel %vm252, %v939, 0.0
  %950 = vadd.xlane.f32.xlu0 %v949
  %v951 = vpop.xlane.xlu0 %950
  %v952 = vsel %vm252, %v940, 0.0
  %953 = vadd.xlane.f32.xlu0 %v952
  %v954 = vpop.xlane.xlu0 %953
  %v955 = vsel %vm252, %v941, 0.0
  %956 = vadd.xlane.f32.xlu0 %v955
  %v957 = vpop.xlane.xlu0 %956
  %v958 = vsel %vm252, %v942, 0.0
  %959 = vadd.xlane.f32.xlu0 %v958
  %v960 = vpop.xlane.xlu0 %959
  %v961 = vmul.f32 %v945, %v924
  %v962 = vmul.f32 %v948, %v924
  %v963 = vmul.f32 %v951, %v924
  %v964 = vmul.f32 %v954, %v924
  %v965 = vmul.f32 %v957, %v924
  %v966 = vmul.f32 %v960, %v924
  %v967 = vadd.f32 %v961, 1e-05
  %v968 = vadd.f32 %v962, 1e-05
  %v969 = vadd.f32 %v963, 1e-05
  %v970 = vadd.f32 %v964, 1e-05
  %v971 = vadd.f32 %v965, 1e-05
  %v972 = vadd.f32 %v966, 1e-05
  %v973 = vrsqrt.pop %v967
  %v974 = vrsqrt.pop %v968
  %v975 = vrsqrt.pop %v969
  %v976 = vrsqrt.pop %v970
  %v977 = vrsqrt.pop %v971
  %v978 = vrsqrt.pop %v972
  %v979 = vmul.f32 %v931, %v973
  %v980 = vmul.f32 %v932, %v974
  %v981 = vmul.f32 %v933, %v975
  %v982 = vmul.f32 %v934, %v976
  %v983 = vmul.f32 %v935, %v977
  %v984 = vmul.f32 %v936, %v978
  %v985 = vlaneseq
  %v986 = vshrl.u32 %v985, 7
  %v987 = vsub.s32 1, %v986
  %v988 = vrot.slane %v794, %v987
  %v989 = vmul.f32 %v979, %v988
  %v990 = vmul.f32 %v980, %v988
  %v991 = vmul.f32 %v981, %v988
  %v992 = vmul.f32 %v982, %v988
  %v993 = vmul.f32 %v983, %v988
  %v994 = vmul.f32 %v984, %v988
  %v995 = vlaneseq
  %v996 = vshrl.u32 %v995, 7
  %v997 = vsub.s32 2, %v996
  %v998 = vrot.slane %v905, %v997
  %v999 = vadd.f32 %v989, %v998
  %v1000 = vadd.f32 %v990, %v998
  %v1001 = vadd.f32 %v991, %v998
  %v1002 = vadd.f32 %v992, %v998
  %v1003 = vadd.f32 %v993, %v998
  %v1004 = vadd.f32 %v994, %v998
  %v1005 = vld [vmem:[%s1 + $0x20] sm:$0xf]
  %v1006 = vld [vmem:[%s1 + $0x24] sm:$0xf]
  %v1007 = vld [vmem:[%s1 + $0x28] sm:$0xf]
  %v1008 = vld [vmem:[%s1 + $0x2c] sm:$0xf]
  %v1009 = vpack.c.bf16 %v1000, %v999
  %v1010 = vpack.c.bf16 %v1002, %v1001
  %v1011 = vpack.c.bf16 %v1004, %v1003
  %v1012 = vlaneseq
  %v1013 = vshrl.u32 %v1012, 7
  %v1014 = vsub.s32 3, %v1013
  %v1015 = vrot.slane %v905, %v1014
  %v1020 = vunpack.c.l.b16 %v1005
  %v1021 = vunpack.c.l.b16 %v1006
  %v1022 = vunpack.c.l.b16 %v1007
  %v1023 = vunpack.c.l.b16 %v1008
  %v1024 = vpack.c.b16 %v1021, %v1020
  %v1025 = vpack.c.b16 %v1023, %v1022
  %v1029 = vsel %vm252, %v1009, 0
  %v1032 = vsel %vm252, %v1010, 0
  %v1035 = vsel %vm252, %v1011, 0
  %1037 = vmatprep.subr.bf16.mxu0 0
  %1038 = vmatpush1.bf16.msra.mxu0 %v1024
  %1039 = vmatprep.subr.bf16.mxu0 0
  %1040 = vmatpush1.bf16.msra.mxu0 %v1025
  %1041 = vmatprep.subr.bf16.mxu0 0
  %1042 = vmatpush1.bf16.msra.mxu0 0
  %1043 = vmatprep.subr.bf16.mxu0 0
  %1044 = vmatpush1.bf16.msra.mxu0 0
  %1045 = vmatprep.subr.bf16.mxu0 0
  %1046 = vmatpush1.bf16.msra.mxu0 0
  %1047 = vmatprep.subr.bf16.mxu0 0
  %1048 = vmatpush1.bf16.msra.mxu0 0
  %1049 = vmatprep.subr.bf16.mxu0 0
  %1050 = vmatpush1.bf16.msra.mxu0 0
  %1051 = vmatprep.subr.bf16.mxu0 0
  %1052 = vmatpush1.bf16.msra.mxu0 0
  %1053 = vmatprep.subr.bf16.mxu0 0
  %1054 = vmatpush1.bf16.msra.mxu0 0
  %1055 = vmatprep.subr.bf16.mxu0 0
  %1056 = vmatpush1.bf16.msra.mxu0 0
  %1057 = vmatprep.subr.bf16.mxu0 0
  %1058 = vmatpush1.bf16.msra.mxu0 0
  %1059 = vmatprep.subr.bf16.mxu0 0
  %1060 = vmatpush1.bf16.msra.mxu0 0
  %1061 = vmatprep.subr.bf16.mxu0 0
  %1062 = vmatpush1.bf16.msra.mxu0 0
  %1063 = vmatprep.subr.bf16.mxu0 0
  %1064 = vmatpush1.bf16.msra.mxu0 0
  %1065 = vmatprep.subr.bf16.mxu0 0
  %1066 = vmatpush1.bf16.msra.mxu0 0
  %1067 = vmatprep.subr.bf16.mxu0 0
  %1068 = vmatpush1.bf16.msra.mxu0 0
  %1069 = vmatprep.mubr.bf16.mxu0 0
  %1070 = vmatmul.mubr.bf16.gmra.mrb[0].mxu0 %v1029
  %v1071 = vpop.f32.mrb[0].mxu0
  %v1072 = vadd.f32 %v1015, %v1071
  %v1073 = vpop.f32.mrb[0].mxu0
  %v1074 = vpop.f32.mrb[0].mxu0
  %v1075 = vadd.f32 %v1015, %v1074
  %v1076 = vpop.f32.mrb[0].mxu0
  %1077 = vmatprep.mubr.bf16.mxu0 0
  %1078 = vmatmul.mubr.bf16.gmra.mrb[0].mxu0 %v1032
  %v1079 = vpop.f32.mrb[0].mxu0
  %v1080 = vadd.f32 %v1015, %v1079
  %v1081 = vpop.f32.mrb[0].mxu0
  %v1082 = vpop.f32.mrb[0].mxu0
  %v1083 = vadd.f32 %v1015, %v1082
  %v1084 = vpop.f32.mrb[0].mxu0
  %1085 = vmatprep.mubr.bf16.mxu0 0
  %1086 = vmatmul.mubr.bf16.gmra.mrb[0].mxu0 %v1035
  %v1087 = vpop.f32.mrb[0].mxu0
  %v1088 = vadd.f32 %v1015, %v1087
  %v1089 = vpop.f32.mrb[0].mxu0
  %v1090 = vpop.f32.mrb[0].mxu0
  %v1091 = vadd.f32 %v1015, %v1090
  %v1092 = vpop.f32.mrb[0].mxu0
  %1093 = vdwg.mxu0
  %v1094 = vmax.f32 %v1072, 0.0
  %v1095 = vmax.f32 %v1075, 0.0
  %v1096 = vmax.f32 %v1080, 0.0
  %v1097 = vmax.f32 %v1083, 0.0
  %v1098 = vmax.f32 %v1088, 0.0
  %v1099 = vmax.f32 %v1091, 0.0
  %v1100 = vld [vmem:[%s1 + $0x48] sm:$0xf]
  %v1101 = vld [vmem:[%s1 + $0x4c] sm:$0xf]
  %v1102 = vld [vmem:[%s1 + $0x50] sm:$0xf]
  %v1103 = vld [vmem:[%s1 + $0x54] sm:$0xf]
  %v1104 = vld [vmem:[%s1 + $0x58] sm:$0xf]
  %v1105 = vld [vmem:[%s1 + $0x5c] sm:$0xf]
  %v1106 = vld [vmem:[%s1 + $0x60] sm:$0xf]
  %v1107 = vld [vmem:[%s1 + $0x64] sm:$0xf]
  %v1108 = vld [vmem:[%s1 + $0x68] sm:$0xf]
  %v1109 = vld [vmem:[%s1 + $0x6c] sm:$0xf]
  %v1110 = vld [vmem:[%s1 + $0x70] sm:$0xf]
  %v1111 = vld [vmem:[%s1 + $0x74] sm:$0xf]
  %v1112 = vld [vmem:[%s1 + $0x78] sm:$0xf]
  %v1113 = vld [vmem:[%s1 + $0x7c] sm:$0xf]
  %v1114 = vld [vmem:[%s1 + $0x80] sm:$0xf]
  %v1115 = vld [vmem:[%s1 + $0x84] sm:$0xf]
  %v1116 = vpack.c.bf16 %v1095, %v1094
  %v1117 = vpack.c.bf16 %v1097, %v1096
  %v1118 = vpack.c.bf16 %v1099, %v1098
  %v1119 = vld [vmem:[%s1 + $0x40] sm:$0x4]
  %v1120 = vunpack.c.l.bf16 %v1119
  %v1121 = vlaneseq
  %v1122 = vshrl.u32 %v1121, 7
  %v1123 = vsub.s32 4, %v1122
  %v1124 = vrot.slane %v1120, %v1123
  %v1141 = vunpack.c.l.b16 %v1100
  %v1142 = vunpack.c.l.b16 %v1101
  %v1143 = vunpack.c.l.b16 %v1102
  %v1144 = vunpack.c.l.b16 %v1103
  %v1145 = vunpack.c.l.b16 %v1104
  %v1146 = vunpack.c.l.b16 %v1105
  %v1147 = vunpack.c.l.b16 %v1106
  %v1148 = vunpack.c.l.b16 %v1107
  %v1149 = vunpack.c.l.b16 %v1108
  %v1150 = vunpack.c.l.b16 %v1109
  %v1151 = vunpack.c.l.b16 %v1110
  %v1152 = vunpack.c.l.b16 %v1111
  %v1153 = vunpack.c.l.b16 %v1112
  %v1154 = vunpack.c.l.b16 %v1113
  %v1155 = vunpack.c.l.b16 %v1114
  %v1156 = vunpack.c.l.b16 %v1115
  %v1157 = vpack.c.b16 %v1142, %v1141
  %v1158 = vpack.c.b16 %v1144, %v1143
  %v1159 = vpack.c.b16 %v1146, %v1145
  %v1160 = vpack.c.b16 %v1148, %v1147
  %v1161 = vpack.c.b16 %v1150, %v1149
  %v1162 = vpack.c.b16 %v1152, %v1151
  %v1163 = vpack.c.b16 %v1154, %v1153
  %v1164 = vpack.c.b16 %v1156, %v1155
  %1173 = vmatprep.subr.bf16.mxu0 0
  %1174 = vmatpush1.bf16.msra.mxu0 %v1157
  %1175 = vmatprep.subr.bf16.mxu0 0
  %1176 = vmatpush1.bf16.msra.mxu0 %v1158
  %1177 = vmatprep.subr.bf16.mxu0 0
  %1178 = vmatpush1.bf16.msra.mxu0 %v1159
  %1179 = vmatprep.subr.bf16.mxu0 0
  %1180 = vmatpush1.bf16.msra.mxu0 %v1160
  %1181 = vmatprep.subr.bf16.mxu0 0
  %1182 = vmatpush1.bf16.msra.mxu0 %v1161
  %1183 = vmatprep.subr.bf16.mxu0 0
  %1184 = vmatpush1.bf16.msra.mxu0 %v1162
  %1185 = vmatprep.subr.bf16.mxu0 0
  %1186 = vmatpush1.bf16.msra.mxu0 %v1163
  %1187 = vmatprep.subr.bf16.mxu0 0
  %1188 = vmatpush1.bf16.msra.mxu0 %v1164
  %1189 = vmatprep.subr.bf16.mxu0 0
  %1190 = vmatpush1.bf16.msra.mxu0 0
  %1191 = vmatprep.subr.bf16.mxu0 0
  %1192 = vmatpush1.bf16.msra.mxu0 0
  %1193 = vmatprep.subr.bf16.mxu0 0
  %1194 = vmatpush1.bf16.msra.mxu0 0
  %1195 = vmatprep.subr.bf16.mxu0 0
  %1196 = vmatpush1.bf16.msra.mxu0 0
  %1197 = vmatprep.subr.bf16.mxu0 0
  %1198 = vmatpush1.bf16.msra.mxu0 0
  %1199 = vmatprep.subr.bf16.mxu0 0
  %1200 = vmatpush1.bf16.msra.mxu0 0
  %1201 = vmatprep.subr.bf16.mxu0 0
  %1202 = vmatpush1.bf16.msra.mxu0 0
  %1203 = vmatprep.subr.bf16.mxu0 0
  %1204 = vmatpush1.bf16.msra.mxu0 0
  %1205 = vmatprep.mubr.bf16.mxu0 0
  %1206 = vmatmul.mubr.bf16.gmra.mrb[0].mxu0 %v1116
  %v1207 = vpop.f32.mrb[0].mxu0
  %v1208 = vadd.f32 %v1124, %v1207
  %v1209 = vpop.f32.mrb[0].mxu0
  %v1210 = vpop.f32.mrb[0].mxu0
  %v1211 = vadd.f32 %v1124, %v1210
  %v1212 = vpop.f32.mrb[0].mxu0
  %1213 = vmatprep.mubr.bf16.mxu0 0
  %1214 = vmatmul.mubr.bf16.gmra.mrb[0].mxu0 %v1117
  %v1215 = vpop.f32.mrb[0].mxu0
  %v1216 = vadd.f32 %v1124, %v1215
  %v1217 = vpop.f32.mrb[0].mxu0
  %v1218 = vpop.f32.mrb[0].mxu0
  %v1219 = vadd.f32 %v1124, %v1218
  %v1220 = vpop.f32.mrb[0].mxu0
  %1221 = vmatprep.mubr.bf16.mxu0 0
  %1222 = vmatmul.mubr.bf16.gmra.mrb[0].mxu0 %v1118
  %v1223 = vpop.f32.mrb[0].mxu0
  %v1224 = vadd.f32 %v1124, %v1223
  %v1225 = vpop.f32.mrb[0].mxu0
  %v1226 = vpop.f32.mrb[0].mxu0
  %v1227 = vadd.f32 %v1124, %v1226
  %v1228 = vpop.f32.mrb[0].mxu0
  %1229 = vdwg.mxu0
  %v1230 = vadd.f32 %v1208, %v999
  %v1231 = vadd.f32 %v1211, %v1000
  %v1232 = vadd.f32 %v1216, %v1001
  %v1233 = vadd.f32 %v1219, %v1002
  %v1234 = vadd.f32 %v1224, %v1003
  %v1235 = vadd.f32 %v1227, %v1004
  %v1236 = vld [vmem:[%s1 + $0x40] sm:$0x8]
  %v1237 = vunpack.c.l.bf16 %v1236
  %v1238 = vsel %vm252, %v1230, 0.0
  %1239 = vadd.xlane.f32.xlu0 %v1238
  %v1240 = vpop.xlane.xlu0 %1239
  %v1241 = vsel %vm252, %v1231, 0.0
  %1242 = vadd.xlane.f32.xlu0 %v1241
  %v1243 = vpop.xlane.xlu0 %1242
  %v1244 = vsel %vm252, %v1232, 0.0
  %1245 = vadd.xlane.f32.xlu0 %v1244
  %v1246 = vpop.xlane.xlu0 %1245
  %v1247 = vsel %vm252, %v1233, 0.0
  %1248 = vadd.xlane.f32.xlu0 %v1247
  %v1249 = vpop.xlane.xlu0 %1248
  %v1250 = vsel %vm252, %v1234, 0.0
  %1251 = vadd.xlane.f32.xlu0 %v1250
  %v1252 = vpop.xlane.xlu0 %1251
  %v1253 = vsel %vm252, %v1235, 0.0
  %1254 = vadd.xlane.f32.xlu0 %v1253
  %v1255 = vpop.xlane.xlu0 %1254
  %v1256 = vmul.f32 %v1240, %v924
  %v1257 = vmul.f32 %v1243, %v924
  %v1258 = vmul.f32 %v1246, %v924
  %v1259 = vmul.f32 %v1249, %v924
  %v1260 = vmul.f32 %v1252, %v924
  %v1261 = vmul.f32 %v1255, %v924
  %v1262 = vsub.f32 %v1230, %v1256
  %v1263 = vsub.f32 %v1231, %v1257
  %v1264 = vsub.f32 %v1232, %v1258
  %v1265 = vsub.f32 %v1233, %v1259
  %v1266 = vsub.f32 %v1234, %v1260
  %v1267 = vsub.f32 %v1235, %v1261
  %v1268 = vmul.f32 %v1262, %v1262
  %v1269 = vmul.f32 %v1263, %v1263
  %v1270 = vmul.f32 %v1264, %v1264
  %v1271 = vmul.f32 %v1265, %v1265
  %v1272 = vmul.f32 %v1266, %v1266
  %v1273 = vmul.f32 %v1267, %v1267
  %v1274 = vsel %vm252, %v1268, 0.0
  %1275 = vadd.xlane.f32.xlu0 %v1274
  %v1276 = vpop.xlane.xlu0 %1275
  %v1277 = vsel %vm252, %v1269, 0.0
  %1278 = vadd.xlane.f32.xlu0 %v1277
  %v1279 = vpop.xlane.xlu0 %1278
  %v1280 = vsel %vm252, %v1270, 0.0
  %1281 = vadd.xlane.f32.xlu0 %v1280
  %v1282 = vpop.xlane.xlu0 %1281
  %v1283 = vsel %vm252, %v1271, 0.0
  %1284 = vadd.xlane.f32.xlu0 %v1283
  %v1285 = vpop.xlane.xlu0 %1284
  %v1286 = vsel %vm252, %v1272, 0.0
  %1287 = vadd.xlane.f32.xlu0 %v1286
  %v1288 = vpop.xlane.xlu0 %1287
  %v1289 = vsel %vm252, %v1273, 0.0
  %1290 = vadd.xlane.f32.xlu0 %v1289
  %v1291 = vpop.xlane.xlu0 %1290
  %v1292 = vmul.f32 %v1276, %v924
  %v1293 = vmul.f32 %v1279, %v924
  %v1294 = vmul.f32 %v1282, %v924
  %v1295 = vmul.f32 %v1285, %v924
  %v1296 = vmul.f32 %v1288, %v924
  %v1297 = vmul.f32 %v1291, %v924
  %v1298 = vadd.f32 %v1292, 1e-05
  %v1299 = vadd.f32 %v1293, 1e-05
  %v1300 = vadd.f32 %v1294, 1e-05
  %v1301 = vadd.f32 %v1295, 1e-05
  %v1302 = vadd.f32 %v1296, 1e-05
  %v1303 = vadd.f32 %v1297, 1e-05
  %v1304 = vrsqrt.pop %v1298
  %v1305 = vrsqrt.pop %v1299
  %v1306 = vrsqrt.pop %v1300
  %v1307 = vrsqrt.pop %v1301
  %v1308 = vrsqrt.pop %v1302
  %v1309 = vrsqrt.pop %v1303
  %v1310 = vmul.f32 %v1262, %v1304
  %v1311 = vmul.f32 %v1263, %v1305
  %v1312 = vmul.f32 %v1264, %v1306
  %v1313 = vmul.f32 %v1265, %v1307
  %v1314 = vmul.f32 %v1266, %v1308
  %v1315 = vmul.f32 %v1267, %v1309
  %v1316 = vlaneseq
  %v1317 = vshrl.u32 %v1316, 7
  %v1318 = vsub.s32 5, %v1317
  %v1319 = vrot.slane %v1120, %v1318
  %v1320 = vmul.f32 %v1310, %v1319
  %v1321 = vmul.f32 %v1311, %v1319
  %v1322 = vmul.f32 %v1312, %v1319
  %v1323 = vmul.f32 %v1313, %v1319
  %v1324 = vmul.f32 %v1314, %v1319
  %v1325 = vmul.f32 %v1315, %v1319
  %v1326 = vlaneseq
  %v1327 = vshrl.u32 %v1326, 7
  %v1328 = vsub.s32 6, %v1327
  %v1329 = vrot.slane %v1237, %v1328
  %v1330 = vadd.f32 %v1320, %v1329
  %v1331 = vadd.f32 %v1321, %v1329
  %v1332 = vadd.f32 %v1322, %v1329
  %v1333 = vadd.f32 %v1323, %v1329
  %v1334 = vadd.f32 %v1324, %v1329
  %v1335 = vadd.f32 %v1325, %v1329
  %v1336 = vpack.c.bf16 %v1331, %v1330
  %v1337 = vpack.c.bf16 %v1333, %v1332
  %v1338 = vpack.c.bf16 %v1335, %v1334
  %v1339 = vld [vmem:[%s1 + $0x10] sm:$0xf]
  %v1340 = vld [vmem:[%s1 + $0x14] sm:$0xf]
  %v1341 = vld [vmem:[%s1 + $0x18] sm:$0xf]
  %v1342 = vld [vmem:[%s1 + $0x1c] sm:$0xf]
  %v1347 = vunpack.c.l.b16 %v1339
  %v1348 = vunpack.c.l.b16 %v1340
  %v1349 = vunpack.c.l.b16 %v1341
  %v1350 = vunpack.c.l.b16 %v1342
  %v1351 = vpack.c.b16 %v1348, %v1347
  %v1352 = vpack.c.b16 %v1350, %v1349
  %v1356 = vsel %vm252, %v1336, 0
  %v1359 = vsel %vm252, %v1337, 0
  %v1362 = vsel %vm252, %v1338, 0
  %1364 = vmatprep.subr.bf16.mxu0 0
  %1365 = vmatpush1.bf16.msra.mxu0 %v1351
  %1366 = vmatprep.subr.bf16.mxu0 0
  %1367 = vmatpush1.bf16.msra.mxu0 %v1352
  %1368 = vmatprep.subr.bf16.mxu0 0
  %1369 = vmatpush1.bf16.msra.mxu0 0
  %1370 = vmatprep.subr.bf16.mxu0 0
  %1371 = vmatpush1.bf16.msra.mxu0 0
  %1372 = vmatprep.subr.bf16.mxu0 0
  %1373 = vmatpush1.bf16.msra.mxu0 0
  %1374 = vmatprep.subr.bf16.mxu0 0
  %1375 = vmatpush1.bf16.msra.mxu0 0
  %1376 = vmatprep.subr.bf16.mxu0 0
  %1377 = vmatpush1.bf16.msra.mxu0 0
  %1378 = vmatprep.subr.bf16.mxu0 0
  %1379 = vmatpush1.bf16.msra.mxu0 0
  %1380 = vmatprep.subr.bf16.mxu0 0
  %1381 = vmatpush1.bf16.msra.mxu0 0
  %1382 = vmatprep.subr.bf16.mxu0 0
  %1383 = vmatpush1.bf16.msra.mxu0 0
  %1384 = vmatprep.subr.bf16.mxu0 0
  %1385 = vmatpush1.bf16.msra.mxu0 0
  %1386 = vmatprep.subr.bf16.mxu0 0
  %1387 = vmatpush1.bf16.msra.mxu0 0
  %1388 = vmatprep.subr.bf16.mxu0 0
  %1389 = vmatpush1.bf16.msra.mxu0 0
  %1390 = vmatprep.subr.bf16.mxu0 0
  %1391 = vmatpush1.bf16.msra.mxu0 0
  %1392 = vmatprep.subr.bf16.mxu0 0
  %1393 = vmatpush1.bf16.msra.mxu0 0
  %1394 = vmatprep.subr.bf16.mxu0 0
  %1395 = vmatpush1.bf16.msra.mxu0 0
  %1396 = vmatprep.mubr.bf16.mxu0 0
  %1397 = vmatmul.mubr.bf16.gmra.mrb[0].mxu0 %v1356
  %v1398 = vpop.f32.mrb[0].mxu0
  %v1399 = vadd.f32 0.0, %v1398
  %v1400 = vpop.f32.mrb[0].mxu0
  %v1401 = vpop.f32.mrb[0].mxu0
  %v1402 = vadd.f32 0.0, %v1401
  %v1403 = vpop.f32.mrb[0].mxu0
  %1404 = vmatprep.mubr.bf16.mxu0 0
  %1405 = vmatmul.mubr.bf16.gmra.mrb[0].mxu0 %v1359
  %v1406 = vpop.f32.mrb[0].mxu0
  %v1407 = vadd.f32 0.0, %v1406
  %v1408 = vpop.f32.mrb[0].mxu0
  %v1409 = vpop.f32.mrb[0].mxu0
  %v1410 = vadd.f32 0.0, %v1409
  %v1411 = vpop.f32.mrb[0].mxu0
  %1412 = vmatprep.mubr.bf16.mxu0 0
  %1413 = vmatmul.mubr.bf16.gmra.mrb[0].mxu0 %v1362
  %v1414 = vpop.f32.mrb[0].mxu0
  %v1415 = vadd.f32 0.0, %v1414
  %v1416 = vpop.f32.mrb[0].mxu0
  %v1417 = vpop.f32.mrb[0].mxu0
  %v1418 = vadd.f32 0.0, %v1417
  %v1419 = vpop.f32.mrb[0].mxu0
  %1420 = vdwg.mxu0
  %v1421 = vpack.c.bf16 %v1402, %v1399
  %v1422 = vpack.c.bf16 %v1410, %v1407
  %v1423 = vpack.c.bf16 %v1418, %v1415
  %v1425 = vsel %vm252, %v1421, 0
  %v1428 = vsel %vm252, %v1422, 0
  %v1431 = vsel %vm252, %v1423, 0
  %1433 = vmatprep.subr.bf16.mxu0 0
  %1434 = vmatpush1.bf16.xpose.msra.mxu0 %v1356
  %1435 = vmatprep.subr.bf16.mxu0 0
  %1436 = vmatpush1.bf16.xpose.msra.mxu0 %v1359
  %1437 = vmatprep.subr.bf16.mxu0 0
  %1438 = vmatpush1.bf16.xpose.msra.mxu0 %v1362
  %1439 = vmatprep.subr.bf16.mxu0 0
  %1440 = vmatpush1.bf16.xpose.msra.mxu0 0
  %1441 = vmatprep.subr.bf16.mxu0 0
  %1442 = vmatpush1.bf16.xpose.msra.mxu0 0
  %1443 = vmatprep.subr.bf16.mxu0 0
  %1444 = vmatpush1.bf16.xpose.msra.mxu0 0
  %1445 = vmatprep.subr.bf16.mxu0 0
  %1446 = vmatpush1.bf16.xpose.msra.mxu0 0
  %1447 = vmatprep.subr.bf16.mxu0 0
  %1448 = vmatpush1.bf16.xpose.msra.mxu0 0
  %1449 = vmatprep.subr.bf16.mxu0 0
  %1450 = vmatpush1.bf16.xpose.msra.mxu0 0
  %1451 = vmatprep.subr.bf16.mxu0 0
  %1452 = vmatpush1.bf16.xpose.msra.mxu0 0
  %1453 = vmatprep.subr.bf16.mxu0 0
  %1454 = vmatpush1.bf16.xpose.msra.mxu0 0
  %1455 = vmatprep.subr.bf16.mxu0 0
  %1456 = vmatpush1.bf16.xpose.msra.mxu0 0
  %1457 = vmatprep.subr.bf16.mxu0 0
  %1458 = vmatpush1.bf16.xpose.msra.mxu0 0
  %1459 = vmatprep.subr.bf16.mxu0 0
  %1460 = vmatpush1.bf16.xpose.msra.mxu0 0
  %1461 = vmatprep.subr.bf16.mxu0 0
  %1462 = vmatpush1.bf16.xpose.msra.mxu0 0
  %1463 = vmatprep.subr.bf16.mxu0 0
  %1464 = vmatpush1.bf16.xpose.msra.mxu0 0
  %1465 = vmatprep.mubr.bf16.mxu0 0
  %1466 = vmatmul.mubr.bf16.gmra.mrb[0].mxu0 %v1425
  %v1467 = vpop.f32.mrb[0].mxu0
  %v1468 = vadd.f32 %v227, %v1467
  %v1469 = vpop.f32.mrb[0].mxu0
  %v1470 = vpop.f32.mrb[0].mxu0
  %v1471 = vadd.f32 %v228, %v1470
  %v1472 = vpop.f32.mrb[0].mxu0
  %1473 = vmatprep.mubr.bf16.mxu0 0
  %1474 = vmatmul.mubr.bf16.gmra.mrb[0].mxu0 %v1428
  %v1475 = vpop.f32.mrb[0].mxu0
  %v1476 = vadd.f32 %v229, %v1475
  %v1477 = vpop.f32.mrb[0].mxu0
  %v1478 = vpop.f32.mrb[0].mxu0
  %v1479 = vadd.f32 %v230, %v1478
  %v1480 = vpop.f32.mrb[0].mxu0
  %1481 = vmatprep.mubr.bf16.mxu0 0
  %1482 = vmatmul.mubr.bf16.gmra.mrb[0].mxu0 %v1431
  %v1483 = vpop.f32.mrb[0].mxu0
  %v1484 = vadd.f32 %v231, %v1483
  %v1485 = vpop.f32.mrb[0].mxu0
  %v1486 = vpop.f32.mrb[0].mxu0
  %v1487 = vadd.f32 %v232, %v1486
  %v1488 = vpop.f32.mrb[0].mxu0
  %1489 = vdwg.mxu0
  %v1490 = vsel %vm388, %v1468, -inf
  %1491 = vmax.xlane.f32.xlu0 %v1490
  %v1492 = vpop.xlane.xlu0 %1491
  %v1493 = vsel %vm388, %v1471, -inf
  %1494 = vmax.xlane.f32.xlu0 %v1493
  %v1495 = vpop.xlane.xlu0 %1494
  %v1496 = vsel %vm388, %v1476, -inf
  %1497 = vmax.xlane.f32.xlu0 %v1496
  %v1498 = vpop.xlane.xlu0 %1497
  %v1499 = vsel %vm388, %v1479, -inf
  %1500 = vmax.xlane.f32.xlu0 %v1499
  %v1501 = vpop.xlane.xlu0 %1500
  %v1502 = vsel %vm388, %v1484, -inf
  %1503 = vmax.xlane.f32.xlu0 %v1502
  %v1504 = vpop.xlane.xlu0 %1503
  %v1505 = vsel %vm388, %v1487, -inf
  %1506 = vmax.xlane.f32.xlu0 %v1505
  %v1507 = vpop.xlane.xlu0 %1506
  %v1508 = vsub.f32 %v1468, %v1492
  %v1509 = vsub.f32 %v1471, %v1495
  %v1510 = vsub.f32 %v1476, %v1498
  %v1511 = vsub.f32 %v1479, %v1501
  %v1512 = vsub.f32 %v1484, %v1504
  %v1513 = vsub.f32 %v1487, %v1507
  %v1514 = vmul.f32 %v1508, 1.442695
  %v1515 = vpow.pop %v1514
  %v1516 = vmul.f32 %v1509, 1.442695
  %v1517 = vpow.pop %v1516
  %v1518 = vmul.f32 %v1510, 1.442695
  %v1519 = vpow.pop %v1518
  %v1520 = vmul.f32 %v1511, 1.442695
  %v1521 = vpow.pop %v1520
  %v1522 = vmul.f32 %v1512, 1.442695
  %v1523 = vpow.pop %v1522
  %v1524 = vmul.f32 %v1513, 1.442695
  %v1525 = vpow.pop %v1524
  %v1526 = vsel %vm388, %v1515, 0.0
  %1527 = vadd.xlane.f32.xlu0 %v1526
  %v1528 = vpop.xlane.xlu0 %1527
  %v1529 = vsel %vm388, %v1517, 0.0
  %1530 = vadd.xlane.f32.xlu0 %v1529
  %v1531 = vpop.xlane.xlu0 %1530
  %v1532 = vsel %vm388, %v1519, 0.0
  %1533 = vadd.xlane.f32.xlu0 %v1532
  %v1534 = vpop.xlane.xlu0 %1533
  %v1535 = vsel %vm388, %v1521, 0.0
  %1536 = vadd.xlane.f32.xlu0 %v1535
  %v1537 = vpop.xlane.xlu0 %1536
  %v1538 = vsel %vm388, %v1523, 0.0
  %1539 = vadd.xlane.f32.xlu0 %v1538
  %v1540 = vpop.xlane.xlu0 %1539
  %v1541 = vsel %vm388, %v1525, 0.0
  %1542 = vadd.xlane.f32.xlu0 %v1541
  %v1543 = vpop.xlane.xlu0 %1542
  %v1544 = vrcp.pop %v1528
  %v1545 = vrcp.pop %v1531
  %v1546 = vrcp.pop %v1534
  %v1547 = vrcp.pop %v1537
  %v1548 = vrcp.pop %v1540
  %v1549 = vrcp.pop %v1543
  %v1550 = vmul.f32 %v1515, %v1544
  %v1551 = vmul.f32 %v1517, %v1545
  %v1552 = vmul.f32 %v1519, %v1546
  %v1553 = vmul.f32 %v1521, %v1547
  %v1554 = vmul.f32 %v1523, %v1548
  %v1555 = vmul.f32 %v1525, %v1549
  %v1556 = vpack.c.bf16 %v1551, %v1550
  %v1557 = vpack.c.bf16 %v1553, %v1552
  %v1558 = vpack.c.bf16 %v1555, %v1554
  %1562 = vrot.lane.b32.xlu0 %v1421, 96
  %v1563 = vpop.permute.xlu0 %1562
  %1564 = vrot.lane.b32.xlu0 %v1422, 96
  %v1565 = vpop.permute.xlu0 %1564
  %1566 = vrot.lane.b32.xlu0 %v1423, 96
  %v1567 = vpop.permute.xlu0 %1566
  %v1572 = vsel %vm388, %v1556, 0
  %v1575 = vsel %vm388, %v1557, 0
  %v1578 = vsel %vm388, %v1558, 0
  %1580 = vmatprep.subr.bf16.mxu0 0
  %1581 = vmatpush1.bf16.msra.mxu0 %v1563
  %1582 = vmatprep.subr.bf16.mxu0 0
  %1583 = vmatpush1.bf16.msra.mxu0 %v1565
  %1584 = vmatprep.subr.bf16.mxu0 0
  %1585 = vmatpush1.bf16.msra.mxu0 %v1567
  %1586 = vmatprep.subr.bf16.mxu0 0
  %1587 = vmatpush1.bf16.msra.mxu0 0
  %1588 = vmatprep.subr.bf16.mxu0 0
  %1589 = vmatpush1.bf16.msra.mxu0 0
  %1590 = vmatprep.subr.bf16.mxu0 0
  %1591 = vmatpush1.bf16.msra.mxu0 0
  %1592 = vmatprep.subr.bf16.mxu0 0
  %1593 = vmatpush1.bf16.msra.mxu0 0
  %1594 = vmatprep.subr.bf16.mxu0 0
  %1595 = vmatpush1.bf16.msra.mxu0 0
  %1596 = vmatprep.subr.bf16.mxu0 0
  %1597 = vmatpush1.bf16.msra.mxu0 0
  %1598 = vmatprep.subr.bf16.mxu0 0
  %1599 = vmatpush1.bf16.msra.mxu0 0
  %1600 = vmatprep.subr.bf16.mxu0 0
  %1601 = vmatpush1.bf16.msra.mxu0 0
  %1602 = vmatprep.subr.bf16.mxu0 0
  %1603 = vmatpush1.bf16.msra.mxu0 0
  %1604 = vmatprep.subr.bf16.mxu0 0
  %1605 = vmatpush1.bf16.msra.mxu0 0
  %1606 = vmatprep.subr.bf16.mxu0 0
  %1607 = vmatpush1.bf16.msra.mxu0 0
  %1608 = vmatprep.subr.bf16.mxu0 0
  %1609 = vmatpush1.bf16.msra.mxu0 0
  %1610 = vmatprep.subr.bf16.mxu0 0
  %1611 = vmatpush1.bf16.msra.mxu0 0
  %1612 = vmatprep.mubr.bf16.mxu0 0
  %1613 = vmatmul.mubr.bf16.gmra.mrb[0].mxu0 %v1572
  %v1614 = vpop.f32.mrb[0].mxu0
  %v1615 = vadd.f32 0.0, %v1614
  %v1616 = vpop.f32.mrb[0].mxu0
  %v1617 = vpop.f32.mrb[0].mxu0
  %v1618 = vadd.f32 0.0, %v1617
  %v1619 = vpop.f32.mrb[0].mxu0
  %1620 = vmatprep.mubr.bf16.mxu0 0
  %1621 = vmatmul.mubr.bf16.gmra.mrb[0].mxu0 %v1575
  %v1622 = vpop.f32.mrb[0].mxu0
  %v1623 = vadd.f32 0.0, %v1622
  %v1624 = vpop.f32.mrb[0].mxu0
  %v1625 = vpop.f32.mrb[0].mxu0
  %v1626 = vadd.f32 0.0, %v1625
  %v1627 = vpop.f32.mrb[0].mxu0
  %1628 = vmatprep.mubr.bf16.mxu0 0
  %1629 = vmatmul.mubr.bf16.gmra.mrb[0].mxu0 %v1578
  %v1630 = vpop.f32.mrb[0].mxu0
  %v1631 = vadd.f32 0.0, %v1630
  %v1632 = vpop.f32.mrb[0].mxu0
  %v1633 = vpop.f32.mrb[0].mxu0
  %v1634 = vadd.f32 0.0, %v1633
  %v1635 = vpop.f32.mrb[0].mxu0
  %1636 = vdwg.mxu0
  %1637 = vrot.lane.b32.xlu0 %v1421, 64
  %v1638 = vpop.permute.xlu0 %1637
  %1639 = vrot.lane.b32.xlu0 %v1422, 64
  %v1640 = vpop.permute.xlu0 %1639
  %1641 = vrot.lane.b32.xlu0 %v1423, 64
  %v1642 = vpop.permute.xlu0 %1641
  %v1644 = vsel %vm252, %v1638, 0
  %v1647 = vsel %vm252, %v1640, 0
  %v1650 = vsel %vm252, %v1642, 0
  %1652 = vmatprep.subr.bf16.mxu0 0
  %1653 = vmatpush1.bf16.xpose.msra.mxu0 %v1356
  %1654 = vmatprep.subr.bf16.mxu0 0
  %1655 = vmatpush1.bf16.xpose.msra.mxu0 %v1359
  %1656 = vmatprep.subr.bf16.mxu0 0
  %1657 = vmatpush1.bf16.xpose.msra.mxu0 %v1362
  %1658 = vmatprep.subr.bf16.mxu0 0
  %1659 = vmatpush1.bf16.xpose.msra.mxu0 0
  %1660 = vmatprep.subr.bf16.mxu0 0
  %1661 = vmatpush1.bf16.xpose.msra.mxu0 0
  %1662 = vmatprep.subr.bf16.mxu0 0
  %1663 = vmatpush1.bf16.xpose.msra.mxu0 0
  %1664 = vmatprep.subr.bf16.mxu0 0
  %1665 = vmatpush1.bf16.xpose.msra.mxu0 0
  %1666 = vmatprep.subr.bf16.mxu0 0
  %1667 = vmatpush1.bf16.xpose.msra.mxu0 0
  %1668 = vmatprep.subr.bf16.mxu0 0
  %1669 = vmatpush1.bf16.xpose.msra.mxu0 0
  %1670 = vmatprep.subr.bf16.mxu0 0
  %1671 = vmatpush1.bf16.xpose.msra.mxu0 0
  %1672 = vmatprep.subr.bf16.mxu0 0
  %1673 = vmatpush1.bf16.xpose.msra.mxu0 0
  %1674 = vmatprep.subr.bf16.mxu0 0
  %1675 = vmatpush1.bf16.xpose.msra.mxu0 0
  %1676 = vmatprep.subr.bf16.mxu0 0
  %1677 = vmatpush1.bf16.xpose.msra.mxu0 0
  %1678 = vmatprep.subr.bf16.mxu0 0
  %1679 = vmatpush1.bf16.xpose.msra.mxu0 0
  %1680 = vmatprep.subr.bf16.mxu0 0
  %1681 = vmatpush1.bf16.xpose.msra.mxu0 0
  %1682 = vmatprep.subr.bf16.mxu0 0
  %1683 = vmatpush1.bf16.xpose.msra.mxu0 0
  %1684 = vmatprep.mubr.bf16.mxu0 0
  %1685 = vmatmul.mubr.bf16.gmra.mrb[0].mxu0 %v1644
  %v1686 = vpop.f32.mrb[0].mxu0
  %v1687 = vadd.f32 %v227, %v1686
  %v1688 = vpop.f32.mrb[0].mxu0
  %v1689 = vpop.f32.mrb[0].mxu0
  %v1690 = vadd.f32 %v228, %v1689
  %v1691 = vpop.f32.mrb[0].mxu0
  %1692 = vmatprep.mubr.bf16.mxu0 0
  %1693 = vmatmul.mubr.bf16.gmra.mrb[0].mxu0 %v1647
  %v1694 = vpop.f32.mrb[0].mxu0
  %v1695 = vadd.f32 %v229, %v1694
  %v1696 = vpop.f32.mrb[0].mxu0
  %v1697 = vpop.f32.mrb[0].mxu0
  %v1698 = vadd.f32 %v230, %v1697
  %v1699 = vpop.f32.mrb[0].mxu0
  %1700 = vmatprep.mubr.bf16.mxu0 0
  %1701 = vmatmul.mubr.bf16.gmra.mrb[0].mxu0 %v1650
  %v1702 = vpop.f32.mrb[0].mxu0
  %v1703 = vadd.f32 %v231, %v1702
  %v1704 = vpop.f32.mrb[0].mxu0
  %v1705 = vpop.f32.mrb[0].mxu0
  %v1706 = vadd.f32 %v232, %v1705
  %v1707 = vpop.f32.mrb[0].mxu0
  %1708 = vdwg.mxu0
  %v1709 = vsel %vm388, %v1687, -inf
  %1710 = vmax.xlane.f32.xlu0 %v1709
  %v1711 = vpop.xlane.xlu0 %1710
  %v1712 = vsel %vm388, %v1690, -inf
  %1713 = vmax.xlane.f32.xlu0 %v1712
  %v1714 = vpop.xlane.xlu0 %1713
  %v1715 = vsel %vm388, %v1695, -inf
  %1716 = vmax.xlane.f32.xlu0 %v1715
  %v1717 = vpop.xlane.xlu0 %1716
  %v1718 = vsel %vm388, %v1698, -inf
  %1719 = vmax.xlane.f32.xlu0 %v1718
  %v1720 = vpop.xlane.xlu0 %1719
  %v1721 = vsel %vm388, %v1703, -inf
  %1722 = vmax.xlane.f32.xlu0 %v1721
  %v1723 = vpop.xlane.xlu0 %1722
  %v1724 = vsel %vm388, %v1706, -inf
  %1725 = vmax.xlane.f32.xlu0 %v1724
  %v1726 = vpop.xlane.xlu0 %1725
  %v1727 = vsub.f32 %v1687, %v1711
  %v1728 = vsub.f32 %v1690, %v1714
  %v1729 = vsub.f32 %v1695, %v1717
  %v1730 = vsub.f32 %v1698, %v1720
  %v1731 = vsub.f32 %v1703, %v1723
  %v1732 = vsub.f32 %v1706, %v1726
  %v1733 = vmul.f32 %v1727, 1.442695
  %v1734 = vpow.pop %v1733
  %v1735 = vmul.f32 %v1728, 1.442695
  %v1736 = vpow.pop %v1735
  %v1737 = vmul.f32 %v1729, 1.442695
  %v1738 = vpow.pop %v1737
  %v1739 = vmul.f32 %v1730, 1.442695
  %v1740 = vpow.pop %v1739
  %v1741 = vmul.f32 %v1731, 1.442695
  %v1742 = vpow.pop %v1741
  %v1743 = vmul.f32 %v1732, 1.442695
  %v1744 = vpow.pop %v1743
  %v1745 = vsel %vm388, %v1734, 0.0
  %1746 = vadd.xlane.f32.xlu0 %v1745
  %v1747 = vpop.xlane.xlu0 %1746
  %v1748 = vsel %vm388, %v1736, 0.0
  %1749 = vadd.xlane.f32.xlu0 %v1748
  %v1750 = vpop.xlane.xlu0 %1749
  %v1751 = vsel %vm388, %v1738, 0.0
  %1752 = vadd.xlane.f32.xlu0 %v1751
  %v1753 = vpop.xlane.xlu0 %1752
  %v1754 = vsel %vm388, %v1740, 0.0
  %1755 = vadd.xlane.f32.xlu0 %v1754
  %v1756 = vpop.xlane.xlu0 %1755
  %v1757 = vsel %vm388, %v1742, 0.0
  %1758 = vadd.xlane.f32.xlu0 %v1757
  %v1759 = vpop.xlane.xlu0 %1758
  %v1760 = vsel %vm388, %v1744, 0.0
  %1761 = vadd.xlane.f32.xlu0 %v1760
  %v1762 = vpop.xlane.xlu0 %1761
  %v1763 = vrcp.pop %v1747
  %v1764 = vrcp.pop %v1750
  %v1765 = vrcp.pop %v1753
  %v1766 = vrcp.pop %v1756
  %v1767 = vrcp.pop %v1759
  %v1768 = vrcp.pop %v1762
  %v1769 = vmul.f32 %v1734, %v1763
  %v1770 = vmul.f32 %v1736, %v1764
  %v1771 = vmul.f32 %v1738, %v1765
  %v1772 = vmul.f32 %v1740, %v1766
  %v1773 = vmul.f32 %v1742, %v1767
  %v1774 = vmul.f32 %v1744, %v1768
  %v1775 = vpack.c.bf16 %v1770, %v1769
  %v1776 = vpack.c.bf16 %v1772, %v1771
  %v1777 = vpack.c.bf16 %v1774, %v1773
  %1778 = vrot.lane.b32.xlu0 %v1421, 32
  %v1779 = vpop.permute.xlu0 %1778
  %1780 = vrot.lane.b32.xlu0 %v1422, 32
  %v1781 = vpop.permute.xlu0 %1780
  %1782 = vrot.lane.b32.xlu0 %v1423, 32
  %v1783 = vpop.permute.xlu0 %1782
  %v1788 = vsel %vm388, %v1775, 0
  %v1791 = vsel %vm388, %v1776, 0
  %v1794 = vsel %vm388, %v1777, 0
  %1796 = vmatprep.subr.bf16.mxu0 0
  %1797 = vmatpush1.bf16.msra.mxu0 %v1779
  %1798 = vmatprep.subr.bf16.mxu0 0
  %1799 = vmatpush1.bf16.msra.mxu0 %v1781
  %1800 = vmatprep.subr.bf16.mxu0 0
  %1801 = vmatpush1.bf16.msra.mxu0 %v1783
  %1802 = vmatprep.subr.bf16.mxu0 0
  %1803 = vmatpush1.bf16.msra.mxu0 0
  %1804 = vmatprep.subr.bf16.mxu0 0
  %1805 = vmatpush1.bf16.msra.mxu0 0
  %1806 = vmatprep.subr.bf16.mxu0 0
  %1807 = vmatpush1.bf16.msra.mxu0 0
  %1808 = vmatprep.subr.bf16.mxu0 0
  %1809 = vmatpush1.bf16.msra.mxu0 0
  %1810 = vmatprep.subr.bf16.mxu0 0
  %1811 = vmatpush1.bf16.msra.mxu0 0
  %1812 = vmatprep.subr.bf16.mxu0 0
  %1813 = vmatpush1.bf16.msra.mxu0 0
  %1814 = vmatprep.subr.bf16.mxu0 0
  %1815 = vmatpush1.bf16.msra.mxu0 0
  %1816 = vmatprep.subr.bf16.mxu0 0
  %1817 = vmatpush1.bf16.msra.mxu0 0
  %1818 = vmatprep.subr.bf16.mxu0 0
  %1819 = vmatpush1.bf16.msra.mxu0 0
  %1820 = vmatprep.subr.bf16.mxu0 0
  %1821 = vmatpush1.bf16.msra.mxu0 0
  %1822 = vmatprep.subr.bf16.mxu0 0
  %1823 = vmatpush1.bf16.msra.mxu0 0
  %1824 = vmatprep.subr.bf16.mxu0 0
  %1825 = vmatpush1.bf16.msra.mxu0 0
  %1826 = vmatprep.subr.bf16.mxu0 0
  %1827 = vmatpush1.bf16.msra.mxu0 0
  %1828 = vmatprep.mubr.bf16.mxu0 0
  %1829 = vmatmul.mubr.bf16.gmra.mrb[0].mxu0 %v1788
  %v1830 = vpop.f32.mrb[0].mxu0
  %v1831 = vadd.f32 0.0, %v1830
  %v1832 = vpop.f32.mrb[0].mxu0
  %v1833 = vpop.f32.mrb[0].mxu0
  %v1834 = vadd.f32 0.0, %v1833
  %v1835 = vpop.f32.mrb[0].mxu0
  %1836 = vmatprep.mubr.bf16.mxu0 0
  %1837 = vmatmul.mubr.bf16.gmra.mrb[0].mxu0 %v1791
  %v1838 = vpop.f32.mrb[0].mxu0
  %v1839 = vadd.f32 0.0, %v1838
  %v1840 = vpop.f32.mrb[0].mxu0
  %v1841 = vpop.f32.mrb[0].mxu0
  %v1842 = vadd.f32 0.0, %v1841
  %v1843 = vpop.f32.mrb[0].mxu0
  %1844 = vmatprep.mubr.bf16.mxu0 0
  %1845 = vmatmul.mubr.bf16.gmra.mrb[0].mxu0 %v1794
  %v1846 = vpop.f32.mrb[0].mxu0
  %v1847 = vadd.f32 0.0, %v1846
  %v1848 = vpop.f32.mrb[0].mxu0
  %v1849 = vpop.f32.mrb[0].mxu0
  %v1850 = vadd.f32 0.0, %v1849
  %v1851 = vpop.f32.mrb[0].mxu0
  %1852 = vdwg.mxu0
  %1859 = vrot.lane.b32.xlu0 %v1831, 32
  %v1860 = vpop.permute.xlu0 %1859
  %1861 = vrot.lane.b32.xlu0 %v1834, 32
  %v1862 = vpop.permute.xlu0 %1861
  %1863 = vrot.lane.b32.xlu0 %v1839, 32
  %v1864 = vpop.permute.xlu0 %1863
  %1865 = vrot.lane.b32.xlu0 %v1842, 32
  %v1866 = vpop.permute.xlu0 %1865
  %1867 = vrot.lane.b32.xlu0 %v1847, 32
  %v1868 = vpop.permute.xlu0 %1867
  %1869 = vrot.lane.b32.xlu0 %v1850, 32
  %v1870 = vpop.permute.xlu0 %1869
  %v1877 = vsel %vm252, %v1615, %v1860
  %v1878 = vsel %vm252, %v1618, %v1862
  %v1879 = vsel %vm252, %v1623, %v1864
  %v1880 = vsel %vm252, %v1626, %v1866
  %v1881 = vsel %vm252, %v1631, %v1868
  %v1882 = vsel %vm252, %v1634, %v1870
  %v1883 = vpack.c.bf16 %v1878, %v1877
  %v1884 = vpack.c.bf16 %v1880, %v1879
  %v1885 = vpack.c.bf16 %v1882, %v1881
  %v1886 = vlaneseq
  %v1887 = vshrl.u32 %v1886, 7
  %v1888 = vsub.s32 7, %v1887
  %v1889 = vrot.slane %v1237, %v1888
  %1890 = vrot.lane.b32.xlu0 %v1161, 32
  %v1891 = vpop.permute.xlu0 %1890
  %1892 = vrot.lane.b32.xlu0 %v1162, 32
  %v1893 = vpop.permute.xlu0 %1892
  %1894 = vrot.lane.b32.xlu0 %v1163, 32
  %v1895 = vpop.permute.xlu0 %1894
  %1896 = vrot.lane.b32.xlu0 %v1164, 32
  %v1897 = vpop.permute.xlu0 %1896
  %v1903 = vsel %vm831, %v1883, 0
  %v1906 = vsel %vm831, %v1884, 0
  %v1909 = vsel %vm831, %v1885, 0
  %1911 = vmatprep.subr.bf16.mxu0 0
  %1912 = vmatpush1.bf16.msra.mxu0 %v1891
  %1913 = vmatprep.subr.bf16.mxu0 0
  %1914 = vmatpush1.bf16.msra.mxu0 %v1893
  %1915 = vmatprep.subr.bf16.mxu0 0
  %1916 = vmatpush1.bf16.msra.mxu0 %v1895
  %1917 = vmatprep.subr.bf16.mxu0 0
  %1918 = vmatpush1.bf16.msra.mxu0 %v1897
  %1919 = vmatprep.subr.bf16.mxu0 0
  %1920 = vmatpush1.bf16.msra.mxu0 0
  %1921 = vmatprep.subr.bf16.mxu0 0
  %1922 = vmatpush1.bf16.msra.mxu0 0
  %1923 = vmatprep.subr.bf16.mxu0 0
  %1924 = vmatpush1.bf16.msra.mxu0 0
  %1925 = vmatprep.subr.bf16.mxu0 0
  %1926 = vmatpush1.bf16.msra.mxu0 0
  %1927 = vmatprep.subr.bf16.mxu0 0
  %1928 = vmatpush1.bf16.msra.mxu0 0
  %1929 = vmatprep.subr.bf16.mxu0 0
  %1930 = vmatpush1.bf16.msra.mxu0 0
  %1931 = vmatprep.subr.bf16.mxu0 0
  %1932 = vmatpush1.bf16.msra.mxu0 0
  %1933 = vmatprep.subr.bf16.mxu0 0
  %1934 = vmatpush1.bf16.msra.mxu0 0
  %1935 = vmatprep.subr.bf16.mxu0 0
  %1936 = vmatpush1.bf16.msra.mxu0 0
  %1937 = vmatprep.subr.bf16.mxu0 0
  %1938 = vmatpush1.bf16.msra.mxu0 0
  %1939 = vmatprep.subr.bf16.mxu0 0
  %1940 = vmatpush1.bf16.msra.mxu0 0
  %1941 = vmatprep.subr.bf16.mxu0 0
  %1942 = vmatpush1.bf16.msra.mxu0 0
  %1943 = vmatprep.mubr.bf16.mxu0 0
  %1944 = vmatmul.mubr.bf16.gmra.mrb[0].mxu0 %v1903
  %v1945 = vpop.f32.mrb[0].mxu0
  %v1946 = vadd.f32 %v1889, %v1945
  %v1947 = vpop.f32.mrb[0].mxu0
  %v1948 = vpop.f32.mrb[0].mxu0
  %v1949 = vadd.f32 %v1889, %v1948
  %v1950 = vpop.f32.mrb[0].mxu0
  %1951 = vmatprep.mubr.bf16.mxu0 0
  %1952 = vmatmul.mubr.bf16.gmra.mrb[0].mxu0 %v1906
  %v1953 = vpop.f32.mrb[0].mxu0
  %v1954 = vadd.f32 %v1889, %v1953
  %v1955 = vpop.f32.mrb[0].mxu0
  %v1956 = vpop.f32.mrb[0].mxu0
  %v1957 = vadd.f32 %v1889, %v1956
  %v1958 = vpop.f32.mrb[0].mxu0
  %1959 = vmatprep.mubr.bf16.mxu0 0
  %1960 = vmatmul.mubr.bf16.gmra.mrb[0].mxu0 %v1909
  %v1961 = vpop.f32.mrb[0].mxu0
  %v1962 = vadd.f32 %v1889, %v1961
  %v1963 = vpop.f32.mrb[0].mxu0
  %v1964 = vpop.f32.mrb[0].mxu0
  %v1965 = vadd.f32 %v1889, %v1964
  %v1966 = vpop.f32.mrb[0].mxu0
  %1967 = vdwg.mxu0
  %v1968 = vadd.f32 %v1946, %v1330
  %v1969 = vadd.f32 %v1949, %v1331
  %v1970 = vadd.f32 %v1954, %v1332
  %v1971 = vadd.f32 %v1957, %v1333
  %v1972 = vadd.f32 %v1962, %v1334
  %v1973 = vadd.f32 %v1965, %v1335
  %v1974 = vld [vmem:[%s1 + $0x44] sm:$0x1]
  %v1975 = vunpack.c.l.bf16 %v1974
  %v1976 = vsel %vm252, %v1968, 0.0
  %1977 = vadd.xlane.f32.xlu0 %v1976
  %v1978 = vpop.xlane.xlu0 %1977
  %v1979 = vsel %vm252, %v1969, 0.0
  %1980 = vadd.xlane.f32.xlu0 %v1979
  %v1981 = vpop.xlane.xlu0 %1980
  %v1982 = vsel %vm252, %v1970, 0.0
  %1983 = vadd.xlane.f32.xlu0 %v1982
  %v1984 = vpop.xlane.xlu0 %1983
  %v1985 = vsel %vm252, %v1971, 0.0
  %1986 = vadd.xlane.f32.xlu0 %v1985
  %v1987 = vpop.xlane.xlu0 %1986
  %v1988 = vsel %vm252, %v1972, 0.0
  %1989 = vadd.xlane.f32.xlu0 %v1988
  %v1990 = vpop.xlane.xlu0 %1989
  %v1991 = vsel %vm252, %v1973, 0.0
  %1992 = vadd.xlane.f32.xlu0 %v1991
  %v1993 = vpop.xlane.xlu0 %1992
  %v1994 = vmul.f32 %v1978, %v924
  %v1995 = vmul.f32 %v1981, %v924
  %v1996 = vmul.f32 %v1984, %v924
  %v1997 = vmul.f32 %v1987, %v924
  %v1998 = vmul.f32 %v1990, %v924
  %v1999 = vmul.f32 %v1993, %v924
  %v2000 = vsub.f32 %v1968, %v1994
  %v2001 = vsub.f32 %v1969, %v1995
  %v2002 = vsub.f32 %v1970, %v1996
  %v2003 = vsub.f32 %v1971, %v1997
  %v2004 = vsub.f32 %v1972, %v1998
  %v2005 = vsub.f32 %v1973, %v1999
  %v2006 = vmul.f32 %v2000, %v2000
  %v2007 = vmul.f32 %v2001, %v2001
  %v2008 = vmul.f32 %v2002, %v2002
  %v2009 = vmul.f32 %v2003, %v2003
  %v2010 = vmul.f32 %v2004, %v2004
  %v2011 = vmul.f32 %v2005, %v2005
  %v2012 = vsel %vm252, %v2006, 0.0
  %2013 = vadd.xlane.f32.xlu0 %v2012
  %v2014 = vpop.xlane.xlu0 %2013
  %v2015 = vsel %vm252, %v2007, 0.0
  %2016 = vadd.xlane.f32.xlu0 %v2015
  %v2017 = vpop.xlane.xlu0 %2016
  %v2018 = vsel %vm252, %v2008, 0.0
  %2019 = vadd.xlane.f32.xlu0 %v2018
  %v2020 = vpop.xlane.xlu0 %2019
  %v2021 = vsel %vm252, %v2009, 0.0
  %2022 = vadd.xlane.f32.xlu0 %v2021
  %v2023 = vpop.xlane.xlu0 %2022
  %v2024 = vsel %vm252, %v2010, 0.0
  %2025 = vadd.xlane.f32.xlu0 %v2024
  %v2026 = vpop.xlane.xlu0 %2025
  %v2027 = vsel %vm252, %v2011, 0.0
  %2028 = vadd.xlane.f32.xlu0 %v2027
  %v2029 = vpop.xlane.xlu0 %2028
  %v2030 = vmul.f32 %v2014, %v924
  %v2031 = vmul.f32 %v2017, %v924
  %v2032 = vmul.f32 %v2020, %v924
  %v2033 = vmul.f32 %v2023, %v924
  %v2034 = vmul.f32 %v2026, %v924
  %v2035 = vmul.f32 %v2029, %v924
  %v2036 = vadd.f32 %v2030, 1e-05
  %v2037 = vadd.f32 %v2031, 1e-05
  %v2038 = vadd.f32 %v2032, 1e-05
  %v2039 = vadd.f32 %v2033, 1e-05
  %v2040 = vadd.f32 %v2034, 1e-05
  %v2041 = vadd.f32 %v2035, 1e-05
  %v2042 = vrsqrt.pop %v2036
  %v2043 = vrsqrt.pop %v2037
  %v2044 = vrsqrt.pop %v2038
  %v2045 = vrsqrt.pop %v2039
  %v2046 = vrsqrt.pop %v2040
  %v2047 = vrsqrt.pop %v2041
  %v2048 = vmul.f32 %v2000, %v2042
  %v2049 = vmul.f32 %v2001, %v2043
  %v2050 = vmul.f32 %v2002, %v2044
  %v2051 = vmul.f32 %v2003, %v2045
  %v2052 = vmul.f32 %v2004, %v2046
  %v2053 = vmul.f32 %v2005, %v2047
  %v2054 = vlaneseq
  %v2055 = vshrl.u32 %v2054, 7
  %v2056 = vsub.s32 0, %v2055
  %v2057 = vrot.slane %v1975, %v2056
  %v2058 = vmul.f32 %v2048, %v2057
  %v2059 = vmul.f32 %v2049, %v2057
  %v2060 = vmul.f32 %v2050, %v2057
  %v2061 = vmul.f32 %v2051, %v2057
  %v2062 = vmul.f32 %v2052, %v2057
  %v2063 = vmul.f32 %v2053, %v2057
  %v2064 = vlaneseq
  %v2065 = vshrl.u32 %v2064, 7
  %v2066 = vsub.s32 1, %v2065
  %v2067 = vrot.slane %v1975, %v2066
  %v2068 = vadd.f32 %v2058, %v2067
  %v2069 = vadd.f32 %v2059, %v2067
  %v2070 = vadd.f32 %v2060, %v2067
  %v2071 = vadd.f32 %v2061, %v2067
  %v2072 = vadd.f32 %v2062, %v2067
  %v2073 = vadd.f32 %v2063, %v2067
  %v2074 = vld [vmem:[%s1 + $0x30] sm:$0xf]
  %v2075 = vld [vmem:[%s1 + $0x34] sm:$0xf]
  %v2076 = vld [vmem:[%s1 + $0x38] sm:$0xf]
  %v2077 = vld [vmem:[%s1 + $0x3c] sm:$0xf]
  %v2078 = vpack.c.bf16 %v2069, %v2068
  %v2079 = vpack.c.bf16 %v2071, %v2070
  %v2080 = vpack.c.bf16 %v2073, %v2072
  %v2081 = vld [vmem:[%s1 + $0x44] sm:$0x2]
  %v2082 = vunpack.c.l.bf16 %v2081
  %v2083 = vlaneseq
  %v2084 = vshrl.u32 %v2083, 7
  %v2085 = vsub.s32 2, %v2084
  %v2086 = vrot.slane %v2082, %v2085
  %v2091 = vunpack.c.l.b16 %v2074
  %v2092 = vunpack.c.l.b16 %v2075
  %v2093 = vunpack.c.l.b16 %v2076
  %v2094 = vunpack.c.l.b16 %v2077
  %v2095 = vpack.c.b16 %v2092, %v2091
  %v2096 = vpack.c.b16 %v2094, %v2093
  %v2100 = vsel %vm252, %v2078, 0
  %v2103 = vsel %vm252, %v2079, 0
  %v2106 = vsel %vm252, %v2080, 0
  %2108 = vmatprep.subr.bf16.mxu0 0
  %2109 = vmatpush1.bf16.msra.mxu0 %v2095
  %2110 = vmatprep.subr.bf16.mxu0 0
  %2111 = vmatpush1.bf16.msra.mxu0 %v2096
  %2112 = vmatprep.subr.bf16.mxu0 0
  %2113 = vmatpush1.bf16.msra.mxu0 0
  %2114 = vmatprep.subr.bf16.mxu0 0
  %2115 = vmatpush1.bf16.msra.mxu0 0
  %2116 = vmatprep.subr.bf16.mxu0 0
  %2117 = vmatpush1.bf16.msra.mxu0 0
  %2118 = vmatprep.subr.bf16.mxu0 0
  %2119 = vmatpush1.bf16.msra.mxu0 0
  %2120 = vmatprep.subr.bf16.mxu0 0
  %2121 = vmatpush1.bf16.msra.mxu0 0
  %2122 = vmatprep.subr.bf16.mxu0 0
  %2123 = vmatpush1.bf16.msra.mxu0 0
  %2124 = vmatprep.subr.bf16.mxu0 0
  %2125 = vmatpush1.bf16.msra.mxu0 0
  %2126 = vmatprep.subr.bf16.mxu0 0
  %2127 = vmatpush1.bf16.msra.mxu0 0
  %2128 = vmatprep.subr.bf16.mxu0 0
  %2129 = vmatpush1.bf16.msra.mxu0 0
  %2130 = vmatprep.subr.bf16.mxu0 0
  %2131 = vmatpush1.bf16.msra.mxu0 0
  %2132 = vmatprep.subr.bf16.mxu0 0
  %2133 = vmatpush1.bf16.msra.mxu0 0
  %2134 = vmatprep.subr.bf16.mxu0 0
  %2135 = vmatpush1.bf16.msra.mxu0 0
  %2136 = vmatprep.subr.bf16.mxu0 0
  %2137 = vmatpush1.bf16.msra.mxu0 0
  %2138 = vmatprep.subr.bf16.mxu0 0
  %2139 = vmatpush1.bf16.msra.mxu0 0
  %2140 = vmatprep.mubr.bf16.mxu0 0
  %2141 = vmatmul.mubr.bf16.gmra.mrb[0].mxu0 %v2100
  %v2142 = vpop.f32.mrb[0].mxu0
  %v2143 = vadd.f32 %v2086, %v2142
  %v2144 = vpop.f32.mrb[0].mxu0
  %v2145 = vpop.f32.mrb[0].mxu0
  %v2146 = vadd.f32 %v2086, %v2145
  %v2147 = vpop.f32.mrb[0].mxu0
  %2148 = vmatprep.mubr.bf16.mxu0 0
  %2149 = vmatmul.mubr.bf16.gmra.mrb[0].mxu0 %v2103
  %v2150 = vpop.f32.mrb[0].mxu0
  %v2151 = vadd.f32 %v2086, %v2150
  %v2152 = vpop.f32.mrb[0].mxu0
  %v2153 = vpop.f32.mrb[0].mxu0
  %v2154 = vadd.f32 %v2086, %v2153
  %v2155 = vpop.f32.mrb[0].mxu0
  %2156 = vmatprep.mubr.bf16.mxu0 0
  %2157 = vmatmul.mubr.bf16.gmra.mrb[0].mxu0 %v2106
  %v2158 = vpop.f32.mrb[0].mxu0
  %v2159 = vadd.f32 %v2086, %v2158
  %v2160 = vpop.f32.mrb[0].mxu0
  %v2161 = vpop.f32.mrb[0].mxu0
  %v2162 = vadd.f32 %v2086, %v2161
  %v2163 = vpop.f32.mrb[0].mxu0
  %2164 = vdwg.mxu0
  %v2165 = vmax.f32 %v2143, 0.0
  %v2166 = vmax.f32 %v2146, 0.0
  %v2167 = vmax.f32 %v2151, 0.0
  %v2168 = vmax.f32 %v2154, 0.0
  %v2169 = vmax.f32 %v2159, 0.0
  %v2170 = vmax.f32 %v2162, 0.0
  %v2171 = vpack.c.bf16 %v2166, %v2165
  %v2172 = vpack.c.bf16 %v2168, %v2167
  %v2173 = vpack.c.bf16 %v2170, %v2169
  %v2174 = vlaneseq
  %v2175 = vshrl.u32 %v2174, 7
  %v2176 = vsub.s32 3, %v2175
  %v2177 = vrot.slane %v2082, %v2176
  %2178 = vrot.lane.b32.xlu0 %v1157, 96
  %v2179 = vpop.permute.xlu0 %2178
  %2180 = vrot.lane.b32.xlu0 %v1158, 96
  %v2181 = vpop.permute.xlu0 %2180
  %2182 = vrot.lane.b32.xlu0 %v1159, 96
  %v2183 = vpop.permute.xlu0 %2182
  %2184 = vrot.lane.b32.xlu0 %v1160, 96
  %v2185 = vpop.permute.xlu0 %2184
  %2186 = vrot.lane.b32.xlu0 %v1161, 96
  %v2187 = vpop.permute.xlu0 %2186
  %2188 = vrot.lane.b32.xlu0 %v1162, 96
  %v2189 = vpop.permute.xlu0 %2188
  %2190 = vrot.lane.b32.xlu0 %v1163, 96
  %v2191 = vpop.permute.xlu0 %2190
  %2192 = vrot.lane.b32.xlu0 %v1164, 96
  %v2193 = vpop.permute.xlu0 %2192
  %2202 = vmatprep.subr.bf16.mxu0 0
  %2203 = vmatpush1.bf16.msra.mxu0 %v2179
  %2204 = vmatprep.subr.bf16.mxu0 0
  %2205 = vmatpush1.bf16.msra.mxu0 %v2181
  %2206 = vmatprep.subr.bf16.mxu0 0
  %2207 = vmatpush1.bf16.msra.mxu0 %v2183
  %2208 = vmatprep.subr.bf16.mxu0 0
  %2209 = vmatpush1.bf16.msra.mxu0 %v2185
  %2210 = vmatprep.subr.bf16.mxu0 0
  %2211 = vmatpush1.bf16.msra.mxu0 %v2187
  %2212 = vmatprep.subr.bf16.mxu0 0
  %2213 = vmatpush1.bf16.msra.mxu0 %v2189
  %2214 = vmatprep.subr.bf16.mxu0 0
  %2215 = vmatpush1.bf16.msra.mxu0 %v2191
  %2216 = vmatprep.subr.bf16.mxu0 0
  %2217 = vmatpush1.bf16.msra.mxu0 %v2193
  %2218 = vmatprep.subr.bf16.mxu0 0
  %2219 = vmatpush1.bf16.msra.mxu0 0
  %2220 = vmatprep.subr.bf16.mxu0 0
  %2221 = vmatpush1.bf16.msra.mxu0 0
  %2222 = vmatprep.subr.bf16.mxu0 0
  %2223 = vmatpush1.bf16.msra.mxu0 0
  %2224 = vmatprep.subr.bf16.mxu0 0
  %2225 = vmatpush1.bf16.msra.mxu0 0
  %2226 = vmatprep.subr.bf16.mxu0 0
  %2227 = vmatpush1.bf16.msra.mxu0 0
  %2228 = vmatprep.subr.bf16.mxu0 0
  %2229 = vmatpush1.bf16.msra.mxu0 0
  %2230 = vmatprep.subr.bf16.mxu0 0
  %2231 = vmatpush1.bf16.msra.mxu0 0
  %2232 = vmatprep.subr.bf16.mxu0 0
  %2233 = vmatpush1.bf16.msra.mxu0 0
  %2234 = vmatprep.mubr.bf16.mxu0 0
  %2235 = vmatmul.mubr.bf16.gmra.mrb[0].mxu0 %v2171
  %v2236 = vpop.f32.mrb[0].mxu0
  %v2237 = vadd.f32 %v2177, %v2236
  %v2238 = vpop.f32.mrb[0].mxu0
  %v2239 = vpop.f32.mrb[0].mxu0
  %v2240 = vadd.f32 %v2177, %v2239
  %v2241 = vpop.f32.mrb[0].mxu0
  %2242 = vmatprep.mubr.bf16.mxu0 0
  %2243 = vmatmul.mubr.bf16.gmra.mrb[0].mxu0 %v2172
  %v2244 = vpop.f32.mrb[0].mxu0
  %v2245 = vadd.f32 %v2177, %v2244
  %v2246 = vpop.f32.mrb[0].mxu0
  %v2247 = vpop.f32.mrb[0].mxu0
  %v2248 = vadd.f32 %v2177, %v2247
  %v2249 = vpop.f32.mrb[0].mxu0
  %2250 = vmatprep.mubr.bf16.mxu0 0
  %2251 = vmatmul.mubr.bf16.gmra.mrb[0].mxu0 %v2173
  %v2252 = vpop.f32.mrb[0].mxu0
  %v2253 = vadd.f32 %v2177, %v2252
  %v2254 = vpop.f32.mrb[0].mxu0
  %v2255 = vpop.f32.mrb[0].mxu0
  %v2256 = vadd.f32 %v2177, %v2255
  %v2257 = vpop.f32.mrb[0].mxu0
  %2258 = vdwg.mxu0
  %v2259 = vadd.f32 %v2237, %v2068
  %v2260 = vadd.f32 %v2240, %v2069
  %v2261 = vadd.f32 %v2245, %v2070
  %v2262 = vadd.f32 %v2248, %v2071
  %v2263 = vadd.f32 %v2253, %v2072
  %v2264 = vadd.f32 %v2256, %v2073
  %v2265 = vld [vmem:[%s1 + $0x44] sm:$0x4]
  %v2266 = vunpack.c.l.bf16 %v2265
  %v2267 = vsel %vm252, %v2259, 0.0
  %2268 = vadd.xlane.f32.xlu0 %v2267
  %v2269 = vpop.xlane.xlu0 %2268
  %v2270 = vsel %vm252, %v2260, 0.0
  %2271 = vadd.xlane.f32.xlu0 %v2270
  %v2272 = vpop.xlane.xlu0 %2271
  %v2273 = vsel %vm252, %v2261, 0.0
  %2274 = vadd.xlane.f32.xlu0 %v2273
  %v2275 = vpop.xlane.xlu0 %2274
  %v2276 = vsel %vm252, %v2262, 0.0
  %2277 = vadd.xlane.f32.xlu0 %v2276
  %v2278 = vpop.xlane.xlu0 %2277
  %v2279 = vsel %vm252, %v2263, 0.0
  %2280 = vadd.xlane.f32.xlu0 %v2279
  %v2281 = vpop.xlane.xlu0 %2280
  %v2282 = vsel %vm252, %v2264, 0.0
  %2283 = vadd.xlane.f32.xlu0 %v2282
  %v2284 = vpop.xlane.xlu0 %2283
  %v2285 = vmul.f32 %v2269, %v924
  %v2286 = vmul.f32 %v2272, %v924
  %v2287 = vmul.f32 %v2275, %v924
  %v2288 = vmul.f32 %v2278, %v924
  %v2289 = vmul.f32 %v2281, %v924
  %v2290 = vmul.f32 %v2284, %v924
  %v2291 = vsub.f32 %v2259, %v2285
  %v2292 = vsub.f32 %v2260, %v2286
  %v2293 = vsub.f32 %v2261, %v2287
  %v2294 = vsub.f32 %v2262, %v2288
  %v2295 = vsub.f32 %v2263, %v2289
  %v2296 = vsub.f32 %v2264, %v2290
  %v2297 = vmul.f32 %v2291, %v2291
  %v2298 = vmul.f32 %v2292, %v2292
  %v2299 = vmul.f32 %v2293, %v2293
  %v2300 = vmul.f32 %v2294, %v2294
  %v2301 = vmul.f32 %v2295, %v2295
  %v2302 = vmul.f32 %v2296, %v2296
  %v2303 = vsel %vm252, %v2297, 0.0
  %2304 = vadd.xlane.f32.xlu0 %v2303
  %v2305 = vpop.xlane.xlu0 %2304
  %v2306 = vsel %vm252, %v2298, 0.0
  %2307 = vadd.xlane.f32.xlu0 %v2306
  %v2308 = vpop.xlane.xlu0 %2307
  %v2309 = vsel %vm252, %v2299, 0.0
  %2310 = vadd.xlane.f32.xlu0 %v2309
  %v2311 = vpop.xlane.xlu0 %2310
  %v2312 = vsel %vm252, %v2300, 0.0
  %2313 = vadd.xlane.f32.xlu0 %v2312
  %v2314 = vpop.xlane.xlu0 %2313
  %v2315 = vsel %vm252, %v2301, 0.0
  %2316 = vadd.xlane.f32.xlu0 %v2315
  %v2317 = vpop.xlane.xlu0 %2316
  %v2318 = vsel %vm252, %v2302, 0.0
  %2319 = vadd.xlane.f32.xlu0 %v2318
  %v2320 = vpop.xlane.xlu0 %2319
  %v2321 = vmul.f32 %v2305, %v924
  %v2322 = vmul.f32 %v2308, %v924
  %v2323 = vmul.f32 %v2311, %v924
  %v2324 = vmul.f32 %v2314, %v924
  %v2325 = vmul.f32 %v2317, %v924
  %v2326 = vmul.f32 %v2320, %v924
  %v2327 = vadd.f32 %v2321, 1e-05
  %v2328 = vadd.f32 %v2322, 1e-05
  %v2329 = vadd.f32 %v2323, 1e-05
  %v2330 = vadd.f32 %v2324, 1e-05
  %v2331 = vadd.f32 %v2325, 1e-05
  %v2332 = vadd.f32 %v2326, 1e-05
  %v2333 = vrsqrt.pop %v2327
  %v2334 = vrsqrt.pop %v2328
  %v2335 = vrsqrt.pop %v2329
  %v2336 = vrsqrt.pop %v2330
  %v2337 = vrsqrt.pop %v2331
  %v2338 = vrsqrt.pop %v2332
  %v2339 = vmul.f32 %v2291, %v2333
  %v2340 = vmul.f32 %v2292, %v2334
  %v2341 = vmul.f32 %v2293, %v2335
  %v2342 = vmul.f32 %v2294, %v2336
  %v2343 = vmul.f32 %v2295, %v2337
  %v2344 = vmul.f32 %v2296, %v2338
  %v2345 = vlaneseq
  %v2346 = vshrl.u32 %v2345, 7
  %v2347 = vsub.s32 4, %v2346
  %v2348 = vrot.slane %v2266, %v2347
  %v2349 = vmul.f32 %v2339, %v2348
  %v2350 = vmul.f32 %v2340, %v2348
  %v2351 = vmul.f32 %v2341, %v2348
  %v2352 = vmul.f32 %v2342, %v2348
  %v2353 = vmul.f32 %v2343, %v2348
  %v2354 = vmul.f32 %v2344, %v2348
  %v2355 = vlaneseq
  %v2356 = vshrl.u32 %v2355, 7
  %v2357 = vsub.s32 5, %v2356
  %v2358 = vrot.slane %v2266, %v2357
  %v2359 = vadd.f32 %v2349, %v2358
  %v2360 = vadd.f32 %v2350, %v2358
  %v2361 = vadd.f32 %v2351, %v2358
  %v2362 = vadd.f32 %v2352, %v2358
  %v2363 = vadd.f32 %v2353, %v2358
  %v2364 = vadd.f32 %v2354, %v2358
  %v2365 = vld [vmem:[%s1 + $0x88] sm:$0xf]
  %v2366 = vld [vmem:[%s1 + $0x8c] sm:$0xf]
  %v2367 = vld [vmem:[%s1 + $0x90] sm:$0xf]
  %v2368 = vld [vmem:[%s1 + $0x94] sm:$0xf]
  %v2369 = vpack.c.bf16 %v2360, %v2359
  %v2370 = vpack.c.bf16 %v2362, %v2361
  %v2371 = vpack.c.bf16 %v2364, %v2363
  %v2372 = vld [vmem:[%s1 + $0x44] sm:$0x8]
  %v2373 = vunpack.c.l.bf16 %v2372
  %v2374 = vlaneseq
  %v2375 = vshrl.u32 %v2374, 7
  %v2376 = vsub.s32 6, %v2375
  %v2377 = vrot.slane %v2373, %v2376
  %v2382 = vunpack.c.l.b16 %v2365
  %v2383 = vunpack.c.l.b16 %v2366
  %v2384 = vunpack.c.l.b16 %v2367
  %v2385 = vunpack.c.l.b16 %v2368
  %v2386 = vpack.c.b16 %v2383, %v2382
  %v2387 = vpack.c.b16 %v2385, %v2384
  %v2391 = vsel %vm252, %v2369, 0
  %v2394 = vsel %vm252, %v2370, 0
  %v2397 = vsel %vm252, %v2371, 0
  %2399 = vmatprep.subr.bf16.mxu0 0
  %2400 = vmatpush1.bf16.msra.mxu0 %v2386
  %2401 = vmatprep.subr.bf16.mxu0 0
  %2402 = vmatpush1.bf16.msra.mxu0 %v2387
  %2403 = vmatprep.subr.bf16.mxu0 0
  %2404 = vmatpush1.bf16.msra.mxu0 0
  %2405 = vmatprep.subr.bf16.mxu0 0
  %2406 = vmatpush1.bf16.msra.mxu0 0
  %2407 = vmatprep.subr.bf16.mxu0 0
  %2408 = vmatpush1.bf16.msra.mxu0 0
  %2409 = vmatprep.subr.bf16.mxu0 0
  %2410 = vmatpush1.bf16.msra.mxu0 0
  %2411 = vmatprep.subr.bf16.mxu0 0
  %2412 = vmatpush1.bf16.msra.mxu0 0
  %2413 = vmatprep.subr.bf16.mxu0 0
  %2414 = vmatpush1.bf16.msra.mxu0 0
  %2415 = vmatprep.subr.bf16.mxu0 0
  %2416 = vmatpush1.bf16.msra.mxu0 0
  %2417 = vmatprep.subr.bf16.mxu0 0
  %2418 = vmatpush1.bf16.msra.mxu0 0
  %2419 = vmatprep.subr.bf16.mxu0 0
  %2420 = vmatpush1.bf16.msra.mxu0 0
  %2421 = vmatprep.subr.bf16.mxu0 0
  %2422 = vmatpush1.bf16.msra.mxu0 0
  %2423 = vmatprep.subr.bf16.mxu0 0
  %2424 = vmatpush1.bf16.msra.mxu0 0
  %2425 = vmatprep.subr.bf16.mxu0 0
  %2426 = vmatpush1.bf16.msra.mxu0 0
  %2427 = vmatprep.subr.bf16.mxu0 0
  %2428 = vmatpush1.bf16.msra.mxu0 0
  %2429 = vmatprep.subr.bf16.mxu0 0
  %2430 = vmatpush1.bf16.msra.mxu0 0
  %2431 = vmatprep.mubr.bf16.mxu0 0
  %2432 = vmatmul.mubr.bf16.gmra.mrb[0].mxu0 %v2391
  %v2433 = vpop.f32.mrb[0].mxu0
  %v2434 = vadd.f32 %v2377, %v2433
  %v2435 = vpop.f32.mrb[0].mxu0
  %v2436 = vpop.f32.mrb[0].mxu0
  %v2437 = vadd.f32 %v2377, %v2436
  %v2438 = vpop.f32.mrb[0].mxu0
  %2439 = vmatprep.mubr.bf16.mxu0 0
  %2440 = vmatmul.mubr.bf16.gmra.mrb[0].mxu0 %v2394
  %v2441 = vpop.f32.mrb[0].mxu0
  %v2442 = vadd.f32 %v2377, %v2441
  %v2443 = vpop.f32.mrb[0].mxu0
  %v2444 = vpop.f32.mrb[0].mxu0
  %v2445 = vadd.f32 %v2377, %v2444
  %v2446 = vpop.f32.mrb[0].mxu0
  %2447 = vmatprep.mubr.bf16.mxu0 0
  %2448 = vmatmul.mubr.bf16.gmra.mrb[0].mxu0 %v2397
  %v2449 = vpop.f32.mrb[0].mxu0
  %v2450 = vpop.f32.mrb[0].mxu0
  %v2451 = vpop.f32.mrb[0].mxu0
  %v2452 = vadd.f32 %v2377, %v2451
  %v2453 = vpop.f32.mrb[0].mxu0
  %2454 = vdwg.mxu0
  %v2455 = vld [vmem:[%s1 + $0x88] sm:$0x3]
  %v2456 = vlaneseq
  %v2457 = vshrl.u32 %v2456, 7
  %v2458 = vsub.s32 7, %v2457
  %v2459 = vrot.slane %v2373, %v2458
  %v2460 = vpack.c.b16 %v33, %v33
  %2461 = vrot.lane.b32.xlu0 %v2460, 61
  %v2462 = vpop.permute.xlu0 %2461
  %v2464 = vunpack.c.l.b16 %v2455
  %v2465 = vpack.c.b16 %v2464, %v2464
  %2466 = vrot.lane.b32.xlu0 %v2465, 64
  %v2467 = vpop.permute.xlu0 %2466
  %vm2468 = vcmask 31744
  %v2470 = vsel %vm2468, %v2462, 0
  %vm2472 = vcmask 1041408
  %v2474 = vsel %vm2472, %v2467, 0
  %2476 = vmatprep.subr.bf16.mxu0 0
  %2477 = vmatpush1.bf16.msra.mxu0 %v2474
  %2478 = vmatprep.subr.bf16.mxu0 0
  %2479 = vmatpush1.bf16.msra.mxu0 0
  %2480 = vmatprep.subr.bf16.mxu0 0
  %2481 = vmatpush1.bf16.msra.mxu0 0
  %2482 = vmatprep.subr.bf16.mxu0 0
  %2483 = vmatpush1.bf16.msra.mxu0 0
  %2484 = vmatprep.subr.bf16.mxu0 0
  %2485 = vmatpush1.bf16.msra.mxu0 0
  %2486 = vmatprep.subr.bf16.mxu0 0
  %2487 = vmatpush1.bf16.msra.mxu0 0
  %2488 = vmatprep.subr.bf16.mxu0 0
  %2489 = vmatpush1.bf16.msra.mxu0 0
  %2490 = vmatprep.subr.bf16.mxu0 0
  %2491 = vmatpush1.bf16.msra.mxu0 0
  %2492 = vmatprep.subr.bf16.mxu0 0
  %2493 = vmatpush1.bf16.msra.mxu0 0
  %2494 = vmatprep.subr.bf16.mxu0 0
  %2495 = vmatpush1.bf16.msra.mxu0 0
  %2496 = vmatprep.subr.bf16.mxu0 0
  %2497 = vmatpush1.bf16.msra.mxu0 0
  %2498 = vmatprep.subr.bf16.mxu0 0
  %2499 = vmatpush1.bf16.msra.mxu0 0
  %2500 = vmatprep.subr.bf16.mxu0 0
  %2501 = vmatpush1.bf16.msra.mxu0 0
  %2502 = vmatprep.subr.bf16.mxu0 0
  %2503 = vmatpush1.bf16.msra.mxu0 0
  %2504 = vmatprep.subr.bf16.mxu0 0
  %2505 = vmatpush1.bf16.msra.mxu0 0
  %2506 = vmatprep.subr.bf16.mxu0 0
  %2507 = vmatpush1.bf16.msra.mxu0 0
  %2508 = vmatprep.mubr.bf16.mxu0 0
  %2509 = vmatmul.mubr.bf16.gmra.mrb[0].mxu0 %v2470
  %v2510 = vpop.f32.mrb[0].mxu0
  %v2511 = vadd.f32 %v2459, %v2510
  %v2512 = vpop.f32.mrb[0].mxu0
  %v2513 = vpop.f32.mrb[0].mxu0
  %v2514 = vpop.f32.mrb[0].mxu0
  %2515 = vdwg.mxu0
  %2517 = vrot.lane.b32.xlu0 %v2511, 32
  %v2518 = vpop.permute.xlu0 %2517
  %v2520 = vadd.f32 %v2434, %v2518
  %2523 = vrot.lane.b32.xlu0 %v2434, 90
  %v2524 = vpop.permute.xlu0 %2523
  %2525 = vrot.lane.b32.xlu0 %v2437, 90
  %v2526 = vpop.permute.xlu0 %2525
  %v2530 = vrot.slane %v2437, 6
  %v2531 = vrot.slane %v2442, 6
  %v2532 = vsel %vm2472, %v2530, %v2531
  %2533 = vrot.lane.b32.xlu0 %v2530, 91
  %v2534 = vpop.permute.xlu0 %2533
  %2535 = vrot.lane.b32.xlu0 %v2532, 91
  %v2536 = vpop.permute.xlu0 %2535
  %v2539 = vrot.slane %v2442, 4
  %2540 = vrot.lane.b32.xlu0 %v2539, 92
  %v2541 = vpop.permute.xlu0 %2540
  %v2544 = vrot.slane %v2445, 2
  %2545 = vrot.lane.b32.xlu0 %v2544, 93
  %v2546 = vpop.permute.xlu0 %2545
  %vm2548 = vcmask 7168
  %v2549 = vsel %vm2548, %v2524, %v2534
  %v2550 = vsel %vm2548, %v2526, %v2536
  %vm2551 = vcmask 15360
  %v2552 = vsel %vm2551, %v2549, %v2541
  %v2553 = vsel %vm2551, %v2550, %v2541
  %vm2554 = vcmask 23552
  %v2555 = vsel %vm2554, %v2552, %v2546
  %v2556 = vsel %vm2554, %v2553, %v2546
  %2557 = vset.pattern.permute.xlu0 6
  %2558 = vperm.xlu0 %2557, %v2511
  %v2559 = vpop.permute.xlu0 %2558
  %v2560 = vrot.slane %v2559, 2
  %v2562 = vadd.f32 %v2555, %v2560
  %v2563 = vadd.f32 %v2556, %v2560
  %2564 = vst.msk [vmem:[%s2] sm:$0xff] %vm831, 0.0
  %vm2565 = vcmask 261122
  %2566 = vst.msk [vmem:[%s2 - $0x2] sm:$0xfc] %vm2565, %v2452
  %2568 = vrot.lane.b32.xlu0 %v2520, 96
  %v2569 = vpop.permute.xlu0 %2568
  %v2573 = vrot.slane %v2562, 6
  %v2574 = vrot.slane %v2563, 6
  %v2575 = vsel %vm2472, %v2573, %v2574
  %2576 = vrot.lane.b32.xlu0 %v2575, 6
  %v2577 = vpop.permute.xlu0 %2576
  %vm2579 = vcmask 48128
  %v2580 = vsel %vm2579, %v2569, %v2577
  %2582 = vrot.lane.b32.xlu0 %v2580, 32
  %v2583 = vpop.permute.xlu0 %2582
  %vm2585 = vcmask 341248
  %2586 = vst.msk [vmem:[%s2] sm:$0x3f] %vm2585, %v2583
  // Predicated region
  $region10: #{run_decoder.1} parent=0 // pred_check
    _
  $region11: #{run_decoder.1} parent=0 // pred_check_branch
    %2588 = sbr.rel (0) target = $region13
  $region12: #{run_decoder.1} parent=0 // pred_region
    _
  $region13: #{run_decoder.1} parent=0 // pred_fallthru
    _
  // Predicated region
  $region14: #{run_decoder.1} parent=0 // pred_check
    _
  $region15: #{run_decoder.1} parent=0 // pred_check_branch
    %2590 = sbr.rel (0) target = $region17
  $region16: #{run_decoder.1} parent=0 // pred_region
    _
  $region17: #{run_decoder.1} parent=0 // pred_fallthru
    _

</llo_original>
